<compile_context>
chip_gen: v6e
topology: v6e:2x2x1
jax: 0.10.0
libtpu: 0.0.40
codegen_flags: <defaults>
</compile_context>

<pallas_src>
import functools

import jax
import jax.numpy as jnp
from jax.experimental import pallas as pl
from jax.experimental.pallas import tpu as pltpu

SMEM = pltpu.MemorySpace.SMEM
LANE = 128  # lane width; pad lane-sparse output channel counts up to this


def _round_up(x, m):
    return (x + m - 1) // m * m


def _pick_vmem_limit():
    """Generation-aware scoped-VMEM limit (v5e/v6e: ~96 MiB, v7x: ~48 MiB)."""
    try:
        cap = int(pltpu.get_tpu_info().vmem_capacity_bytes)
        return max(min((cap * 3) // 4, 100 * 1024 * 1024), 32 * 1024 * 1024)
    except Exception:
        return 32 * 1024 * 1024


_VMEM_LIMIT = _pick_vmem_limit()


# ----------------------------------------------------------------------------
# Pallas kernels
# ----------------------------------------------------------------------------
def _matmul_bias_kernel(a_ref, w_ref, b_ref, o_ref, *, relu):
    """o = act(a @ w + b); a:(tm,K) bf16, w:(K,N) bf16, b:(1,N) f32."""
    acc = jnp.dot(a_ref[...], w_ref[...], preferred_element_type=jnp.float32)
    acc = acc + b_ref[...]
    if relu:
        acc = jnp.maximum(acc, 0.0)
    o_ref[...] = acc.astype(o_ref.dtype)


def _matmul_bias_mse_kernel(a_ref, w_ref, b_ref, t_ref, o_ref, sse_ref, *, m_valid):
    """Final decoder layer: o = a @ w + b (no ReLU), lane-padded to 128 columns,
    with a fused per-tile sum((o - target)^2) partial (padded rows/cols masked
    out / zero by construction)."""
    step = pl.program_id(0)
    tm = a_ref.shape[0]
    y = jnp.dot(a_ref[...], w_ref[...], preferred_element_type=jnp.float32)
    y = y + b_ref[...]
    o_ref[...] = y
    row = step * tm + jax.lax.broadcasted_iota(jnp.int32, (tm, 1), 0)
    mask = (row < m_valid).astype(jnp.float32)          # ignore padded rows
    d = y - t_ref[...]                                  # padded cols: 0 - 0 = 0
    sse_ref[0, 0] = jnp.sum(mask * (d * d))             # per-tile partial sum


def _vq_kernel(z_ref, e_ref, e2_ref, zq_ref, idx_ref, diff_ref, *, m_valid):
    """Nearest-codebook lookup + quantization for one M-tile; codebook resident.

    z:(tm,D) f32, e:(K,D) f32, e2:(1,K)=||e||^2 f32.
    Outputs: zq:(tm,D) f32, idx:(tm,1) i32, diff:(1,1) partial sum((zq-z)^2).
    """
    step = pl.program_id(0)
    z = z_ref[...]
    e = e_ref[...]
    tm = z.shape[0]
    K = e.shape[0]
    # squared-distance argmin == cdist(p=2) argmin (||z||^2 row-constant dropped);
    # the cross term only feeds the argmin, so bf16 MXU operands are fine.
    cross = jax.lax.dot_general(
        z.astype(jnp.bfloat16), e.astype(jnp.bfloat16),
        dimension_numbers=(((1,), (1,)), ((), ())),
        preferred_element_type=jnp.float32)                      # (tm, K)
    d = e2_ref[...] - 2.0 * cross
    min_d = jnp.min(d, axis=1, keepdims=True)
    iota_k = jax.lax.broadcasted_iota(jnp.int32, (tm, K), 1)
    idx = jnp.min(jnp.where(d == min_d, iota_k, K), axis=1)      # first argmin
    onehot = (iota_k == idx[:, None]).astype(jnp.float32)
    zq = jnp.dot(onehot, e, preferred_element_type=jnp.float32)  # exact f32 gather
    zq_ref[...] = zq
    idx_ref[...] = idx[:, None].astype(jnp.int32)
    row = step * tm + jax.lax.broadcasted_iota(jnp.int32, (tm, 1), 0)
    mask = (row < m_valid).astype(jnp.float32)                   # ignore padded rows
    diff_ref[0, 0] = jnp.sum(mask * ((zq - z) ** 2))             # per-tile partial


# ----------------------------------------------------------------------------
# Tiled matmul wrapper (bf16 MXU operands, f32 accumulate, fused bias/ReLU)
# ----------------------------------------------------------------------------
def matmul_bias(a, w, b, relu, out_dtype=jnp.float32, tm_max=1024):
    """act(a @ w + b). a:(M,K) bf16, w:(K,N) bf16, b:(1,N) f32 -> (M,N) out_dtype."""
    M, K = a.shape
    Kw, N = w.shape
    assert K == Kw
    tm = min(tm_max, _round_up(M, 16))          # 16-row rounding for bf16 packing
    Mpad = _round_up(M, tm)
    if Mpad != M:
        a = jnp.pad(a, ((0, Mpad - M), (0, 0)))
    out = pl.pallas_call(
        functools.partial(_matmul_bias_kernel, relu=relu),
        out_shape=jax.ShapeDtypeStruct((Mpad, N), out_dtype),
        grid=(Mpad // tm,),
        in_specs=[
            pl.BlockSpec((tm, K), lambda i: (i, 0)),
            pl.BlockSpec((K, N), lambda i: (0, 0)),
            pl.BlockSpec((1, N), lambda i: (0, 0)),
        ],
        out_specs=pl.BlockSpec((tm, N), lambda i: (i, 0)),
        compiler_params=pltpu.CompilerParams(
            dimension_semantics=("parallel",),
            vmem_limit_bytes=_VMEM_LIMIT),
    )(a, w, b)
    return out[:M] if Mpad != M else out


# ----------------------------------------------------------------------------
# Conv / ConvTranspose built on the tiled Pallas matmul
# ----------------------------------------------------------------------------
def _im2col(xp, k, stride):
    """xp: padded NHWC input (bf16) -> (N*Ho*Wo, k*k*C) patch matrix (bf16)."""
    N, Hp, Wp, C = xp.shape
    Ho = (Hp - k) // stride + 1
    Wo = (Wp - k) // stride + 1
    cols = []
    for i in range(k):
        for j in range(k):
            cols.append(xp[:, i:i + Ho * stride:stride, j:j + Wo * stride:stride, :])
    patches = jnp.concatenate(cols, axis=-1)          # (N, Ho, Wo, k*k*C)
    return patches.reshape(N * Ho * Wo, k * k * C), (N, Ho, Wo)


def conv2d(x, w2, b2, *, stride, pad, cout, relu, out_dtype, k=3):
    """x: NHWC (any float dtype), w2: pre-reshaped (k*k*Cin, Npad) bf16, b2:(1,Npad)."""
    # TODO(synk): fuse the 3x3 patch gather into the matmul kernel via haloed
    # input tiles to avoid materializing the k*k-expanded patch matrix in HBM.
    if x.dtype != jnp.bfloat16:
        x = x.astype(jnp.bfloat16)
    xp = jnp.pad(x, ((0, 0), (pad, pad), (pad, pad), (0, 0)))
    cols, (N, Ho, Wo) = _im2col(xp, k, stride)
    out = matmul_bias(cols, w2, b2, relu, out_dtype=out_dtype)
    if out.shape[1] != cout:                          # lane padding -> slice off
        out = out[:, :cout]
    return out.reshape(N, Ho, Wo, cout)


def conv_transpose2d_s2(x, wb, b4, *, cout, out_dtype, relu=True):
    """ConvTranspose2d(kernel=3, stride=2, padding=1, output_padding=1) on NHWC x.

    Sub-pixel decomposition fused into ONE matmul: A = [x00|x01|x10|x11]
    (K=4*Cin) against a block weight (4*Cin, 4*Cout) (zeros for absent taps);
    output columns are ordered [ee|eo|oe|oo] = (sub_h, sub_w, c) so the 2x grid
    is recovered with a single reshape+transpose."""
    # TODO(synk): write the interleaved (N, H, 2, W, 2, C) layout directly from
    # the kernel's output BlockSpec to drop the remaining XLA transpose pass.
    N, H, W, Cin = x.shape
    if x.dtype != jnp.bfloat16:
        x = x.astype(jnp.bfloat16)
    xp = jnp.pad(x, ((0, 0), (0, 1), (0, 1), (0, 0)))           # zero row/col at H, W
    x00 = x.reshape(N * H * W, Cin)                             # X[m,   j  ]
    x01 = xp[:, :H, 1:W + 1, :].reshape(N * H * W, Cin)         # X[m,   j+1]
    x10 = xp[:, 1:H + 1, :W, :].reshape(N * H * W, Cin)         # X[m+1, j  ]
    x11 = xp[:, 1:H + 1, 1:W + 1, :].reshape(N * H * W, Cin)    # X[m+1, j+1]
    a = jnp.concatenate([x00, x01, x10, x11], axis=1)           # (M, 4*Cin)
    y = matmul_bias(a, wb, b4, relu, out_dtype=out_dtype)       # (M, 4*Cout)
    y = y.reshape(N, H, W, 2, 2, cout)                          # (n,h,w,sh,sw,c)
    y = jnp.transpose(y, (0, 1, 3, 2, 4, 5))                    # (n,h,sh,w,sw,c)
    return y.reshape(N, 2 * H, 2 * W, cout)


def conv_transpose2d_s1_mse(x, w2p, bp, target_nhwc, *, cout, tm_max=1024):
    """Final decoder layer: ConvTranspose2d(kernel=3, stride=1, padding=1) == conv
    with the flipped kernel.  Output lane-padded to 128 columns; MSE-vs-target
    reduction fused into the matmul epilogue as per-tile partial sums.
    Returns (y_nhwc, mse)."""
    if x.dtype != jnp.bfloat16:
        x = x.astype(jnp.bfloat16)
    xp = jnp.pad(x, ((0, 0), (1, 1), (1, 1), (0, 0)))
    cols, (N, Ho, Wo) = _im2col(xp, 3, 1)
    M, K = cols.shape
    Npad = w2p.shape[1]
    tm = min(tm_max, _round_up(M, 16))
    Mpad = _round_up(M, tm)
    if Mpad != M:
        cols = jnp.pad(cols, ((0, Mpad - M), (0, 0)))
    tgt = target_nhwc.reshape(M, cout).astype(jnp.float32)
    tgt = jnp.pad(tgt, ((0, Mpad - M), (0, Npad - cout)))        # zero pad cols/rows
    gsteps = Mpad // tm
    out, sse = pl.pallas_call(
        functools.partial(_matmul_bias_mse_kernel, m_valid=M),
        out_shape=(jax.ShapeDtypeStruct((Mpad, Npad), jnp.float32),
                   jax.ShapeDtypeStruct((gsteps, 1), jnp.float32)),
        grid=(gsteps,),
        in_specs=[
            pl.BlockSpec((tm, K), lambda i: (i, 0)),
            pl.BlockSpec((K, Npad), lambda i: (0, 0)),
            pl.BlockSpec((1, Npad), lambda i: (0, 0)),
            pl.BlockSpec((tm, Npad), lambda i: (i, 0)),
        ],
        out_specs=(pl.BlockSpec((tm, Npad), lambda i: (i, 0)),
                   pl.BlockSpec((1, 1), lambda i: (i, 0), memory_space=SMEM)),
        compiler_params=pltpu.CompilerParams(
            dimension_semantics=("parallel",),       # per-tile partials -> megacore OK
            vmem_limit_bytes=_VMEM_LIMIT),
    )(cols, w2p, bp, tgt)
    y = out[:M, :cout].reshape(N, Ho, Wo, cout)
    mse = jnp.sum(sse) / (M * cout)
    return y, mse


# ----------------------------------------------------------------------------
# Vector quantizer (eval-mode forward of VectorQuantizerEMA)
# ----------------------------------------------------------------------------
def vector_quantize(z_e, codebook, e2, tm_max=2048):
    # TODO(synk): training-mode EMA buffer update (_update_ema) is a stateful
    # side effect and is not part of the eval forward pass; not implemented.
    N, H, W, D = z_e.shape
    flat = z_e.reshape(-1, D).astype(jnp.float32)
    M = flat.shape[0]
    K = codebook.shape[0]
    tm = min(tm_max, _round_up(M, 8))
    Mpad = _round_up(M, tm)
    flat_p = jnp.pad(flat, ((0, Mpad - M), (0, 0))) if Mpad != M else flat
    gsteps = Mpad // tm
    zq, idx, diffs = pl.pallas_call(
        functools.partial(_vq_kernel, m_valid=M),
        out_shape=(jax.ShapeDtypeStruct((Mpad, D), jnp.float32),
                   jax.ShapeDtypeStruct((Mpad, 1), jnp.int32),
                   jax.ShapeDtypeStruct((gsteps, 1), jnp.float32)),
        grid=(gsteps,),
        in_specs=[
            pl.BlockSpec((tm, D), lambda i: (i, 0)),
            pl.BlockSpec((K, D), lambda i: (0, 0)),
            pl.BlockSpec((1, K), lambda i: (0, 0)),
        ],
        out_specs=(pl.BlockSpec((tm, D), lambda i: (i, 0)),
                   pl.BlockSpec((tm, 1), lambda i: (i, 0)),
                   pl.BlockSpec((1, 1), lambda i: (i, 0), memory_space=SMEM)),
        compiler_params=pltpu.CompilerParams(
            dimension_semantics=("parallel",),       # per-tile partials -> megacore OK
            vmem_limit_bytes=_VMEM_LIMIT),
    )(flat_p, codebook, e2)
    # diff = mean((zq.detach()-z)^2) + mean((zq - z.detach())^2) = 2 * mean((zq-z)^2)
    vq_loss = 2.0 * jnp.sum(diffs) / (M * D)
    if Mpad != M:
        zq, idx = zq[:M], idx[:M]
    # straight-through: z + (zq - z).detach() == zq numerically in the forward pass
    return zq.reshape(N, H, W, D), idx.reshape(N, H, W), vq_loss


# ----------------------------------------------------------------------------
# Parameters
# ----------------------------------------------------------------------------
def init_params(key, in_channels=3, hidden_channels=128, codebook_size=128):
    def conv_init(k, cout, cin, ksz):
        k1, k2 = jax.random.split(k)
        bound = 1.0 / jnp.sqrt(cin * ksz * ksz)
        w = jax.random.uniform(k1, (cout, cin, ksz, ksz), jnp.float32, -bound, bound)
        b = jax.random.uniform(k2, (cout,), jnp.float32, -bound, bound)
        return w, b

    def convT_init(k, cin, cout, ksz):
        k1, k2 = jax.random.split(k)
        bound = 1.0 / jnp.sqrt(cin * ksz * ksz)
        w = jax.random.uniform(k1, (cin, cout, ksz, ksz), jnp.float32, -bound, bound)
        b = jax.random.uniform(k2, (cout,), jnp.float32, -bound, bound)
        return w, b

    keys = jax.random.split(key, 9)
    p = {}
    # Encoder: Conv(in,16,3,1,1) Conv(16,32,3,2,1) Conv(32,64,3,2,1) Conv(64,hid,3,2,1)
    p['e_w0'], p['e_b0'] = conv_init(keys[0], 16, in_channels, 3)
    p['e_w1'], p['e_b1'] = conv_init(keys[1], 32, 16, 3)
    p['e_w2'], p['e_b2'] = conv_init(keys[2], 64, 32, 3)
    p['e_w3'], p['e_b3'] = conv_init(keys[3], hidden_channels, 64, 3)
    # VQ codebook: uniform(-1/K, 1/K)
    p['codebook'] = jax.random.uniform(
        keys[4], (codebook_size, hidden_channels), jnp.float32,
        -1.0 / codebook_size, 1.0 / codebook_size)
    # Decoder: ConvT(hid,64,3,2,1,op1) ConvT(64,32,...) ConvT(32,16,...) ConvT(16,in,3,1,1)
    p['d_w0'], p['d_b0'] = convT_init(keys[5], hidden_channels, 64, 3)
    p['d_w1'], p['d_b1'] = convT_init(keys[6], 64, 32, 3)
    p['d_w2'], p['d_b2'] = convT_init(keys[7], 32, 16, 3)
    p['d_w3'], p['d_b3'] = convT_init(keys[8], 16, in_channels, 3)
    return p


def prepare_params(p):
    """One-time weight prep: matmul-ready bf16 weights, f32 biases, lane padding."""
    def conv_w(w, b, lane_pad=None):
        cout, cin, kh, kw = w.shape
        w2 = jnp.transpose(w, (2, 3, 1, 0)).reshape(kh * kw * cin, cout)
        if lane_pad is not None and lane_pad > cout:
            w2 = jnp.pad(w2, ((0, 0), (0, lane_pad - cout)))
            b = jnp.pad(b, (0, lane_pad - cout))
        return w2.astype(jnp.bfloat16), b.reshape(1, -1).astype(jnp.float32)

    def convT_s2_block(w, b):
        # w: (Cin, Cout, 3, 3) torch ConvTranspose2d layout. Column blocks:
        # ee = X00@W[1,1]; eo = X00@W[1,2]+X01@W[1,0]
        # oe = X00@W[2,1]+X10@W[0,1]; oo = X00@W[2,2]+X01@W[2,0]+X10@W[0,2]+X11@W[0,0]
        cin, cout = w.shape[0], w.shape[1]
        z = jnp.zeros((cin, cout), w.dtype)
        col = lambda w00, w01, w10, w11: jnp.concatenate([w00, w01, w10, w11], axis=0)
        ee = col(w[:, :, 1, 1], z, z, z)
        eo = col(w[:, :, 1, 2], w[:, :, 1, 0], z, z)
        oe = col(w[:, :, 2, 1], z, w[:, :, 0, 1], z)
        oo = col(w[:, :, 2, 2], w[:, :, 2, 0], w[:, :, 0, 2], w[:, :, 0, 0])
        wb = jnp.concatenate([ee, eo, oe, oo], axis=1)           # (4*Cin, 4*Cout)
        b4 = jnp.concatenate([b, b, b, b]).reshape(1, 4 * cout)
        return wb.astype(jnp.bfloat16), b4.astype(jnp.float32)

    def convT_s1_w(w, b, lane_pad):
        # stride-1 transposed conv == conv with the flipped kernel
        cin, cout, kh, kw = w.shape
        w2 = jnp.flip(w, axis=(2, 3)).transpose(2, 3, 0, 1).reshape(kh * kw * cin, cout)
        if lane_pad > cout:
            w2 = jnp.pad(w2, ((0, 0), (0, lane_pad - cout)))
            b = jnp.pad(b, (0, lane_pad - cout))
        return w2.astype(jnp.bfloat16), b.reshape(1, -1).astype(jnp.float32)

    q = {}
    q['e_w0'], q['e_b0'] = conv_w(p['e_w0'], p['e_b0'], lane_pad=LANE)   # 16 -> 128
    q['e_w1'], q['e_b1'] = conv_w(p['e_w1'], p['e_b1'])
    q['e_w2'], q['e_b2'] = conv_w(p['e_w2'], p['e_b2'])
    q['e_w3'], q['e_b3'] = conv_w(p['e_w3'], p['e_b3'])
    q['d_w0'], q['d_b0'] = convT_s2_block(p['d_w0'], p['d_b0'])
    q['d_w1'], q['d_b1'] = convT_s2_block(p['d_w1'], p['d_b1'])
    q['d_w2'], q['d_b2'] = convT_s2_block(p['d_w2'], p['d_b2'])
    q['d_w3'], q['d_b3'] = convT_s1_w(p['d_w3'], p['d_b3'], lane_pad=LANE)  # 3 -> 128
    q['codebook'] = p['codebook'].astype(jnp.float32)
    q['e2'] = jnp.sum(p['codebook'] * p['codebook'], axis=1).reshape(1, -1).astype(jnp.float32)
    return q


# ----------------------------------------------------------------------------
# VQCAE forward
# ----------------------------------------------------------------------------
def vqcae_forward(prep, x_nchw, commitment_beta=0.3):
    x = jnp.transpose(x_nchw, (0, 2, 3, 1)).astype(jnp.float32)   # NCHW -> NHWC
    in_ch = x.shape[-1]
    hidden = prep['codebook'].shape[1]
    # Encoder (bf16 intermediates; z_e kept f32 for the VQ)
    h = conv2d(x, prep['e_w0'], prep['e_b0'], stride=1, pad=1, cout=16,
               relu=True, out_dtype=jnp.bfloat16)
    h = conv2d(h, prep['e_w1'], prep['e_b1'], stride=2, pad=1, cout=32,
               relu=True, out_dtype=jnp.bfloat16)
    h = conv2d(h, prep['e_w2'], prep['e_b2'], stride=2, pad=1, cout=64,
               relu=True, out_dtype=jnp.bfloat16)
    z_e = conv2d(h, prep['e_w3'], prep['e_b3'], stride=2, pad=1, cout=hidden,
                 relu=True, out_dtype=jnp.float32)
    # Vector quantization (z_e already channels-last, matching the torch permute)
    z_q, _idxs, vq_loss = vector_quantize(z_e, prep['codebook'], prep['e2'])
    # Decoder (stride-2 transposed convs, each a single fused sub-pixel matmul)
    h = conv_transpose2d_s2(z_q, prep['d_w0'], prep['d_b0'], cout=64,
                            out_dtype=jnp.bfloat16)
    h = conv_transpose2d_s2(h, prep['d_w1'], prep['d_b1'], cout=32,
                            out_dtype=jnp.bfloat16)
    h = conv_transpose2d_s2(h, prep['d_w2'], prep['d_b2'], cout=16,
                            out_dtype=jnp.bfloat16)
    # Final layer with lane-dense padded output and fused MSE-vs-input reduction
    x_rec, mse_val = conv_transpose2d_s1_mse(h, prep['d_w3'], prep['d_b3'], x,
                                             cout=in_ch)
    loss = mse_val + commitment_beta * vq_loss
    x_rec_nchw = jnp.transpose(x_rec, (0, 3, 1, 2))               # back to NCHW
    return x_rec_nchw, loss


if __name__ == "__main__":
    key = jax.random.PRNGKey(0)
    k_param, k_x = jax.random.split(key)

    in_channels, hidden, codebook, H = 3, 128, 128, 16
    params = init_params(k_param, in_channels, hidden, codebook)
    prep = prepare_params(params)                                  # one-time weight prep
    x = jax.random.normal(k_x, (2, in_channels, H, H), jnp.float32)  # NCHW like torch

    fwd = jax.jit(vqcae_forward)
    x_rec, loss = fwd(prep, x)
    jax.block_until_ready((x_rec, loss))

    assert x_rec.shape == x.shape, (x_rec.shape, x.shape)
    assert loss.shape == ()
    assert bool(jnp.isfinite(loss))
    print("KERNEL_OK")
</pallas_src>

<mosaic_0001>
module attributes {stable_mosaic.version = 11 : i64} {
  func.func @_matmul_bias_kernel(%arg0: i32, %arg1: memref<512x27xbf16, #tpu.memory_space<vmem>>, %arg2: memref<27x128xbf16, #tpu.memory_space<vmem>>, %arg3: memref<1x128xf32, #tpu.memory_space<vmem>>, %arg4: memref<512x128xbf16, #tpu.memory_space<vmem>>) attributes {dimension_semantics = [#tpu.dimension_semantics<parallel>], iteration_bounds = array<i64: 1>, scalar_prefetch = 0 : i64, scratch_operands = 0 : i64, tpu.core_type = #tpu.core_type<tc>, window_params = [{transform_indices = @transform_0, window_bounds = array<i64: 512, 27>}, {pipeline_mode = #tpu.pipeline_mode<synchronous>, transform_indices = @transform_1, window_bounds = array<i64: 27, 128>}, {pipeline_mode = #tpu.pipeline_mode<synchronous>, transform_indices = @transform_2, window_bounds = array<i64: 1, 128>}, {transform_indices = @transform_3, window_bounds = array<i64: 512, 128>}]} {
    %c0 = arith.constant 0 : index
    %c0_0 = arith.constant 0 : index
    %0 = vector.load %arg1[%c0, %c0_0] : memref<512x27xbf16, #tpu.memory_space<vmem>>, vector<512x27xbf16>
    %c0_1 = arith.constant 0 : index
    %c0_2 = arith.constant 0 : index
    %1 = vector.load %arg2[%c0_1, %c0_2] : memref<27x128xbf16, #tpu.memory_space<vmem>>, vector<27x128xbf16>
    %cst = arith.constant dense<0.000000e+00> : vector<512x128xf32>
    %2 = tpu.matmul %0, %1, %cst {dimension_numbers = #tpu.dot_dimension_numbers<[1], [0], [0], [1], [0, 0, 1, 1], [], []>} : vector<512x27xbf16>, vector<27x128xbf16>, vector<512x128xf32> -> vector<512x128xf32>
    %c0_3 = arith.constant 0 : index
    %c0_4 = arith.constant 0 : index
    %3 = vector.load %arg3[%c0_3, %c0_4] : memref<1x128xf32, #tpu.memory_space<vmem>>, vector<1x128xf32>
    %4 = vector.broadcast %3 : vector<1x128xf32> to vector<512x128xf32>
    %5 = arith.addf %2, %4 : vector<512x128xf32>
    %cst_5 = arith.constant 0.000000e+00 : f32
    %6 = vector.broadcast %cst_5 : f32 to vector<512x128xf32>
    %7 = arith.maximumf %5, %6 : vector<512x128xf32>
    %8 = arith.truncf %7 : vector<512x128xf32> to vector<512x128xbf16>
    %c0_6 = arith.constant 0 : index
    %c0_7 = arith.constant 0 : index
    %9 = vector.load %arg4[%c0_6, %c0_7] : memref<512x128xbf16, #tpu.memory_space<vmem>>, vector<512x128xbf16>
    tpu.vector_store %arg4[%c0_6, %c0_7], %8 {strides = array<i32>} : memref<512x128xbf16, #tpu.memory_space<vmem>>, vector<512x128xbf16>,
    return
  }
  func.func @transform_0(%arg0: i32) -> (i32, i32) {
    %c0_i32 = arith.constant 0 : i32
    %c0_i32_0 = arith.constant 0 : i32
    return %arg0, %c0_i32 : i32, i32
  }
  func.func @transform_1(%arg0: i32) -> (i32, i32) {
    %c0_i32 = arith.constant 0 : i32
    %c0_i32_0 = arith.constant 0 : i32
    %c0_i32_1 = arith.constant 0 : i32
    return %c0_i32, %c0_i32_0 : i32, i32
  }
  func.func @transform_2(%arg0: i32) -> (i32, i32) {
    %c0_i32 = arith.constant 0 : i32
    %c0_i32_0 = arith.constant 0 : i32
    %c0_i32_1 = arith.constant 0 : i32
    return %c0_i32, %c0_i32_0 : i32, i32
  }
  func.func @transform_3(%arg0: i32) -> (i32, i32) {
    %c0_i32 = arith.constant 0 : i32
    %c0_i32_0 = arith.constant 0 : i32
    return %arg0, %c0_i32 : i32, i32
  }
}

module attributes {stable_mosaic.version = 11 : i64} {
  func.func @_matmul_bias_kernel(%arg0: i32, %arg1: memref<128x144xbf16, #tpu.memory_space<vmem>>, %arg2: memref<144x32xbf16, #tpu.memory_space<vmem>>, %arg3: memref<1x32xf32, #tpu.memory_space<vmem>>, %arg4: memref<128x32xbf16, #tpu.memory_space<vmem>>) attributes {dimension_semantics = [#tpu.dimension_semantics<parallel>], iteration_bounds = array<i64: 1>, scalar_prefetch = 0 : i64, scratch_operands = 0 : i64, tpu.core_type = #tpu.core_type<tc>, window_params = [{transform_indices = @transform_0, window_bounds = array<i64: 128, 144>}, {pipeline_mode = #tpu.pipeline_mode<synchronous>, transform_indices = @transform_1, window_bounds = array<i64: 144, 32>}, {pipeline_mode = #tpu.pipeline_mode<synchronous>, transform_indices = @transform_2, window_bounds = array<i64: 1, 32>}, {transform_indices = @transform_3, window_bounds = array<i64: 128, 32>}]} {
    %c0 = arith.constant 0 : index
    %c0_0 = arith.constant 0 : index
    %0 = vector.load %arg1[%c0, %c0_0] : memref<128x144xbf16, #tpu.memory_space<vmem>>, vector<128x144xbf16>
    %c0_1 = arith.constant 0 : index
    %c0_2 = arith.constant 0 : index
    %1 = vector.load %arg2[%c0_1, %c0_2] : memref<144x32xbf16, #tpu.memory_space<vmem>>, vector<144x32xbf16>
    %cst = arith.constant dense<0.000000e+00> : vector<128x32xf32>
    %2 = tpu.matmul %0, %1, %cst {dimension_numbers = #tpu.dot_dimension_numbers<[1], [0], [0], [1], [0, 0, 1, 1], [], []>} : vector<128x144xbf16>, vector<144x32xbf16>, vector<128x32xf32> -> vector<128x32xf32>
    %c0_3 = arith.constant 0 : index
    %c0_4 = arith.constant 0 : index
    %3 = vector.load %arg3[%c0_3, %c0_4] : memref<1x32xf32, #tpu.memory_space<vmem>>, vector<1x32xf32>
    %4 = vector.broadcast %3 : vector<1x32xf32> to vector<128x32xf32>
    %5 = arith.addf %2, %4 : vector<128x32xf32>
    %cst_5 = arith.constant 0.000000e+00 : f32
    %6 = vector.broadcast %cst_5 : f32 to vector<128x32xf32>
    %7 = arith.maximumf %5, %6 : vector<128x32xf32>
    %8 = arith.truncf %7 : vector<128x32xf32> to vector<128x32xbf16>
    %c0_6 = arith.constant 0 : index
    %c0_7 = arith.constant 0 : index
    %9 = vector.load %arg4[%c0_6, %c0_7] : memref<128x32xbf16, #tpu.memory_space<vmem>>, vector<128x32xbf16>
    tpu.vector_store %arg4[%c0_6, %c0_7], %8 {strides = array<i32>} : memref<128x32xbf16, #tpu.memory_space<vmem>>, vector<128x32xbf16>,
    return
  }
  func.func @transform_0(%arg0: i32) -> (i32, i32) {
    %c0_i32 = arith.constant 0 : i32
    %c0_i32_0 = arith.constant 0 : i32
    return %arg0, %c0_i32 : i32, i32
  }
  func.func @transform_1(%arg0: i32) -> (i32, i32) {
    %c0_i32 = arith.constant 0 : i32
    %c0_i32_0 = arith.constant 0 : i32
    %c0_i32_1 = arith.constant 0 : i32
    return %c0_i32, %c0_i32_0 : i32, i32
  }
  func.func @transform_2(%arg0: i32) -> (i32, i32) {
    %c0_i32 = arith.constant 0 : i32
    %c0_i32_0 = arith.constant 0 : i32
    %c0_i32_1 = arith.constant 0 : i32
    return %c0_i32, %c0_i32_0 : i32, i32
  }
  func.func @transform_3(%arg0: i32) -> (i32, i32) {
    %c0_i32 = arith.constant 0 : i32
    %c0_i32_0 = arith.constant 0 : i32
    return %arg0, %c0_i32 : i32, i32
  }
}

module attributes {stable_mosaic.version = 11 : i64} {
  func.func @_matmul_bias_kernel(%arg0: i32, %arg1: memref<32x288xbf16, #tpu.memory_space<vmem>>, %arg2: memref<288x64xbf16, #tpu.memory_space<vmem>>, %arg3: memref<1x64xf32, #tpu.memory_space<vmem>>, %arg4: memref<32x64xbf16, #tpu.memory_space<vmem>>) attributes {dimension_semantics = [#tpu.dimension_semantics<parallel>], iteration_bounds = array<i64: 1>, scalar_prefetch = 0 : i64, scratch_operands = 0 : i64, tpu.core_type = #tpu.core_type<tc>, window_params = [{transform_indices = @transform_0, window_bounds = array<i64: 32, 288>}, {pipeline_mode = #tpu.pipeline_mode<synchronous>, transform_indices = @transform_1, window_bounds = array<i64: 288, 64>}, {pipeline_mode = #tpu.pipeline_mode<synchronous>, transform_indices = @transform_2, window_bounds = array<i64: 1, 64>}, {transform_indices = @transform_3, window_bounds = array<i64: 32, 64>}]} {
    %c0 = arith.constant 0 : index
    %c0_0 = arith.constant 0 : index
    %0 = vector.load %arg1[%c0, %c0_0] : memref<32x288xbf16, #tpu.memory_space<vmem>>, vector<32x288xbf16>
    %c0_1 = arith.constant 0 : index
    %c0_2 = arith.constant 0 : index
    %1 = vector.load %arg2[%c0_1, %c0_2] : memref<288x64xbf16, #tpu.memory_space<vmem>>, vector<288x64xbf16>
    %cst = arith.constant dense<0.000000e+00> : vector<32x64xf32>
    %2 = tpu.matmul %0, %1, %cst {dimension_numbers = #tpu.dot_dimension_numbers<[1], [0], [0], [1], [0, 0, 1, 1], [], []>} : vector<32x288xbf16>, vector<288x64xbf16>, vector<32x64xf32> -> vector<32x64xf32>
    %c0_3 = arith.constant 0 : index
    %c0_4 = arith.constant 0 : index
    %3 = vector.load %arg3[%c0_3, %c0_4] : memref<1x64xf32, #tpu.memory_space<vmem>>, vector<1x64xf32>
    %4 = vector.broadcast %3 : vector<1x64xf32> to vector<32x64xf32>
    %5 = arith.addf %2, %4 : vector<32x64xf32>
    %cst_5 = arith.constant 0.000000e+00 : f32
    %6 = vector.broadcast %cst_5 : f32 to vector<32x64xf32>
    %7 = arith.maximumf %5, %6 : vector<32x64xf32>
    %8 = arith.truncf %7 : vector<32x64xf32> to vector<32x64xbf16>
    %c0_6 = arith.constant 0 : index
    %c0_7 = arith.constant 0 : index
    %9 = vector.load %arg4[%c0_6, %c0_7] : memref<32x64xbf16, #tpu.memory_space<vmem>>, vector<32x64xbf16>
    tpu.vector_store %arg4[%c0_6, %c0_7], %8 {strides = array<i32>} : memref<32x64xbf16, #tpu.memory_space<vmem>>, vector<32x64xbf16>,
    return
  }
  func.func @transform_0(%arg0: i32) -> (i32, i32) {
    %c0_i32 = arith.constant 0 : i32
    %c0_i32_0 = arith.constant 0 : i32
    return %arg0, %c0_i32 : i32, i32
  }
  func.func @transform_1(%arg0: i32) -> (i32, i32) {
    %c0_i32 = arith.constant 0 : i32
    %c0_i32_0 = arith.constant 0 : i32
    %c0_i32_1 = arith.constant 0 : i32
    return %c0_i32, %c0_i32_0 : i32, i32
  }
  func.func @transform_2(%arg0: i32) -> (i32, i32) {
    %c0_i32 = arith.constant 0 : i32
    %c0_i32_0 = arith.constant 0 : i32
    %c0_i32_1 = arith.constant 0 : i32
    return %c0_i32, %c0_i32_0 : i32, i32
  }
  func.func @transform_3(%arg0: i32) -> (i32, i32) {
    %c0_i32 = arith.constant 0 : i32
    %c0_i32_0 = arith.constant 0 : i32
    return %arg0, %c0_i32 : i32, i32
  }
}

module attributes {stable_mosaic.version = 11 : i64} {
  func.func @_matmul_bias_kernel(%arg0: i32, %arg1: memref<16x576xbf16, #tpu.memory_space<vmem>>, %arg2: memref<576x128xbf16, #tpu.memory_space<vmem>>, %arg3: memref<1x128xf32, #tpu.memory_space<vmem>>, %arg4: memref<16x128xf32, #tpu.memory_space<vmem>>) attributes {dimension_semantics = [#tpu.dimension_semantics<parallel>], iteration_bounds = array<i64: 1>, scalar_prefetch = 0 : i64, scratch_operands = 0 : i64, tpu.core_type = #tpu.core_type<tc>, window_params = [{transform_indices = @transform_0, window_bounds = array<i64: 16, 576>}, {pipeline_mode = #tpu.pipeline_mode<synchronous>, transform_indices = @transform_1, window_bounds = array<i64: 576, 128>}, {pipeline_mode = #tpu.pipeline_mode<synchronous>, transform_indices = @transform_2, window_bounds = array<i64: 1, 128>}, {transform_indices = @transform_3, window_bounds = array<i64: 16, 128>}]} {
    %c0 = arith.constant 0 : index
    %c0_0 = arith.constant 0 : index
    %0 = vector.load %arg1[%c0, %c0_0] : memref<16x576xbf16, #tpu.memory_space<vmem>>, vector<16x576xbf16>
    %c0_1 = arith.constant 0 : index
    %c0_2 = arith.constant 0 : index
    %1 = vector.load %arg2[%c0_1, %c0_2] : memref<576x128xbf16, #tpu.memory_space<vmem>>, vector<576x128xbf16>
    %cst = arith.constant dense<0.000000e+00> : vector<16x128xf32>
    %2 = tpu.matmul %0, %1, %cst {dimension_numbers = #tpu.dot_dimension_numbers<[1], [0], [0], [1], [0, 0, 1, 1], [], []>} : vector<16x576xbf16>, vector<576x128xbf16>, vector<16x128xf32> -> vector<16x128xf32>
    %c0_3 = arith.constant 0 : index
    %c0_4 = arith.constant 0 : index
    %3 = vector.load %arg3[%c0_3, %c0_4] : memref<1x128xf32, #tpu.memory_space<vmem>>, vector<1x128xf32>
    %4 = vector.broadcast %3 : vector<1x128xf32> to vector<16x128xf32>
    %5 = arith.addf %2, %4 : vector<16x128xf32>
    %cst_5 = arith.constant 0.000000e+00 : f32
    %6 = vector.broadcast %cst_5 : f32 to vector<16x128xf32>
    %7 = arith.maximumf %5, %6 : vector<16x128xf32>
    %c0_6 = arith.constant 0 : index
    %c0_7 = arith.constant 0 : index
    %8 = vector.load %arg4[%c0_6, %c0_7] : memref<16x128xf32, #tpu.memory_space<vmem>>, vector<16x128xf32>
    tpu.vector_store %arg4[%c0_6, %c0_7], %7 {strides = array<i32>} : memref<16x128xf32, #tpu.memory_space<vmem>>, vector<16x128xf32>,
    return
  }
  func.func @transform_0(%arg0: i32) -> (i32, i32) {
    %c0_i32 = arith.constant 0 : i32
    %c0_i32_0 = arith.constant 0 : i32
    return %arg0, %c0_i32 : i32, i32
  }
  func.func @transform_1(%arg0: i32) -> (i32, i32) {
    %c0_i32 = arith.constant 0 : i32
    %c0_i32_0 = arith.constant 0 : i32
    %c0_i32_1 = arith.constant 0 : i32
    return %c0_i32, %c0_i32_0 : i32, i32
  }
  func.func @transform_2(%arg0: i32) -> (i32, i32) {
    %c0_i32 = arith.constant 0 : i32
    %c0_i32_0 = arith.constant 0 : i32
    %c0_i32_1 = arith.constant 0 : i32
    return %c0_i32, %c0_i32_0 : i32, i32
  }
  func.func @transform_3(%arg0: i32) -> (i32, i32) {
    %c0_i32 = arith.constant 0 : i32
    %c0_i32_0 = arith.constant 0 : i32
    return %arg0, %c0_i32 : i32, i32
  }
}

module attributes {stable_mosaic.version = 11 : i64} {
  func.func @_matmul_bias_kernel(%arg0: i32, %arg1: memref<16x512xbf16, #tpu.memory_space<vmem>>, %arg2: memref<512x256xbf16, #tpu.memory_space<vmem>>, %arg3: memref<1x256xf32, #tpu.memory_space<vmem>>, %arg4: memref<16x256xbf16, #tpu.memory_space<vmem>>) attributes {dimension_semantics = [#tpu.dimension_semantics<parallel>], iteration_bounds = array<i64: 1>, scalar_prefetch = 0 : i64, scratch_operands = 0 : i64, tpu.core_type = #tpu.core_type<tc>, window_params = [{transform_indices = @transform_0, window_bounds = array<i64: 16, 512>}, {pipeline_mode = #tpu.pipeline_mode<synchronous>, transform_indices = @transform_1, window_bounds = array<i64: 512, 256>}, {pipeline_mode = #tpu.pipeline_mode<synchronous>, transform_indices = @transform_2, window_bounds = array<i64: 1, 256>}, {transform_indices = @transform_3, window_bounds = array<i64: 16, 256>}]} {
    %c0 = arith.constant 0 : index
    %c0_0 = arith.constant 0 : index
    %0 = vector.load %arg1[%c0, %c0_0] : memref<16x512xbf16, #tpu.memory_space<vmem>>, vector<16x512xbf16>
    %c0_1 = arith.constant 0 : index
    %c0_2 = arith.constant 0 : index
    %1 = vector.load %arg2[%c0_1, %c0_2] : memref<512x256xbf16, #tpu.memory_space<vmem>>, vector<512x256xbf16>
    %cst = arith.constant dense<0.000000e+00> : vector<16x256xf32>
    %2 = tpu.matmul %0, %1, %cst {dimension_numbers = #tpu.dot_dimension_numbers<[1], [0], [0], [1], [0, 0, 1, 1], [], []>} : vector<16x512xbf16>, vector<512x256xbf16>, vector<16x256xf32> -> vector<16x256xf32>
    %c0_3 = arith.constant 0 : index
    %c0_4 = arith.constant 0 : index
    %3 = vector.load %arg3[%c0_3, %c0_4] : memref<1x256xf32, #tpu.memory_space<vmem>>, vector<1x256xf32>
    %4 = vector.broadcast %3 : vector<1x256xf32> to vector<16x256xf32>
    %5 = arith.addf %2, %4 : vector<16x256xf32>
    %cst_5 = arith.constant 0.000000e+00 : f32
    %6 = vector.broadcast %cst_5 : f32 to vector<16x256xf32>
    %7 = arith.maximumf %5, %6 : vector<16x256xf32>
    %8 = arith.truncf %7 : vector<16x256xf32> to vector<16x256xbf16>
    %c0_6 = arith.constant 0 : index
    %c0_7 = arith.constant 0 : index
    %9 = vector.load %arg4[%c0_6, %c0_7] : memref<16x256xbf16, #tpu.memory_space<vmem>>, vector<16x256xbf16>
    tpu.vector_store %arg4[%c0_6, %c0_7], %8 {strides = array<i32>} : memref<16x256xbf16, #tpu.memory_space<vmem>>, vector<16x256xbf16>,
    return
  }
  func.func @transform_0(%arg0: i32) -> (i32, i32) {
    %c0_i32 = arith.constant 0 : i32
    %c0_i32_0 = arith.constant 0 : i32
    return %arg0, %c0_i32 : i32, i32
  }
  func.func @transform_1(%arg0: i32) -> (i32, i32) {
    %c0_i32 = arith.constant 0 : i32
    %c0_i32_0 = arith.constant 0 : i32
    %c0_i32_1 = arith.constant 0 : i32
    return %c0_i32, %c0_i32_0 : i32, i32
  }
  func.func @transform_2(%arg0: i32) -> (i32, i32) {
    %c0_i32 = arith.constant 0 : i32
    %c0_i32_0 = arith.constant 0 : i32
    %c0_i32_1 = arith.constant 0 : i32
    return %c0_i32, %c0_i32_0 : i32, i32
  }
  func.func @transform_3(%arg0: i32) -> (i32, i32) {
    %c0_i32 = arith.constant 0 : i32
    %c0_i32_0 = arith.constant 0 : i32
    return %arg0, %c0_i32 : i32, i32
  }
}

module attributes {stable_mosaic.version = 11 : i64} {
  func.func @_vq_kernel(%arg0: i32, %arg1: memref<8x128xf32, #tpu.memory_space<vmem>>, %arg2: memref<128x128xf32, #tpu.memory_space<vmem>>, %arg3: memref<1x128xf32, #tpu.memory_space<vmem>>, %arg4: memref<8x128xf32, #tpu.memory_space<vmem>>, %arg5: memref<8x1xi32, #tpu.memory_space<vmem>>, %arg6: memref<1x1xf32, #tpu.memory_space<smem>>) attributes {dimension_semantics = [#tpu.dimension_semantics<parallel>], iteration_bounds = array<i64: 1>, scalar_prefetch = 0 : i64, scratch_operands = 0 : i64, tpu.core_type = #tpu.core_type<tc>, window_params = [{transform_indices = @transform_0, window_bounds = array<i64: 8, 128>}, {pipeline_mode = #tpu.pipeline_mode<synchronous>, transform_indices = @transform_1, window_bounds = array<i64: 128, 128>}, {pipeline_mode = #tpu.pipeline_mode<synchronous>, transform_indices = @transform_2, window_bounds = array<i64: 1, 128>}, {transform_indices = @transform_3, window_bounds = array<i64: 8, 128>}, {transform_indices = @transform_4, window_bounds = array<i64: 8, 1>}, {transform_indices = @transform_5, window_bounds = array<i64: 1, 1>}]} {
    %c0 = arith.constant 0 : index
    %c0_0 = arith.constant 0 : index
    %0 = vector.load %arg1[%c0, %c0_0] : memref<8x128xf32, #tpu.memory_space<vmem>>, vector<8x128xf32>
    %c0_1 = arith.constant 0 : index
    %c0_2 = arith.constant 0 : index
    %1 = vector.load %arg2[%c0_1, %c0_2] : memref<128x128xf32, #tpu.memory_space<vmem>>, vector<128x128xf32>
    %2 = arith.truncf %0 : vector<8x128xf32> to vector<8x128xbf16>
    %3 = arith.truncf %1 : vector<128x128xf32> to vector<128x128xbf16>
    %cst = arith.constant dense<0.000000e+00> : vector<8x128xf32>
    %4 = tpu.matmul %2, %3, %cst {dimension_numbers = #tpu.dot_dimension_numbers<[1], [1], [0], [0], [0, 0, 1, 0], [], []>} : vector<8x128xbf16>, vector<128x128xbf16>, vector<8x128xf32> -> vector<8x128xf32>
    %c0_3 = arith.constant 0 : index
    %c0_4 = arith.constant 0 : index
    %5 = vector.load %arg3[%c0_3, %c0_4] : memref<1x128xf32, #tpu.memory_space<vmem>>, vector<1x128xf32>
    %cst_5 = arith.constant 2.000000e+00 : f32
    %6 = vector.broadcast %cst_5 : f32 to vector<8x128xf32>
    %7 = arith.mulf %6, %4 : vector<8x128xf32>
    %8 = vector.broadcast %5 : vector<1x128xf32> to vector<8x128xf32>
    %9 = arith.subf %8, %7 : vector<8x128xf32>
    %cst_6 = arith.constant dense<0x7F800000> : vector<8xf32>
    %10 = vector.multi_reduction <minimumf>, %9, %cst_6 [1] : vector<8x128xf32> to vector<8xf32>
    %11 = vector.shape_cast %10 : vector<8xf32> to vector<8x1xf32>
    %12 = tpu.iota {dimensions = array<i32: 1>} : vector<8x128xi32>
    %13 = vector.broadcast %11 : vector<8x1xf32> to vector<8x128xf32>
    %14 = arith.cmpf oeq, %9, %13 : vector<8x128xf32>
    %c128_i32 = arith.constant 128 : i32
    %15 = vector.broadcast %c128_i32 : i32 to vector<8x128xi32>
    %16 = arith.select %14, %12, %15 : vector<8x128xi1>, vector<8x128xi32>
    %cst_7 = arith.constant dense<2147483647> : vector<8xi32>
    %17 = vector.multi_reduction <minsi>, %16, %cst_7 [1] : vector<8x128xi32> to vector<8xi32>
    %18 = vector.shape_cast %17 : vector<8xi32> to vector<8x1xi32>
    %19 = vector.broadcast %18 : vector<8x1xi32> to vector<8x128xi32>
    %20 = arith.cmpi eq, %12, %19 : vector<8x128xi32>
    %21 = arith.extui %20 : vector<8x128xi1> to vector<8x128xi32>
    %22 = arith.sitofp %21 : vector<8x128xi32> to vector<8x128xf32>
    %cst_8 = arith.constant dense<0.000000e+00> : vector<8x128xf32>
    %23 = tpu.matmul %22, %1, %cst_8 {dimension_numbers = #tpu.dot_dimension_numbers<[1], [0], [0], [1], [0, 0, 1, 1], [], []>} : vector<8x128xf32>, vector<128x128xf32>, vector<8x128xf32> -> vector<8x128xf32>
    %c0_9 = arith.constant 0 : index
    %c0_10 = arith.constant 0 : index
    %24 = vector.load %arg4[%c0_9, %c0_10] : memref<8x128xf32, #tpu.memory_space<vmem>>, vector<8x128xf32>
    tpu.vector_store %arg4[%c0_9, %c0_10], %23 {strides = array<i32>} : memref<8x128xf32, #tpu.memory_space<vmem>>, vector<8x128xf32>,
    %25 = vector.shape_cast %17 : vector<8xi32> to vector<8x1xi32>
    %c0_11 = arith.constant 0 : index
    %c0_12 = arith.constant 0 : index
    %26 = vector.load %arg5[%c0_11, %c0_12] : memref<8x1xi32, #tpu.memory_space<vmem>>, vector<8x1xi32>
    tpu.vector_store %arg5[%c0_11, %c0_12], %25 {strides = array<i32>} : memref<8x1xi32, #tpu.memory_space<vmem>>, vector<8x1xi32>,
    %c8_i32 = arith.constant 8 : i32
    %27 = arith.muli %arg0, %c8_i32 : i32
    %28 = tpu.iota {dimensions = array<i32: 0>} : vector<8x1xi32>
    %29 = vector.broadcast %27 : i32 to vector<8x1xi32>
    %30 = arith.addi %29, %28 : vector<8x1xi32>
    %c8_i32_13 = arith.constant 8 : i32
    %31 = vector.broadcast %c8_i32_13 : i32 to vector<8x1xi32>
    %32 = arith.cmpi slt, %30, %31 : vector<8x1xi32>
    %33 = arith.extui %32 : vector<8x1xi1> to vector<8x1xi32>
    %34 = arith.sitofp %33 : vector<8x1xi32> to vector<8x1xf32>
    %35 = arith.subf %23, %0 : vector<8x128xf32>
    %36 = arith.mulf %35, %35 : vector<8x128xf32>
    %37 = vector.broadcast %34 : vector<8x1xf32> to vector<8x128xf32>
    %38 = arith.mulf %37, %36 : vector<8x128xf32>
    %39 = vector.shape_cast %38 : vector<8x128xf32> to vector<1x8x128xf32>
    %cst_14 = arith.constant dense<0.000000e+00> : vector<1xf32>
    %40 = vector.multi_reduction <add>, %39, %cst_14 [1, 2] : vector<1x8x128xf32> to vector<1xf32>
    %41 = vector.shape_cast %40 : vector<1xf32> to vector<1x1x1xf32>
    %42 = vector.extract %41[0, 0, 0] : f32 from vector<1x1x1xf32>
    %c0_15 = arith.constant 0 : index
    %c0_16 = arith.constant 0 : index
    %43 = memref.load %arg6[%c0_15, %c0_16] : memref<1x1xf32, #tpu.memory_space<smem>>
    memref.store %42, %arg6[%c0_15, %c0_16] : memref<1x1xf32, #tpu.memory_space<smem>>
    return
  }
  func.func @transform_0(%arg0: i32) -> (i32, i32) {
    %c0_i32 = arith.constant 0 : i32
    %c0_i32_0 = arith.constant 0 : i32
    return %arg0, %c0_i32 : i32, i32
  }
  func.func @transform_1(%arg0: i32) -> (i32, i32) {
    %c0_i32 = arith.constant 0 : i32
    %c0_i32_0 = arith.constant 0 : i32
    %c0_i32_1 = arith.constant 0 : i32
    return %c0_i32, %c0_i32_0 : i32, i32
  }
  func.func @transform_2(%arg0: i32) -> (i32, i32) {
    %c0_i32 = arith.constant 0 : i32
    %c0_i32_0 = arith.constant 0 : i32
    %c0_i32_1 = arith.constant 0 : i32
    return %c0_i32, %c0_i32_0 : i32, i32
  }
  func.func @transform_3(%arg0: i32) -> (i32, i32) {
    %c0_i32 = arith.constant 0 : i32
    %c0_i32_0 = arith.constant 0 : i32
    return %arg0, %c0_i32 : i32, i32
  }
  func.func @transform_4(%arg0: i32) -> (i32, i32) {
    %c0_i32 = arith.constant 0 : i32
    %c0_i32_0 = arith.constant 0 : i32
    return %arg0, %c0_i32 : i32, i32
  }
  func.func @transform_5(%arg0: i32) -> (i32, i32) {
    %c0_i32 = arith.constant 0 : i32
    %c0_i32_0 = arith.constant 0 : i32
    return %arg0, %c0_i32 : i32, i32
  }
}

module attributes {stable_mosaic.version = 11 : i64} {
  func.func @_matmul_bias_kernel(%arg0: i32, %arg1: memref<32x256xbf16, #tpu.memory_space<vmem>>, %arg2: memref<256x128xbf16, #tpu.memory_space<vmem>>, %arg3: memref<1x128xf32, #tpu.memory_space<vmem>>, %arg4: memref<32x128xbf16, #tpu.memory_space<vmem>>) attributes {dimension_semantics = [#tpu.dimension_semantics<parallel>], iteration_bounds = array<i64: 1>, scalar_prefetch = 0 : i64, scratch_operands = 0 : i64, tpu.core_type = #tpu.core_type<tc>, window_params = [{transform_indices = @transform_0, window_bounds = array<i64: 32, 256>}, {pipeline_mode = #tpu.pipeline_mode<synchronous>, transform_indices = @transform_1, window_bounds = array<i64: 256, 128>}, {pipeline_mode = #tpu.pipeline_mode<synchronous>, transform_indices = @transform_2, window_bounds = array<i64: 1, 128>}, {transform_indices = @transform_3, window_bounds = array<i64: 32, 128>}]} {
    %c0 = arith.constant 0 : index
    %c0_0 = arith.constant 0 : index
    %0 = vector.load %arg1[%c0, %c0_0] : memref<32x256xbf16, #tpu.memory_space<vmem>>, vector<32x256xbf16>
    %c0_1 = arith.constant 0 : index
    %c0_2 = arith.constant 0 : index
    %1 = vector.load %arg2[%c0_1, %c0_2] : memref<256x128xbf16, #tpu.memory_space<vmem>>, vector<256x128xbf16>
    %cst = arith.constant dense<0.000000e+00> : vector<32x128xf32>
    %2 = tpu.matmul %0, %1, %cst {dimension_numbers = #tpu.dot_dimension_numbers<[1], [0], [0], [1], [0, 0, 1, 1], [], []>} : vector<32x256xbf16>, vector<256x128xbf16>, vector<32x128xf32> -> vector<32x128xf32>
    %c0_3 = arith.constant 0 : index
    %c0_4 = arith.constant 0 : index
    %3 = vector.load %arg3[%c0_3, %c0_4] : memref<1x128xf32, #tpu.memory_space<vmem>>, vector<1x128xf32>
    %4 = vector.broadcast %3 : vector<1x128xf32> to vector<32x128xf32>
    %5 = arith.addf %2, %4 : vector<32x128xf32>
    %cst_5 = arith.constant 0.000000e+00 : f32
    %6 = vector.broadcast %cst_5 : f32 to vector<32x128xf32>
    %7 = arith.maximumf %5, %6 : vector<32x128xf32>
    %8 = arith.truncf %7 : vector<32x128xf32> to vector<32x128xbf16>
    %c0_6 = arith.constant 0 : index
    %c0_7 = arith.constant 0 : index
    %9 = vector.load %arg4[%c0_6, %c0_7] : memref<32x128xbf16, #tpu.memory_space<vmem>>, vector<32x128xbf16>
    tpu.vector_store %arg4[%c0_6, %c0_7], %8 {strides = array<i32>} : memref<32x128xbf16, #tpu.memory_space<vmem>>, vector<32x128xbf16>,
    return
  }
  func.func @transform_0(%arg0: i32) -> (i32, i32) {
    %c0_i32 = arith.constant 0 : i32
    %c0_i32_0 = arith.constant 0 : i32
    return %arg0, %c0_i32 : i32, i32
  }
  func.func @transform_1(%arg0: i32) -> (i32, i32) {
    %c0_i32 = arith.constant 0 : i32
    %c0_i32_0 = arith.constant 0 : i32
    %c0_i32_1 = arith.constant 0 : i32
    return %c0_i32, %c0_i32_0 : i32, i32
  }
  func.func @transform_2(%arg0: i32) -> (i32, i32) {
    %c0_i32 = arith.constant 0 : i32
    %c0_i32_0 = arith.constant 0 : i32
    %c0_i32_1 = arith.constant 0 : i32
    return %c0_i32, %c0_i32_0 : i32, i32
  }
  func.func @transform_3(%arg0: i32) -> (i32, i32) {
    %c0_i32 = arith.constant 0 : i32
    %c0_i32_0 = arith.constant 0 : i32
    return %arg0, %c0_i32 : i32, i32
  }
}

module attributes {stable_mosaic.version = 11 : i64} {
  func.func @_matmul_bias_kernel(%arg0: i32, %arg1: memref<128x128xbf16, #tpu.memory_space<vmem>>, %arg2: memref<128x64xbf16, #tpu.memory_space<vmem>>, %arg3: memref<1x64xf32, #tpu.memory_space<vmem>>, %arg4: memref<128x64xbf16, #tpu.memory_space<vmem>>) attributes {dimension_semantics = [#tpu.dimension_semantics<parallel>], iteration_bounds = array<i64: 1>, scalar_prefetch = 0 : i64, scratch_operands = 0 : i64, tpu.core_type = #tpu.core_type<tc>, window_params = [{transform_indices = @transform_0, window_bounds = array<i64: 128, 128>}, {pipeline_mode = #tpu.pipeline_mode<synchronous>, transform_indices = @transform_1, window_bounds = array<i64: 128, 64>}, {pipeline_mode = #tpu.pipeline_mode<synchronous>, transform_indices = @transform_2, window_bounds = array<i64: 1, 64>}, {transform_indices = @transform_3, window_bounds = array<i64: 128, 64>}]} {
    %c0 = arith.constant 0 : index
    %c0_0 = arith.constant 0 : index
    %0 = vector.load %arg1[%c0, %c0_0] : memref<128x128xbf16, #tpu.memory_space<vmem>>, vector<128x128xbf16>
    %c0_1 = arith.constant 0 : index
    %c0_2 = arith.constant 0 : index
    %1 = vector.load %arg2[%c0_1, %c0_2] : memref<128x64xbf16, #tpu.memory_space<vmem>>, vector<128x64xbf16>
    %cst = arith.constant dense<0.000000e+00> : vector<128x64xf32>
    %2 = tpu.matmul %0, %1, %cst {dimension_numbers = #tpu.dot_dimension_numbers<[1], [0], [0], [1], [0, 0, 1, 1], [], []>} : vector<128x128xbf16>, vector<128x64xbf16>, vector<128x64xf32> -> vector<128x64xf32>
    %c0_3 = arith.constant 0 : index
    %c0_4 = arith.constant 0 : index
    %3 = vector.load %arg3[%c0_3, %c0_4] : memref<1x64xf32, #tpu.memory_space<vmem>>, vector<1x64xf32>
    %4 = vector.broadcast %3 : vector<1x64xf32> to vector<128x64xf32>
    %5 = arith.addf %2, %4 : vector<128x64xf32>
    %cst_5 = arith.constant 0.000000e+00 : f32
    %6 = vector.broadcast %cst_5 : f32 to vector<128x64xf32>
    %7 = arith.maximumf %5, %6 : vector<128x64xf32>
    %8 = arith.truncf %7 : vector<128x64xf32> to vector<128x64xbf16>
    %c0_6 = arith.constant 0 : index
    %c0_7 = arith.constant 0 : index
    %9 = vector.load %arg4[%c0_6, %c0_7] : memref<128x64xbf16, #tpu.memory_space<vmem>>, vector<128x64xbf16>
    tpu.vector_store %arg4[%c0_6, %c0_7], %8 {strides = array<i32>} : memref<128x64xbf16, #tpu.memory_space<vmem>>, vector<128x64xbf16>,
    return
  }
  func.func @transform_0(%arg0: i32) -> (i32, i32) {
    %c0_i32 = arith.constant 0 : i32
    %c0_i32_0 = arith.constant 0 : i32
    return %arg0, %c0_i32 : i32, i32
  }
  func.func @transform_1(%arg0: i32) -> (i32, i32) {
    %c0_i32 = arith.constant 0 : i32
    %c0_i32_0 = arith.constant 0 : i32
    %c0_i32_1 = arith.constant 0 : i32
    return %c0_i32, %c0_i32_0 : i32, i32
  }
  func.func @transform_2(%arg0: i32) -> (i32, i32) {
    %c0_i32 = arith.constant 0 : i32
    %c0_i32_0 = arith.constant 0 : i32
    %c0_i32_1 = arith.constant 0 : i32
    return %c0_i32, %c0_i32_0 : i32, i32
  }
  func.func @transform_3(%arg0: i32) -> (i32, i32) {
    %c0_i32 = arith.constant 0 : i32
    %c0_i32_0 = arith.constant 0 : i32
    return %arg0, %c0_i32 : i32, i32
  }
}

module attributes {stable_mosaic.version = 11 : i64} {
  func.func @_matmul_bias_mse_kernel(%arg0: i32, %arg1: memref<512x144xbf16, #tpu.memory_space<vmem>>, %arg2: memref<144x128xbf16, #tpu.memory_space<vmem>>, %arg3: memref<1x128xf32, #tpu.memory_space<vmem>>, %arg4: memref<512x128xf32, #tpu.memory_space<vmem>>, %arg5: memref<512x128xf32, #tpu.memory_space<vmem>>, %arg6: memref<1x1xf32, #tpu.memory_space<smem>>) attributes {dimension_semantics = [#tpu.dimension_semantics<parallel>], iteration_bounds = array<i64: 1>, scalar_prefetch = 0 : i64, scratch_operands = 0 : i64, tpu.core_type = #tpu.core_type<tc>, window_params = [{transform_indices = @transform_0, window_bounds = array<i64: 512, 144>}, {pipeline_mode = #tpu.pipeline_mode<synchronous>, transform_indices = @transform_1, window_bounds = array<i64: 144, 128>}, {pipeline_mode = #tpu.pipeline_mode<synchronous>, transform_indices = @transform_2, window_bounds = array<i64: 1, 128>}, {transform_indices = @transform_3, window_bounds = array<i64: 512, 128>}, {transform_indices = @transform_4, window_bounds = array<i64: 512, 128>}, {transform_indices = @transform_5, window_bounds = array<i64: 1, 1>}]} {
    %c0 = arith.constant 0 : index
    %c0_0 = arith.constant 0 : index
    %0 = vector.load %arg1[%c0, %c0_0] : memref<512x144xbf16, #tpu.memory_space<vmem>>, vector<512x144xbf16>
    %c0_1 = arith.constant 0 : index
    %c0_2 = arith.constant 0 : index
    %1 = vector.load %arg2[%c0_1, %c0_2] : memref<144x128xbf16, #tpu.memory_space<vmem>>, vector<144x128xbf16>
    %cst = arith.constant dense<0.000000e+00> : vector<512x128xf32>
    %2 = tpu.matmul %0, %1, %cst {dimension_numbers = #tpu.dot_dimension_numbers<[1], [0], [0], [1], [0, 0, 1, 1], [], []>} : vector<512x144xbf16>, vector<144x128xbf16>, vector<512x128xf32> -> vector<512x128xf32>
    %c0_3 = arith.constant 0 : index
    %c0_4 = arith.constant 0 : index
    %3 = vector.load %arg3[%c0_3, %c0_4] : memref<1x128xf32, #tpu.memory_space<vmem>>, vector<1x128xf32>
    %4 = vector.broadcast %3 : vector<1x128xf32> to vector<512x128xf32>
    %5 = arith.addf %2, %4 : vector<512x128xf32>
    %c0_5 = arith.constant 0 : index
    %c0_6 = arith.constant 0 : index
    %6 = vector.load %arg5[%c0_5, %c0_6] : memref<512x128xf32, #tpu.memory_space<vmem>>, vector<512x128xf32>
    tpu.vector_store %arg5[%c0_5, %c0_6], %5 {strides = array<i32>} : memref<512x128xf32, #tpu.memory_space<vmem>>, vector<512x128xf32>,
    %c512_i32 = arith.constant 512 : i32
    %7 = arith.muli %arg0, %c512_i32 : i32
    %8 = tpu.iota {dimensions = array<i32: 0>} : vector<512x1xi32>
    %9 = vector.broadcast %7 : i32 to vector<512x1xi32>
    %10 = arith.addi %9, %8 : vector<512x1xi32>
    %c512_i32_7 = arith.constant 512 : i32
    %11 = vector.broadcast %c512_i32_7 : i32 to vector<512x1xi32>
    %12 = arith.cmpi slt, %10, %11 : vector<512x1xi32>
    %13 = arith.extui %12 : vector<512x1xi1> to vector<512x1xi32>
    %14 = arith.sitofp %13 : vector<512x1xi32> to vector<512x1xf32>
    %c0_8 = arith.constant 0 : index
    %c0_9 = arith.constant 0 : index
    %15 = vector.load %arg4[%c0_8, %c0_9] : memref<512x128xf32, #tpu.memory_space<vmem>>, vector<512x128xf32>
    %16 = arith.subf %5, %15 : vector<512x128xf32>
    %17 = arith.mulf %16, %16 : vector<512x128xf32>
    %18 = vector.broadcast %14 : vector<512x1xf32> to vector<512x128xf32>
    %19 = arith.mulf %18, %17 : vector<512x128xf32>
    %20 = vector.shape_cast %19 : vector<512x128xf32> to vector<1x512x128xf32>
    %cst_10 = arith.constant dense<0.000000e+00> : vector<1xf32>
    %21 = vector.multi_reduction <add>, %20, %cst_10 [1, 2] : vector<1x512x128xf32> to vector<1xf32>
    %22 = vector.shape_cast %21 : vector<1xf32> to vector<1x1x1xf32>
    %23 = vector.extract %22[0, 0, 0] : f32 from vector<1x1x1xf32>
    %c0_11 = arith.constant 0 : index
    %c0_12 = arith.constant 0 : index
    %24 = memref.load %arg6[%c0_11, %c0_12] : memref<1x1xf32, #tpu.memory_space<smem>>
    memref.store %23, %arg6[%c0_11, %c0_12] : memref<1x1xf32, #tpu.memory_space<smem>>
    return
  }
  func.func @transform_0(%arg0: i32) -> (i32, i32) {
    %c0_i32 = arith.constant 0 : i32
    %c0_i32_0 = arith.constant 0 : i32
    return %arg0, %c0_i32 : i32, i32
  }
  func.func @transform_1(%arg0: i32) -> (i32, i32) {
    %c0_i32 = arith.constant 0 : i32
    %c0_i32_0 = arith.constant 0 : i32
    %c0_i32_1 = arith.constant 0 : i32
    return %c0_i32, %c0_i32_0 : i32, i32
  }
  func.func @transform_2(%arg0: i32) -> (i32, i32) {
    %c0_i32 = arith.constant 0 : i32
    %c0_i32_0 = arith.constant 0 : i32
    %c0_i32_1 = arith.constant 0 : i32
    return %c0_i32, %c0_i32_0 : i32, i32
  }
  func.func @transform_3(%arg0: i32) -> (i32, i32) {
    %c0_i32 = arith.constant 0 : i32
    %c0_i32_0 = arith.constant 0 : i32
    return %arg0, %c0_i32 : i32, i32
  }
  func.func @transform_4(%arg0: i32) -> (i32, i32) {
    %c0_i32 = arith.constant 0 : i32
    %c0_i32_0 = arith.constant 0 : i32
    return %arg0, %c0_i32 : i32, i32
  }
  func.func @transform_5(%arg0: i32) -> (i32, i32) {
    %c0_i32 = arith.constant 0 : i32
    %c0_i32_0 = arith.constant 0 : i32
    return %arg0, %c0_i32 : i32, i32
  }
}

</mosaic_0001>

<llo_original>
// kernel: vqcae_forward.9
$region0: #{vqcae_forward.9}
  #allocation0 [shape = 'u32[]', space=smem, size = 0x4, offset = 0x4, fixed_abs, tag = 'smem constant byte address 0x4 - core index']
  #allocation1 [shape = 'u32[144,128]{1,0:T(1,128)}', space=vmem, size = 0x12000, scoped, tag = 'internal scratch']
  %s0 = inlined_call_operand.vmem [shape: bf16[512,27], index: 0, kind: input, shape index: {}]
  %s1 = inlined_call_operand.vmem [shape: bf16[27,128], index: 1, kind: input, shape index: {}]
  %s2 = inlined_call_operand.vmem [shape: f32[1,128], index: 2, kind: input, shape index: {}]
  %s3 = inlined_call_operand.vmem [shape: bf16[512,128], index: 3, kind: output, shape index: {}]
  %s4 = sld [smem:[#allocation0]]
  $region22: #{vqcae_forward.9} parent=0
    _
  %s6 = ssub.s32 1, %s4
  %s7 = scalar_select 0, %s6, %s4
  // Predicated region
  $region2: #{vqcae_forward.9} parent=0 // pred_check
    _
  $region3: #{vqcae_forward.9} parent=0 // pred_check_branch
    %9 = sbr.rel (0) target = $region5
  $region4: #{vqcae_forward.9} parent=0 // pred_region
    _
  $region5: #{vqcae_forward.9} parent=0 // pred_fallthru
    _
  // Predicated region
  $region6: #{vqcae_forward.9} parent=0 // pred_check
    _
  $region7: #{vqcae_forward.9} parent=0 // pred_check_branch
    %11 = sbr.rel (0) target = $region9
  $region8: #{vqcae_forward.9} parent=0 // pred_region
    _
  $region9: #{vqcae_forward.9} parent=0 // pred_fallthru
    _
  // Predicated region
  $region10: #{vqcae_forward.9} parent=0 // pred_check
    _
  $region11: #{vqcae_forward.9} parent=0 // pred_check_branch
    %13 = sbr.rel (0) target = $region13
  $region12: #{vqcae_forward.9} parent=0 // pred_region
    _
  $region13: #{vqcae_forward.9} parent=0 // pred_fallthru
    _
  %v15 = vld [vmem:[%s0] sm:$0xf]
  %v16 = vld [vmem:[%s0 + $0x4] sm:$0xf]
  %v17 = vld [vmem:[%s0 + $0x8] sm:$0xf]
  %v18 = vld [vmem:[%s0 + $0xc] sm:$0xf]
  %v19 = vld [vmem:[%s0 + $0x10] sm:$0xf]
  %v20 = vld [vmem:[%s0 + $0x14] sm:$0xf]
  %v21 = vld [vmem:[%s0 + $0x18] sm:$0xf]
  %v22 = vld [vmem:[%s0 + $0x1c] sm:$0xf]
  %v23 = vld [vmem:[%s0 + $0x20] sm:$0xf]
  %v24 = vld [vmem:[%s0 + $0x24] sm:$0xf]
  %v25 = vld [vmem:[%s0 + $0x28] sm:$0xf]
  %v26 = vld [vmem:[%s0 + $0x2c] sm:$0xf]
  %v27 = vld [vmem:[%s0 + $0x30] sm:$0xf]
  %v28 = vld [vmem:[%s0 + $0x34] sm:$0xf]
  %v29 = vld [vmem:[%s0 + $0x38] sm:$0xf]
  %v30 = vld [vmem:[%s0 + $0x3c] sm:$0xf]
  %v31 = vld [vmem:[%s0 + $0x40] sm:$0xf]
  %v32 = vld [vmem:[%s0 + $0x44] sm:$0xf]
  %v33 = vld [vmem:[%s0 + $0x48] sm:$0xf]
  %v34 = vld [vmem:[%s0 + $0x4c] sm:$0xf]
  %v35 = vld [vmem:[%s0 + $0x50] sm:$0xf]
  %v36 = vld [vmem:[%s0 + $0x54] sm:$0xf]
  %v37 = vld [vmem:[%s0 + $0x58] sm:$0xf]
  %v38 = vld [vmem:[%s0 + $0x5c] sm:$0xf]
  %v39 = vld [vmem:[%s0 + $0x60] sm:$0xf]
  %v40 = vld [vmem:[%s0 + $0x64] sm:$0xf]
  %v41 = vld [vmem:[%s0 + $0x68] sm:$0xf]
  %v42 = vld [vmem:[%s0 + $0x6c] sm:$0xf]
  %v43 = vld [vmem:[%s0 + $0x70] sm:$0xf]
  %v44 = vld [vmem:[%s0 + $0x74] sm:$0xf]
  %v45 = vld [vmem:[%s0 + $0x78] sm:$0xf]
  %v46 = vld [vmem:[%s0 + $0x7c] sm:$0xf]
  %v47 = vld [vmem:[%s0 + $0x80] sm:$0xf]
  %v48 = vld [vmem:[%s0 + $0x84] sm:$0xf]
  %v49 = vld [vmem:[%s0 + $0x88] sm:$0xf]
  %v50 = vld [vmem:[%s0 + $0x8c] sm:$0xf]
  %v51 = vld [vmem:[%s0 + $0x90] sm:$0xf]
  %v52 = vld [vmem:[%s0 + $0x94] sm:$0xf]
  %v53 = vld [vmem:[%s0 + $0x98] sm:$0xf]
  %v54 = vld [vmem:[%s0 + $0x9c] sm:$0xf]
  %v55 = vld [vmem:[%s0 + $0xa0] sm:$0xf]
  %v56 = vld [vmem:[%s0 + $0xa4] sm:$0xf]
  %v57 = vld [vmem:[%s0 + $0xa8] sm:$0xf]
  %v58 = vld [vmem:[%s0 + $0xac] sm:$0xf]
  %v59 = vld [vmem:[%s0 + $0xb0] sm:$0xf]
  %v60 = vld [vmem:[%s0 + $0xb4] sm:$0xf]
  %v61 = vld [vmem:[%s0 + $0xb8] sm:$0xf]
  %v62 = vld [vmem:[%s0 + $0xbc] sm:$0xf]
  %v63 = vld [vmem:[%s0 + $0xc0] sm:$0xf]
  %v64 = vld [vmem:[%s0 + $0xc4] sm:$0xf]
  %v65 = vld [vmem:[%s0 + $0xc8] sm:$0xf]
  %v66 = vld [vmem:[%s0 + $0xcc] sm:$0xf]
  %v67 = vld [vmem:[%s0 + $0xd0] sm:$0xf]
  %v68 = vld [vmem:[%s0 + $0xd4] sm:$0xf]
  %v69 = vld [vmem:[%s0 + $0xd8] sm:$0xf]
  %v70 = vld [vmem:[%s0 + $0xdc] sm:$0xf]
  %v71 = vld [vmem:[%s0 + $0xe0] sm:$0xf]
  %v72 = vld [vmem:[%s0 + $0xe4] sm:$0xf]
  %v73 = vld [vmem:[%s0 + $0xe8] sm:$0xf]
  %v74 = vld [vmem:[%s0 + $0xec] sm:$0xf]
  %v75 = vld [vmem:[%s0 + $0xf0] sm:$0xf]
  %v76 = vld [vmem:[%s0 + $0xf4] sm:$0xf]
  %v77 = vld [vmem:[%s0 + $0xf8] sm:$0xf]
  %v78 = vld [vmem:[%s0 + $0xfc] sm:$0xf]
  %v79 = vld [vmem:[%s1] sm:$0xf]
  %v80 = vld [vmem:[%s1 + $0x4] sm:$0xf]
  %v81 = vld [vmem:[%s1 + $0x8] sm:$0xf]
  %v82 = vld [vmem:[%s1 + $0xc] sm:$0x3]
  %v83 = vld [vmem:[%s2] sm:$0x1]
  %v85 = vlaneseq
  %v86 = vshrl.u32 %v85, 7
  %v87 = vsub.s32 0, %v86
  %v88 = vrot.slane %v83, %v87
  %v154 = vunpack.c.l.b16 %v15
  %v155 = vunpack.c.l.b16 %v16
  %v156 = vunpack.c.l.b16 %v17
  %v157 = vunpack.c.l.b16 %v18
  %v158 = vunpack.c.l.b16 %v19
  %v159 = vunpack.c.l.b16 %v20
  %v160 = vunpack.c.l.b16 %v21
  %v161 = vunpack.c.l.b16 %v22
  %v162 = vunpack.c.l.b16 %v23
  %v163 = vunpack.c.l.b16 %v24
  %v164 = vunpack.c.l.b16 %v25
  %v165 = vunpack.c.l.b16 %v26
  %v166 = vunpack.c.l.b16 %v27
  %v167 = vunpack.c.l.b16 %v28
  %v168 = vunpack.c.l.b16 %v29
  %v169 = vunpack.c.l.b16 %v30
  %v170 = vunpack.c.l.b16 %v31
  %v171 = vunpack.c.l.b16 %v32
  %v172 = vunpack.c.l.b16 %v33
  %v173 = vunpack.c.l.b16 %v34
  %v174 = vunpack.c.l.b16 %v35
  %v175 = vunpack.c.l.b16 %v36
  %v176 = vunpack.c.l.b16 %v37
  %v177 = vunpack.c.l.b16 %v38
  %v178 = vunpack.c.l.b16 %v39
  %v179 = vunpack.c.l.b16 %v40
  %v180 = vunpack.c.l.b16 %v41
  %v181 = vunpack.c.l.b16 %v42
  %v182 = vunpack.c.l.b16 %v43
  %v183 = vunpack.c.l.b16 %v44
  %v184 = vunpack.c.l.b16 %v45
  %v185 = vunpack.c.l.b16 %v46
  %v186 = vunpack.c.l.b16 %v47
  %v187 = vunpack.c.l.b16 %v48
  %v188 = vunpack.c.l.b16 %v49
  %v189 = vunpack.c.l.b16 %v50
  %v190 = vunpack.c.l.b16 %v51
  %v191 = vunpack.c.l.b16 %v52
  %v192 = vunpack.c.l.b16 %v53
  %v193 = vunpack.c.l.b16 %v54
  %v194 = vunpack.c.l.b16 %v55
  %v195 = vunpack.c.l.b16 %v56
  %v196 = vunpack.c.l.b16 %v57
  %v197 = vunpack.c.l.b16 %v58
  %v198 = vunpack.c.l.b16 %v59
  %v199 = vunpack.c.l.b16 %v60
  %v200 = vunpack.c.l.b16 %v61
  %v201 = vunpack.c.l.b16 %v62
  %v202 = vunpack.c.l.b16 %v63
  %v203 = vunpack.c.l.b16 %v64
  %v204 = vunpack.c.l.b16 %v65
  %v205 = vunpack.c.l.b16 %v66
  %v206 = vunpack.c.l.b16 %v67
  %v207 = vunpack.c.l.b16 %v68
  %v208 = vunpack.c.l.b16 %v69
  %v209 = vunpack.c.l.b16 %v70
  %v210 = vunpack.c.l.b16 %v71
  %v211 = vunpack.c.l.b16 %v72
  %v212 = vunpack.c.l.b16 %v73
  %v213 = vunpack.c.l.b16 %v74
  %v214 = vunpack.c.l.b16 %v75
  %v215 = vunpack.c.l.b16 %v76
  %v216 = vunpack.c.l.b16 %v77
  %v217 = vunpack.c.l.b16 %v78
  %v218 = vpack.c.b16 %v155, %v154
  %v219 = vpack.c.b16 %v157, %v156
  %v220 = vpack.c.b16 %v159, %v158
  %v221 = vpack.c.b16 %v161, %v160
  %v222 = vpack.c.b16 %v163, %v162
  %v223 = vpack.c.b16 %v165, %v164
  %v224 = vpack.c.b16 %v167, %v166
  %v225 = vpack.c.b16 %v169, %v168
  %v226 = vpack.c.b16 %v171, %v170
  %v227 = vpack.c.b16 %v173, %v172
  %v228 = vpack.c.b16 %v175, %v174
  %v229 = vpack.c.b16 %v177, %v176
  %v230 = vpack.c.b16 %v179, %v178
  %v231 = vpack.c.b16 %v181, %v180
  %v232 = vpack.c.b16 %v183, %v182
  %v233 = vpack.c.b16 %v185, %v184
  %v234 = vpack.c.b16 %v187, %v186
  %v235 = vpack.c.b16 %v189, %v188
  %v236 = vpack.c.b16 %v191, %v190
  %v237 = vpack.c.b16 %v193, %v192
  %v238 = vpack.c.b16 %v195, %v194
  %v239 = vpack.c.b16 %v197, %v196
  %v240 = vpack.c.b16 %v199, %v198
  %v241 = vpack.c.b16 %v201, %v200
  %v242 = vpack.c.b16 %v203, %v202
  %v243 = vpack.c.b16 %v205, %v204
  %v244 = vpack.c.b16 %v207, %v206
  %v245 = vpack.c.b16 %v209, %v208
  %v246 = vpack.c.b16 %v211, %v210
  %v247 = vpack.c.b16 %v213, %v212
  %v248 = vpack.c.b16 %v215, %v214
  %v249 = vpack.c.b16 %v217, %v216
  %v254 = vunpack.c.l.b16 %v79
  %v255 = vunpack.c.l.b16 %v80
  %v256 = vunpack.c.l.b16 %v81
  %v257 = vunpack.c.l.b16 %v82
  %v258 = vpack.c.b16 %v255, %v254
  %v259 = vpack.c.b16 %v257, %v256
  %vm261 = vcmask 220160
  %v263 = vsel %vm261, %v218, 0
  %v266 = vsel %vm261, %v219, 0
  %v269 = vsel %vm261, %v220, 0
  %v272 = vsel %vm261, %v221, 0
  %v275 = vsel %vm261, %v222, 0
  %v278 = vsel %vm261, %v223, 0
  %v281 = vsel %vm261, %v224, 0
  %v284 = vsel %vm261, %v225, 0
  %v287 = vsel %vm261, %v226, 0
  %v290 = vsel %vm261, %v227, 0
  %v293 = vsel %vm261, %v228, 0
  %v296 = vsel %vm261, %v229, 0
  %v299 = vsel %vm261, %v230, 0
  %v302 = vsel %vm261, %v231, 0
  %v305 = vsel %vm261, %v232, 0
  %v308 = vsel %vm261, %v233, 0
  %v311 = vsel %vm261, %v234, 0
  %v314 = vsel %vm261, %v235, 0
  %v317 = vsel %vm261, %v236, 0
  %v320 = vsel %vm261, %v237, 0
  %v323 = vsel %vm261, %v238, 0
  %v326 = vsel %vm261, %v239, 0
  %v329 = vsel %vm261, %v240, 0
  %v332 = vsel %vm261, %v241, 0
  %v335 = vsel %vm261, %v242, 0
  %v338 = vsel %vm261, %v243, 0
  %v341 = vsel %vm261, %v244, 0
  %v344 = vsel %vm261, %v245, 0
  %v347 = vsel %vm261, %v246, 0
  %v350 = vsel %vm261, %v247, 0
  %v353 = vsel %vm261, %v248, 0
  %v356 = vsel %vm261, %v249, 0
  %vm358 = vcmask 1044480
  %vm359 = vcmask 1045504
  %v360 = vsel %vm358, 4294967295, 65535
  %v361 = vsel %vm359, %v360, 0
  %v363 = vand.u32 %v259, %v361
  %365 = vmatprep.subr.bf16.mxu0 0
  %366 = vmatpush1.bf16.msra.mxu0 0
  %367 = vmatprep.subr.bf16.mxu0 0
  %368 = vmatpush1.bf16.msra.mxu0 0
  %369 = vmatprep.subr.bf16.mxu0 0
  %370 = vmatpush1.bf16.msra.mxu0 0
  %371 = vmatprep.subr.bf16.mxu0 0
  %372 = vmatpush1.bf16.msra.mxu0 0
  %373 = vmatprep.subr.bf16.mxu0 0
  %374 = vmatpush1.bf16.msra.mxu0 0
  %375 = vmatprep.subr.bf16.mxu0 0
  %376 = vmatpush1.bf16.msra.mxu0 0
  %377 = vmatprep.subr.bf16.mxu0 0
  %378 = vmatpush1.bf16.msra.mxu0 %v363
  %379 = vmatprep.subr.bf16.mxu0 0
  %380 = vmatpush1.bf16.msra.mxu0 %v258
  %381 = vmatprep.subr.bf16.mxu0 0
  %382 = vmatpush2.bf16.msra.mxu0 0
  %383 = vmatprep.subr.bf16.mxu0 0
  %384 = vmatpush2.bf16.msra.mxu0 0
  %385 = vmatprep.subr.bf16.mxu0 0
  %386 = vmatpush2.bf16.msra.mxu0 0
  %387 = vmatprep.subr.bf16.mxu0 0
  %388 = vmatpush2.bf16.msra.mxu0 0
  %389 = vmatprep.subr.bf16.mxu0 0
  %390 = vmatpush2.bf16.msra.mxu0 0
  %391 = vmatprep.subr.bf16.mxu0 0
  %392 = vmatpush2.bf16.msra.mxu0 0
  %393 = vmatprep.subr.bf16.mxu0 0
  %394 = vmatpush2.bf16.msra.mxu0 0
  %395 = vmatprep.subr.bf16.mxu0 0
  %396 = vmatpush2.bf16.msra.mxu0 0
  %397 = vmatprep.mubr.bf16.mxu0 0
  %398 = vmatmul.mubr.bf16.gmra.mxu0 %v263
  %v399 = vpop.f32.mrf.mxu0
  %v400 = vadd.f32 %v88, %v399
  %v401 = vpop.f32.mrf.mxu0
  %v402 = vpop.f32.mrf.mxu0
  %v403 = vadd.f32 %v88, %v402
  %v404 = vpop.f32.mrf.mxu0
  %405 = vmatprep.mubr.bf16.mxu0 0
  %406 = vmatmul.mubr.bf16.gmra.mxu0 %v266
  %v407 = vpop.f32.mrf.mxu0
  %v408 = vadd.f32 %v88, %v407
  %v409 = vpop.f32.mrf.mxu0
  %v410 = vpop.f32.mrf.mxu0
  %v411 = vadd.f32 %v88, %v410
  %v412 = vpop.f32.mrf.mxu0
  %413 = vmatprep.mubr.bf16.mxu0 0
  %414 = vmatmul.mubr.bf16.gmra.mxu0 %v269
  %v415 = vpop.f32.mrf.mxu0
  %v416 = vadd.f32 %v88, %v415
  %v417 = vpop.f32.mrf.mxu0
  %v418 = vpop.f32.mrf.mxu0
  %v419 = vadd.f32 %v88, %v418
  %v420 = vpop.f32.mrf.mxu0
  %421 = vmatprep.mubr.bf16.mxu0 0
  %422 = vmatmul.mubr.bf16.gmra.mxu0 %v272
  %v423 = vpop.f32.mrf.mxu0
  %v424 = vadd.f32 %v88, %v423
  %v425 = vpop.f32.mrf.mxu0
  %v426 = vpop.f32.mrf.mxu0
  %v427 = vadd.f32 %v88, %v426
  %v428 = vpop.f32.mrf.mxu0
  %429 = vmatprep.mubr.bf16.mxu0 0
  %430 = vmatmul.mubr.bf16.gmra.mxu0 %v275
  %v431 = vpop.f32.mrf.mxu0
  %v432 = vadd.f32 %v88, %v431
  %v433 = vpop.f32.mrf.mxu0
  %v434 = vpop.f32.mrf.mxu0
  %v435 = vadd.f32 %v88, %v434
  %v436 = vpop.f32.mrf.mxu0
  %437 = vmatprep.mubr.bf16.mxu0 0
  %438 = vmatmul.mubr.bf16.gmra.mxu0 %v278
  %v439 = vpop.f32.mrf.mxu0
  %v440 = vadd.f32 %v88, %v439
  %v441 = vpop.f32.mrf.mxu0
  %v442 = vpop.f32.mrf.mxu0
  %v443 = vadd.f32 %v88, %v442
  %v444 = vpop.f32.mrf.mxu0
  %445 = vmatprep.mubr.bf16.mxu0 0
  %446 = vmatmul.mubr.bf16.gmra.mxu0 %v281
  %v447 = vpop.f32.mrf.mxu0
  %v448 = vadd.f32 %v88, %v447
  %v449 = vpop.f32.mrf.mxu0
  %v450 = vpop.f32.mrf.mxu0
  %v451 = vadd.f32 %v88, %v450
  %v452 = vpop.f32.mrf.mxu0
  %453 = vmatprep.mubr.bf16.mxu0 0
  %454 = vmatmul.mubr.bf16.gmra.mxu0 %v284
  %v455 = vpop.f32.mrf.mxu0
  %v456 = vadd.f32 %v88, %v455
  %v457 = vpop.f32.mrf.mxu0
  %v458 = vpop.f32.mrf.mxu0
  %v459 = vadd.f32 %v88, %v458
  %v460 = vpop.f32.mrf.mxu0
  %461 = vmatprep.mubr.bf16.mxu0 0
  %462 = vmatmul.mubr.bf16.gmra.mxu0 %v287
  %v463 = vpop.f32.mrf.mxu0
  %v464 = vadd.f32 %v88, %v463
  %v465 = vpop.f32.mrf.mxu0
  %v466 = vpop.f32.mrf.mxu0
  %v467 = vadd.f32 %v88, %v466
  %v468 = vpop.f32.mrf.mxu0
  %469 = vmatprep.mubr.bf16.mxu0 0
  %470 = vmatmul.mubr.bf16.gmra.mxu0 %v290
  %v471 = vpop.f32.mrf.mxu0
  %v472 = vadd.f32 %v88, %v471
  %v473 = vpop.f32.mrf.mxu0
  %v474 = vpop.f32.mrf.mxu0
  %v475 = vadd.f32 %v88, %v474
  %v476 = vpop.f32.mrf.mxu0
  %477 = vmatprep.mubr.bf16.mxu0 0
  %478 = vmatmul.mubr.bf16.gmra.mxu0 %v293
  %v479 = vpop.f32.mrf.mxu0
  %v480 = vadd.f32 %v88, %v479
  %v481 = vpop.f32.mrf.mxu0
  %v482 = vpop.f32.mrf.mxu0
  %v483 = vadd.f32 %v88, %v482
  %v484 = vpop.f32.mrf.mxu0
  %485 = vmatprep.mubr.bf16.mxu0 0
  %486 = vmatmul.mubr.bf16.gmra.mxu0 %v296
  %v487 = vpop.f32.mrf.mxu0
  %v488 = vadd.f32 %v88, %v487
  %v489 = vpop.f32.mrf.mxu0
  %v490 = vpop.f32.mrf.mxu0
  %v491 = vadd.f32 %v88, %v490
  %v492 = vpop.f32.mrf.mxu0
  %493 = vmatprep.mubr.bf16.mxu0 0
  %494 = vmatmul.mubr.bf16.gmra.mxu0 %v299
  %v495 = vpop.f32.mrf.mxu0
  %v496 = vadd.f32 %v88, %v495
  %v497 = vpop.f32.mrf.mxu0
  %v498 = vpop.f32.mrf.mxu0
  %v499 = vadd.f32 %v88, %v498
  %v500 = vpop.f32.mrf.mxu0
  %501 = vmatprep.mubr.bf16.mxu0 0
  %502 = vmatmul.mubr.bf16.gmra.mxu0 %v302
  %v503 = vpop.f32.mrf.mxu0
  %v504 = vadd.f32 %v88, %v503
  %v505 = vpop.f32.mrf.mxu0
  %v506 = vpop.f32.mrf.mxu0
  %v507 = vadd.f32 %v88, %v506
  %v508 = vpop.f32.mrf.mxu0
  %509 = vmatprep.mubr.bf16.mxu0 0
  %510 = vmatmul.mubr.bf16.gmra.mxu0 %v305
  %v511 = vpop.f32.mrf.mxu0
  %v512 = vadd.f32 %v88, %v511
  %v513 = vpop.f32.mrf.mxu0
  %v514 = vpop.f32.mrf.mxu0
  %v515 = vadd.f32 %v88, %v514
  %v516 = vpop.f32.mrf.mxu0
  %517 = vmatprep.mubr.bf16.mxu0 0
  %518 = vmatmul.mubr.bf16.gmra.mxu0 %v308
  %v519 = vpop.f32.mrf.mxu0
  %v520 = vadd.f32 %v88, %v519
  %v521 = vpop.f32.mrf.mxu0
  %v522 = vpop.f32.mrf.mxu0
  %v523 = vadd.f32 %v88, %v522
  %v524 = vpop.f32.mrf.mxu0
  %525 = vmatprep.mubr.bf16.mxu0 0
  %526 = vmatmul.mubr.bf16.gmra.mxu0 %v311
  %v527 = vpop.f32.mrf.mxu0
  %v528 = vadd.f32 %v88, %v527
  %v529 = vpop.f32.mrf.mxu0
  %v530 = vpop.f32.mrf.mxu0
  %v531 = vadd.f32 %v88, %v530
  %v532 = vpop.f32.mrf.mxu0
  %533 = vmatprep.mubr.bf16.mxu0 0
  %534 = vmatmul.mubr.bf16.gmra.mxu0 %v314
  %v535 = vpop.f32.mrf.mxu0
  %v536 = vadd.f32 %v88, %v535
  %v537 = vpop.f32.mrf.mxu0
  %v538 = vpop.f32.mrf.mxu0
  %v539 = vadd.f32 %v88, %v538
  %v540 = vpop.f32.mrf.mxu0
  %541 = vmatprep.mubr.bf16.mxu0 0
  %542 = vmatmul.mubr.bf16.gmra.mxu0 %v317
  %v543 = vpop.f32.mrf.mxu0
  %v544 = vadd.f32 %v88, %v543
  %v545 = vpop.f32.mrf.mxu0
  %v546 = vpop.f32.mrf.mxu0
  %v547 = vadd.f32 %v88, %v546
  %v548 = vpop.f32.mrf.mxu0
  %549 = vmatprep.mubr.bf16.mxu0 0
  %550 = vmatmul.mubr.bf16.gmra.mxu0 %v320
  %v551 = vpop.f32.mrf.mxu0
  %v552 = vadd.f32 %v88, %v551
  %v553 = vpop.f32.mrf.mxu0
  %v554 = vpop.f32.mrf.mxu0
  %v555 = vadd.f32 %v88, %v554
  %v556 = vpop.f32.mrf.mxu0
  %557 = vmatprep.mubr.bf16.mxu0 0
  %558 = vmatmul.mubr.bf16.gmra.mxu0 %v323
  %v559 = vpop.f32.mrf.mxu0
  %v560 = vadd.f32 %v88, %v559
  %v561 = vpop.f32.mrf.mxu0
  %v562 = vpop.f32.mrf.mxu0
  %v563 = vadd.f32 %v88, %v562
  %v564 = vpop.f32.mrf.mxu0
  %565 = vmatprep.mubr.bf16.mxu0 0
  %566 = vmatmul.mubr.bf16.gmra.mxu0 %v326
  %v567 = vpop.f32.mrf.mxu0
  %v568 = vadd.f32 %v88, %v567
  %v569 = vpop.f32.mrf.mxu0
  %v570 = vpop.f32.mrf.mxu0
  %v571 = vadd.f32 %v88, %v570
  %v572 = vpop.f32.mrf.mxu0
  %573 = vmatprep.mubr.bf16.mxu0 0
  %574 = vmatmul.mubr.bf16.gmra.mxu0 %v329
  %v575 = vpop.f32.mrf.mxu0
  %v576 = vadd.f32 %v88, %v575
  %v577 = vpop.f32.mrf.mxu0
  %v578 = vpop.f32.mrf.mxu0
  %v579 = vadd.f32 %v88, %v578
  %v580 = vpop.f32.mrf.mxu0
  %581 = vmatprep.mubr.bf16.mxu0 0
  %582 = vmatmul.mubr.bf16.gmra.mxu0 %v332
  %v583 = vpop.f32.mrf.mxu0
  %v584 = vadd.f32 %v88, %v583
  %v585 = vpop.f32.mrf.mxu0
  %v586 = vpop.f32.mrf.mxu0
  %v587 = vadd.f32 %v88, %v586
  %v588 = vpop.f32.mrf.mxu0
  %589 = vmatprep.mubr.bf16.mxu0 0
  %590 = vmatmul.mubr.bf16.gmra.mxu0 %v335
  %v591 = vpop.f32.mrf.mxu0
  %v592 = vadd.f32 %v88, %v591
  %v593 = vpop.f32.mrf.mxu0
  %v594 = vpop.f32.mrf.mxu0
  %v595 = vadd.f32 %v88, %v594
  %v596 = vpop.f32.mrf.mxu0
  %597 = vmatprep.mubr.bf16.mxu0 0
  %598 = vmatmul.mubr.bf16.gmra.mxu0 %v338
  %v599 = vpop.f32.mrf.mxu0
  %v600 = vadd.f32 %v88, %v599
  %v601 = vpop.f32.mrf.mxu0
  %v602 = vpop.f32.mrf.mxu0
  %v603 = vadd.f32 %v88, %v602
  %v604 = vpop.f32.mrf.mxu0
  %605 = vmatprep.mubr.bf16.mxu0 0
  %606 = vmatmul.mubr.bf16.gmra.mxu0 %v341
  %v607 = vpop.f32.mrf.mxu0
  %v608 = vadd.f32 %v88, %v607
  %v609 = vpop.f32.mrf.mxu0
  %v610 = vpop.f32.mrf.mxu0
  %v611 = vadd.f32 %v88, %v610
  %v612 = vpop.f32.mrf.mxu0
  %613 = vmatprep.mubr.bf16.mxu0 0
  %614 = vmatmul.mubr.bf16.gmra.mxu0 %v344
  %v615 = vpop.f32.mrf.mxu0
  %v616 = vadd.f32 %v88, %v615
  %v617 = vpop.f32.mrf.mxu0
  %v618 = vpop.f32.mrf.mxu0
  %v619 = vadd.f32 %v88, %v618
  %v620 = vpop.f32.mrf.mxu0
  %621 = vmatprep.mubr.bf16.mxu0 0
  %622 = vmatmul.mubr.bf16.gmra.mxu0 %v347
  %v623 = vpop.f32.mrf.mxu0
  %v624 = vadd.f32 %v88, %v623
  %v625 = vpop.f32.mrf.mxu0
  %v626 = vpop.f32.mrf.mxu0
  %v627 = vadd.f32 %v88, %v626
  %v628 = vpop.f32.mrf.mxu0
  %629 = vmatprep.mubr.bf16.mxu0 0
  %630 = vmatmul.mubr.bf16.gmra.mxu0 %v350
  %v631 = vpop.f32.mrf.mxu0
  %v632 = vadd.f32 %v88, %v631
  %v633 = vpop.f32.mrf.mxu0
  %v634 = vpop.f32.mrf.mxu0
  %v635 = vadd.f32 %v88, %v634
  %v636 = vpop.f32.mrf.mxu0
  %637 = vmatprep.mubr.bf16.mxu0 0
  %638 = vmatmul.mubr.bf16.gmra.mxu0 %v353
  %v639 = vpop.f32.mrf.mxu0
  %v640 = vadd.f32 %v88, %v639
  %v641 = vpop.f32.mrf.mxu0
  %v642 = vpop.f32.mrf.mxu0
  %v643 = vadd.f32 %v88, %v642
  %v644 = vpop.f32.mrf.mxu0
  %645 = vmatprep.mubr.bf16.mxu0 0
  %646 = vmatmul.mubr.bf16.gmra.mxu0 %v356
  %v647 = vpop.f32.mrf.mxu0
  %v648 = vadd.f32 %v88, %v647
  %v649 = vpop.f32.mrf.mxu0
  %v650 = vpop.f32.mrf.mxu0
  %v651 = vadd.f32 %v88, %v650
  %v652 = vpop.f32.mrf.mxu0
  %653 = vdwg.mxu0
  %v654 = vmax.f32 %v400, 0.0
  %v655 = vmax.f32 %v403, 0.0
  %v656 = vmax.f32 %v408, 0.0
  %v657 = vmax.f32 %v411, 0.0
  %v658 = vmax.f32 %v416, 0.0
  %v659 = vmax.f32 %v419, 0.0
  %v660 = vmax.f32 %v424, 0.0
  %v661 = vmax.f32 %v427, 0.0
  %v662 = vmax.f32 %v432, 0.0
  %v663 = vmax.f32 %v435, 0.0
  %v664 = vmax.f32 %v440, 0.0
  %v665 = vmax.f32 %v443, 0.0
  %v666 = vmax.f32 %v448, 0.0
  %v667 = vmax.f32 %v451, 0.0
  %v668 = vmax.f32 %v456, 0.0
  %v669 = vmax.f32 %v459, 0.0
  %v670 = vmax.f32 %v464, 0.0
  %v671 = vmax.f32 %v467, 0.0
  %v672 = vmax.f32 %v472, 0.0
  %v673 = vmax.f32 %v475, 0.0
  %v674 = vmax.f32 %v480, 0.0
  %v675 = vmax.f32 %v483, 0.0
  %v676 = vmax.f32 %v488, 0.0
  %v677 = vmax.f32 %v491, 0.0
  %v678 = vmax.f32 %v496, 0.0
  %v679 = vmax.f32 %v499, 0.0
  %v680 = vmax.f32 %v504, 0.0
  %v681 = vmax.f32 %v507, 0.0
  %v682 = vmax.f32 %v512, 0.0
  %v683 = vmax.f32 %v515, 0.0
  %v684 = vmax.f32 %v520, 0.0
  %v685 = vmax.f32 %v523, 0.0
  %v686 = vmax.f32 %v528, 0.0
  %v687 = vmax.f32 %v531, 0.0
  %v688 = vmax.f32 %v536, 0.0
  %v689 = vmax.f32 %v539, 0.0
  %v690 = vmax.f32 %v544, 0.0
  %v691 = vmax.f32 %v547, 0.0
  %v692 = vmax.f32 %v552, 0.0
  %v693 = vmax.f32 %v555, 0.0
  %v694 = vmax.f32 %v560, 0.0
  %v695 = vmax.f32 %v563, 0.0
  %v696 = vmax.f32 %v568, 0.0
  %v697 = vmax.f32 %v571, 0.0
  %v698 = vmax.f32 %v576, 0.0
  %v699 = vmax.f32 %v579, 0.0
  %v700 = vmax.f32 %v584, 0.0
  %v701 = vmax.f32 %v587, 0.0
  %v702 = vmax.f32 %v592, 0.0
  %v703 = vmax.f32 %v595, 0.0
  %v704 = vmax.f32 %v600, 0.0
  %v705 = vmax.f32 %v603, 0.0
  %v706 = vmax.f32 %v608, 0.0
  %v707 = vmax.f32 %v611, 0.0
  %v708 = vmax.f32 %v616, 0.0
  %v709 = vmax.f32 %v619, 0.0
  %v710 = vmax.f32 %v624, 0.0
  %v711 = vmax.f32 %v627, 0.0
  %v712 = vmax.f32 %v632, 0.0
  %v713 = vmax.f32 %v635, 0.0
  %v714 = vmax.f32 %v640, 0.0
  %v715 = vmax.f32 %v643, 0.0
  %v716 = vmax.f32 %v648, 0.0
  %v717 = vmax.f32 %v651, 0.0
  %v718 = vpack.c.bf16 %v655, %v654
  %v719 = vpack.c.bf16 %v657, %v656
  %v720 = vpack.c.bf16 %v659, %v658
  %v721 = vpack.c.bf16 %v661, %v660
  %v722 = vpack.c.bf16 %v663, %v662
  %v723 = vpack.c.bf16 %v665, %v664
  %v724 = vpack.c.bf16 %v667, %v666
  %v725 = vpack.c.bf16 %v669, %v668
  %v726 = vpack.c.bf16 %v671, %v670
  %v727 = vpack.c.bf16 %v673, %v672
  %v728 = vpack.c.bf16 %v675, %v674
  %v729 = vpack.c.bf16 %v677, %v676
  %v730 = vpack.c.bf16 %v679, %v678
  %v731 = vpack.c.bf16 %v681, %v680
  %v732 = vpack.c.bf16 %v683, %v682
  %v733 = vpack.c.bf16 %v685, %v684
  %v734 = vpack.c.bf16 %v687, %v686
  %v735 = vpack.c.bf16 %v689, %v688
  %v736 = vpack.c.bf16 %v691, %v690
  %v737 = vpack.c.bf16 %v693, %v692
  %v738 = vpack.c.bf16 %v695, %v694
  %v739 = vpack.c.bf16 %v697, %v696
  %v740 = vpack.c.bf16 %v699, %v698
  %v741 = vpack.c.bf16 %v701, %v700
  %v742 = vpack.c.bf16 %v703, %v702
  %v743 = vpack.c.bf16 %v705, %v704
  %v744 = vpack.c.bf16 %v707, %v706
  %v745 = vpack.c.bf16 %v709, %v708
  %v746 = vpack.c.bf16 %v711, %v710
  %v747 = vpack.c.bf16 %v713, %v712
  %v748 = vpack.c.bf16 %v715, %v714
  %v749 = vpack.c.bf16 %v717, %v716
  %v782 = vunpack.c.l.b16 %v718
  %v783 = vunpack.c.h.b16 %v718
  %v784 = vunpack.c.l.b16 %v719
  %v785 = vunpack.c.h.b16 %v719
  %v786 = vunpack.c.l.b16 %v720
  %v787 = vunpack.c.h.b16 %v720
  %v788 = vunpack.c.l.b16 %v721
  %v789 = vunpack.c.h.b16 %v721
  %v790 = vunpack.c.l.b16 %v722
  %v791 = vunpack.c.h.b16 %v722
  %v792 = vunpack.c.l.b16 %v723
  %v793 = vunpack.c.h.b16 %v723
  %v794 = vunpack.c.l.b16 %v724
  %v795 = vunpack.c.h.b16 %v724
  %v796 = vunpack.c.l.b16 %v725
  %v797 = vunpack.c.h.b16 %v725
  %v798 = vunpack.c.l.b16 %v726
  %v799 = vunpack.c.h.b16 %v726
  %v800 = vunpack.c.l.b16 %v727
  %v801 = vunpack.c.h.b16 %v727
  %v802 = vunpack.c.l.b16 %v728
  %v803 = vunpack.c.h.b16 %v728
  %v804 = vunpack.c.l.b16 %v729
  %v805 = vunpack.c.h.b16 %v729
  %v806 = vunpack.c.l.b16 %v730
  %v807 = vunpack.c.h.b16 %v730
  %v808 = vunpack.c.l.b16 %v731
  %v809 = vunpack.c.h.b16 %v731
  %v810 = vunpack.c.l.b16 %v732
  %v811 = vunpack.c.h.b16 %v732
  %v812 = vunpack.c.l.b16 %v733
  %v813 = vunpack.c.h.b16 %v733
  %v814 = vunpack.c.l.b16 %v734
  %v815 = vunpack.c.h.b16 %v734
  %v816 = vunpack.c.l.b16 %v735
  %v817 = vunpack.c.h.b16 %v735
  %v818 = vunpack.c.l.b16 %v736
  %v819 = vunpack.c.h.b16 %v736
  %v820 = vunpack.c.l.b16 %v737
  %v821 = vunpack.c.h.b16 %v737
  %v822 = vunpack.c.l.b16 %v738
  %v823 = vunpack.c.h.b16 %v738
  %v824 = vunpack.c.l.b16 %v739
  %v825 = vunpack.c.h.b16 %v739
  %v826 = vunpack.c.l.b16 %v740
  %v827 = vunpack.c.h.b16 %v740
  %v828 = vunpack.c.l.b16 %v741
  %v829 = vunpack.c.h.b16 %v741
  %v830 = vunpack.c.l.b16 %v742
  %v831 = vunpack.c.h.b16 %v742
  %v832 = vunpack.c.l.b16 %v743
  %v833 = vunpack.c.h.b16 %v743
  %v834 = vunpack.c.l.b16 %v744
  %v835 = vunpack.c.h.b16 %v744
  %v836 = vunpack.c.l.b16 %v745
  %v837 = vunpack.c.h.b16 %v745
  %v838 = vunpack.c.l.b16 %v746
  %v839 = vunpack.c.h.b16 %v746
  %v840 = vunpack.c.l.b16 %v747
  %v841 = vunpack.c.h.b16 %v747
  %v842 = vunpack.c.l.b16 %v748
  %v843 = vunpack.c.h.b16 %v748
  %v844 = vunpack.c.l.b16 %v749
  %v845 = vunpack.c.h.b16 %v749
  %v846 = vpack.c.b16 %v782, %v782
  %v847 = vpack.c.b16 %v783, %v783
  %v848 = vpack.c.b16 %v784, %v784
  %v849 = vpack.c.b16 %v785, %v785
  %v850 = vpack.c.b16 %v786, %v786
  %v851 = vpack.c.b16 %v787, %v787
  %v852 = vpack.c.b16 %v788, %v788
  %v853 = vpack.c.b16 %v789, %v789
  %v854 = vpack.c.b16 %v790, %v790
  %v855 = vpack.c.b16 %v791, %v791
  %v856 = vpack.c.b16 %v792, %v792
  %v857 = vpack.c.b16 %v793, %v793
  %v858 = vpack.c.b16 %v794, %v794
  %v859 = vpack.c.b16 %v795, %v795
  %v860 = vpack.c.b16 %v796, %v796
  %v861 = vpack.c.b16 %v797, %v797
  %v862 = vpack.c.b16 %v798, %v798
  %v863 = vpack.c.b16 %v799, %v799
  %v864 = vpack.c.b16 %v800, %v800
  %v865 = vpack.c.b16 %v801, %v801
  %v866 = vpack.c.b16 %v802, %v802
  %v867 = vpack.c.b16 %v803, %v803
  %v868 = vpack.c.b16 %v804, %v804
  %v869 = vpack.c.b16 %v805, %v805
  %v870 = vpack.c.b16 %v806, %v806
  %v871 = vpack.c.b16 %v807, %v807
  %v872 = vpack.c.b16 %v808, %v808
  %v873 = vpack.c.b16 %v809, %v809
  %v874 = vpack.c.b16 %v810, %v810
  %v875 = vpack.c.b16 %v811, %v811
  %v876 = vpack.c.b16 %v812, %v812
  %v877 = vpack.c.b16 %v813, %v813
  %v878 = vpack.c.b16 %v814, %v814
  %v879 = vpack.c.b16 %v815, %v815
  %v880 = vpack.c.b16 %v816, %v816
  %v881 = vpack.c.b16 %v817, %v817
  %v882 = vpack.c.b16 %v818, %v818
  %v883 = vpack.c.b16 %v819, %v819
  %v884 = vpack.c.b16 %v820, %v820
  %v885 = vpack.c.b16 %v821, %v821
  %v886 = vpack.c.b16 %v822, %v822
  %v887 = vpack.c.b16 %v823, %v823
  %v888 = vpack.c.b16 %v824, %v824
  %v889 = vpack.c.b16 %v825, %v825
  %v890 = vpack.c.b16 %v826, %v826
  %v891 = vpack.c.b16 %v827, %v827
  %v892 = vpack.c.b16 %v828, %v828
  %v893 = vpack.c.b16 %v829, %v829
  %v894 = vpack.c.b16 %v830, %v830
  %v895 = vpack.c.b16 %v831, %v831
  %v896 = vpack.c.b16 %v832, %v832
  %v897 = vpack.c.b16 %v833, %v833
  %v898 = vpack.c.b16 %v834, %v834
  %v899 = vpack.c.b16 %v835, %v835
  %v900 = vpack.c.b16 %v836, %v836
  %v901 = vpack.c.b16 %v837, %v837
  %v902 = vpack.c.b16 %v838, %v838
  %v903 = vpack.c.b16 %v839, %v839
  %v904 = vpack.c.b16 %v840, %v840
  %v905 = vpack.c.b16 %v841, %v841
  %v906 = vpack.c.b16 %v842, %v842
  %v907 = vpack.c.b16 %v843, %v843
  %v908 = vpack.c.b16 %v844, %v844
  %v909 = vpack.c.b16 %v845, %v845
  %974 = vst [vmem:[%s3] sm:$0xf] %v846
  %975 = vst [vmem:[%s3 + $0x4] sm:$0xf] %v847
  %976 = vst [vmem:[%s3 + $0x8] sm:$0xf] %v848
  %977 = vst [vmem:[%s3 + $0xc] sm:$0xf] %v849
  %978 = vst [vmem:[%s3 + $0x10] sm:$0xf] %v850
  %979 = vst [vmem:[%s3 + $0x14] sm:$0xf] %v851
  %980 = vst [vmem:[%s3 + $0x18] sm:$0xf] %v852
  %981 = vst [vmem:[%s3 + $0x1c] sm:$0xf] %v853
  %982 = vst [vmem:[%s3 + $0x20] sm:$0xf] %v854
  %983 = vst [vmem:[%s3 + $0x24] sm:$0xf] %v855
  %984 = vst [vmem:[%s3 + $0x28] sm:$0xf] %v856
  %985 = vst [vmem:[%s3 + $0x2c] sm:$0xf] %v857
  %986 = vst [vmem:[%s3 + $0x30] sm:$0xf] %v858
  %987 = vst [vmem:[%s3 + $0x34] sm:$0xf] %v859
  %988 = vst [vmem:[%s3 + $0x38] sm:$0xf] %v860
  %989 = vst [vmem:[%s3 + $0x3c] sm:$0xf] %v861
  %990 = vst [vmem:[%s3 + $0x40] sm:$0xf] %v862
  %991 = vst [vmem:[%s3 + $0x44] sm:$0xf] %v863
  %992 = vst [vmem:[%s3 + $0x48] sm:$0xf] %v864
  %993 = vst [vmem:[%s3 + $0x4c] sm:$0xf] %v865
  %994 = vst [vmem:[%s3 + $0x50] sm:$0xf] %v866
  %995 = vst [vmem:[%s3 + $0x54] sm:$0xf] %v867
  %996 = vst [vmem:[%s3 + $0x58] sm:$0xf] %v868
  %997 = vst [vmem:[%s3 + $0x5c] sm:$0xf] %v869
  %998 = vst [vmem:[%s3 + $0x60] sm:$0xf] %v870
  %999 = vst [vmem:[%s3 + $0x64] sm:$0xf] %v871
  %1000 = vst [vmem:[%s3 + $0x68] sm:$0xf] %v872
  %1001 = vst [vmem:[%s3 + $0x6c] sm:$0xf] %v873
  %1002 = vst [vmem:[%s3 + $0x70] sm:$0xf] %v874
  %1003 = vst [vmem:[%s3 + $0x74] sm:$0xf] %v875
  %1004 = vst [vmem:[%s3 + $0x78] sm:$0xf] %v876
  %1005 = vst [vmem:[%s3 + $0x7c] sm:$0xf] %v877
  %1006 = vst [vmem:[%s3 + $0x80] sm:$0xf] %v878
  %1007 = vst [vmem:[%s3 + $0x84] sm:$0xf] %v879
  %1008 = vst [vmem:[%s3 + $0x88] sm:$0xf] %v880
  %1009 = vst [vmem:[%s3 + $0x8c] sm:$0xf] %v881
  %1010 = vst [vmem:[%s3 + $0x90] sm:$0xf] %v882
  %1011 = vst [vmem:[%s3 + $0x94] sm:$0xf] %v883
  %1012 = vst [vmem:[%s3 + $0x98] sm:$0xf] %v884
  %1013 = vst [vmem:[%s3 + $0x9c] sm:$0xf] %v885
  %1014 = vst [vmem:[%s3 + $0xa0] sm:$0xf] %v886
  %1015 = vst [vmem:[%s3 + $0xa4] sm:$0xf] %v887
  %1016 = vst [vmem:[%s3 + $0xa8] sm:$0xf] %v888
  %1017 = vst [vmem:[%s3 + $0xac] sm:$0xf] %v889
  %1018 = vst [vmem:[%s3 + $0xb0] sm:$0xf] %v890
  %1019 = vst [vmem:[%s3 + $0xb4] sm:$0xf] %v891
  %1020 = vst [vmem:[%s3 + $0xb8] sm:$0xf] %v892
  %1021 = vst [vmem:[%s3 + $0xbc] sm:$0xf] %v893
  %1022 = vst [vmem:[%s3 + $0xc0] sm:$0xf] %v894
  %1023 = vst [vmem:[%s3 + $0xc4] sm:$0xf] %v895
  %1024 = vst [vmem:[%s3 + $0xc8] sm:$0xf] %v896
  %1025 = vst [vmem:[%s3 + $0xcc] sm:$0xf] %v897
  %1026 = vst [vmem:[%s3 + $0xd0] sm:$0xf] %v898
  %1027 = vst [vmem:[%s3 + $0xd4] sm:$0xf] %v899
  %1028 = vst [vmem:[%s3 + $0xd8] sm:$0xf] %v900
  %1029 = vst [vmem:[%s3 + $0xdc] sm:$0xf] %v901
  %1030 = vst [vmem:[%s3 + $0xe0] sm:$0xf] %v902
  %1031 = vst [vmem:[%s3 + $0xe4] sm:$0xf] %v903
  %1032 = vst [vmem:[%s3 + $0xe8] sm:$0xf] %v904
  %1033 = vst [vmem:[%s3 + $0xec] sm:$0xf] %v905
  %1034 = vst [vmem:[%s3 + $0xf0] sm:$0xf] %v906
  %1035 = vst [vmem:[%s3 + $0xf4] sm:$0xf] %v907
  %1036 = vst [vmem:[%s3 + $0xf8] sm:$0xf] %v908
  %1037 = vst [vmem:[%s3 + $0xfc] sm:$0xf] %v909
  // Predicated region
  $region14: #{vqcae_forward.9} parent=0 // pred_check
    _
  $region15: #{vqcae_forward.9} parent=0 // pred_check_branch
    %1039 = sbr.rel (0) target = $region17
  $region16: #{vqcae_forward.9} parent=0 // pred_region
    _
  $region17: #{vqcae_forward.9} parent=0 // pred_fallthru
    _
  // Predicated region
  $region18: #{vqcae_forward.9} parent=0 // pred_check
    _
  $region19: #{vqcae_forward.9} parent=0 // pred_check_branch
    %1041 = sbr.rel (0) target = $region21
  $region20: #{vqcae_forward.9} parent=0 // pred_region
    _
  $region21: #{vqcae_forward.9} parent=0 // pred_fallthru
    _

// kernel: vqcae_forward.10
$region0: #{vqcae_forward.10}
  #allocation0 [shape = 'u32[]', space=smem, size = 0x4, offset = 0x4, fixed_abs, tag = 'smem constant byte address 0x4 - core index']
  #allocation1 [shape = 'u32[144,128]{1,0:T(1,128)}', space=vmem, size = 0x12000, scoped, tag = 'internal scratch']
  %s0 = inlined_call_operand.vmem [shape: bf16[128,144], index: 0, kind: input, shape index: {}]
  %s1 = inlined_call_operand.vmem [shape: bf16[144,32], index: 1, kind: input, shape index: {}]
  %s2 = inlined_call_operand.vmem [shape: f32[1,32], index: 2, kind: input, shape index: {}]
  %s3 = inlined_call_operand.vmem [shape: bf16[128,32], index: 3, kind: output, shape index: {}]
  %s4 = sld [smem:[#allocation0]]
  $region22: #{vqcae_forward.10} parent=0
    _
  %s6 = ssub.s32 1, %s4
  %s7 = scalar_select 0, %s6, %s4
  // Predicated region
  $region2: #{vqcae_forward.10} parent=0 // pred_check
    _
  $region3: #{vqcae_forward.10} parent=0 // pred_check_branch
    %9 = sbr.rel (0) target = $region5
  $region4: #{vqcae_forward.10} parent=0 // pred_region
    _
  $region5: #{vqcae_forward.10} parent=0 // pred_fallthru
    _
  // Predicated region
  $region6: #{vqcae_forward.10} parent=0 // pred_check
    _
  $region7: #{vqcae_forward.10} parent=0 // pred_check_branch
    %11 = sbr.rel (0) target = $region9
  $region8: #{vqcae_forward.10} parent=0 // pred_region
    _
  $region9: #{vqcae_forward.10} parent=0 // pred_fallthru
    _
  // Predicated region
  $region10: #{vqcae_forward.10} parent=0 // pred_check
    _
  $region11: #{vqcae_forward.10} parent=0 // pred_check_branch
    %13 = sbr.rel (0) target = $region13
  $region12: #{vqcae_forward.10} parent=0 // pred_region
    _
  $region13: #{vqcae_forward.10} parent=0 // pred_fallthru
    _
  %v15 = vld [vmem:[%s0] sm:$0xff]
  %v16 = vld [vmem:[%s0 + $0x8] sm:$0xff]
  %v17 = vld [vmem:[%s0 + $0x10] sm:$0xff]
  %v18 = vld [vmem:[%s0 + $0x18] sm:$0xff]
  %v19 = vld [vmem:[%s0 + $0x20] sm:$0xff]
  %v20 = vld [vmem:[%s0 + $0x28] sm:$0xff]
  %v21 = vld [vmem:[%s0 + $0x30] sm:$0xff]
  %v22 = vld [vmem:[%s0 + $0x38] sm:$0xff]
  %v23 = vld [vmem:[%s0 + $0x40] sm:$0xff]
  %v24 = vld [vmem:[%s0 + $0x48] sm:$0xff]
  %v25 = vld [vmem:[%s0 + $0x50] sm:$0xff]
  %v26 = vld [vmem:[%s0 + $0x58] sm:$0xff]
  %v27 = vld [vmem:[%s0 + $0x60] sm:$0xff]
  %v28 = vld [vmem:[%s0 + $0x68] sm:$0xff]
  %v29 = vld [vmem:[%s0 + $0x70] sm:$0xff]
  %v30 = vld [vmem:[%s0 + $0x78] sm:$0xff]
  %v31 = vld [vmem:[%s1] sm:$0xf]
  %v32 = vld [vmem:[%s1 + $0x4] sm:$0xf]
  %v33 = vld [vmem:[%s1 + $0x8] sm:$0xf]
  %v34 = vld [vmem:[%s1 + $0xc] sm:$0xf]
  %v35 = vld [vmem:[%s1 + $0x10] sm:$0xf]
  %v36 = vld [vmem:[%s1 + $0x14] sm:$0xf]
  %v37 = vld [vmem:[%s1 + $0x18] sm:$0xf]
  %v38 = vld [vmem:[%s1 + $0x1c] sm:$0xf]
  %v39 = vld [vmem:[%s1 + $0x20] sm:$0xf]
  %v40 = vld [vmem:[%s1 + $0x24] sm:$0xf]
  %v41 = vld [vmem:[%s1 + $0x28] sm:$0xf]
  %v42 = vld [vmem:[%s1 + $0x2c] sm:$0xf]
  %v43 = vld [vmem:[%s1 + $0x30] sm:$0xf]
  %v44 = vld [vmem:[%s1 + $0x34] sm:$0xf]
  %v45 = vld [vmem:[%s1 + $0x38] sm:$0xf]
  %v46 = vld [vmem:[%s1 + $0x3c] sm:$0xf]
  %v47 = vld [vmem:[%s1 + $0x40] sm:$0xf]
  %v48 = vld [vmem:[%s1 + $0x44] sm:$0xf]
  %v49 = vld [vmem:[%s2] sm:$0x1]
  %v51 = vlaneseq
  %v52 = vshrl.u32 %v51, 7
  %v53 = vsub.s32 0, %v52
  %v54 = vrot.slane %v49, %v53
  %v72 = vunpack.c.l.b16 %v15
  %v73 = vunpack.c.h.b16 %v15
  %v74 = vunpack.c.l.b16 %v16
  %v75 = vunpack.c.h.b16 %v16
  %v76 = vunpack.c.l.b16 %v17
  %v77 = vunpack.c.h.b16 %v17
  %v78 = vunpack.c.l.b16 %v18
  %v79 = vunpack.c.h.b16 %v18
  %v80 = vunpack.c.l.b16 %v19
  %v81 = vunpack.c.h.b16 %v19
  %v82 = vunpack.c.l.b16 %v20
  %v83 = vunpack.c.h.b16 %v20
  %v84 = vunpack.c.l.b16 %v21
  %v85 = vunpack.c.h.b16 %v21
  %v86 = vunpack.c.l.b16 %v22
  %v87 = vunpack.c.h.b16 %v22
  %v88 = vunpack.c.l.b16 %v23
  %v89 = vunpack.c.h.b16 %v23
  %v90 = vunpack.c.l.b16 %v24
  %v91 = vunpack.c.h.b16 %v24
  %v92 = vunpack.c.l.b16 %v25
  %v93 = vunpack.c.h.b16 %v25
  %v94 = vunpack.c.l.b16 %v26
  %v95 = vunpack.c.h.b16 %v26
  %v96 = vunpack.c.l.b16 %v27
  %v97 = vunpack.c.h.b16 %v27
  %v98 = vunpack.c.l.b16 %v28
  %v99 = vunpack.c.h.b16 %v28
  %v100 = vunpack.c.l.b16 %v29
  %v101 = vunpack.c.h.b16 %v29
  %v102 = vunpack.c.l.b16 %v30
  %v103 = vunpack.c.h.b16 %v30
  %v104 = vpack.c.b16 %v74, %v72
  %v105 = vpack.c.b16 %v75, %v73
  %v106 = vpack.c.b16 %v78, %v76
  %v107 = vpack.c.b16 %v79, %v77
  %v108 = vpack.c.b16 %v82, %v80
  %v109 = vpack.c.b16 %v83, %v81
  %v110 = vpack.c.b16 %v86, %v84
  %v111 = vpack.c.b16 %v87, %v85
  %v112 = vpack.c.b16 %v90, %v88
  %v113 = vpack.c.b16 %v91, %v89
  %v114 = vpack.c.b16 %v94, %v92
  %v115 = vpack.c.b16 %v95, %v93
  %v116 = vpack.c.b16 %v98, %v96
  %v117 = vpack.c.b16 %v99, %v97
  %v118 = vpack.c.b16 %v102, %v100
  %v119 = vpack.c.b16 %v103, %v101
  %v146 = vunpack.c.l.b16 %v31
  %v147 = vunpack.c.l.b16 %v32
  %v148 = vunpack.c.l.b16 %v33
  %v149 = vunpack.c.l.b16 %v34
  %v150 = vunpack.c.l.b16 %v35
  %v151 = vunpack.c.l.b16 %v36
  %v152 = vunpack.c.l.b16 %v37
  %v153 = vunpack.c.l.b16 %v38
  %v154 = vunpack.c.l.b16 %v39
  %v155 = vunpack.c.l.b16 %v40
  %v156 = vunpack.c.l.b16 %v41
  %v157 = vunpack.c.l.b16 %v42
  %v158 = vunpack.c.l.b16 %v43
  %v159 = vunpack.c.l.b16 %v44
  %v160 = vunpack.c.l.b16 %v45
  %v161 = vunpack.c.l.b16 %v46
  %v162 = vunpack.c.l.b16 %v47
  %v163 = vunpack.c.l.b16 %v48
  %v164 = vpack.c.b16 %v147, %v146
  %v165 = vpack.c.b16 %v149, %v148
  %v166 = vpack.c.b16 %v151, %v150
  %v167 = vpack.c.b16 %v153, %v152
  %v168 = vpack.c.b16 %v155, %v154
  %v169 = vpack.c.b16 %v157, %v156
  %v170 = vpack.c.b16 %v159, %v158
  %v171 = vpack.c.b16 %v161, %v160
  %v172 = vpack.c.b16 %v163, %v162
  %vm182 = vcmask 130048
  %v184 = vsel %vm182, %v105, 0
  %v187 = vsel %vm182, %v107, 0
  %v190 = vsel %vm182, %v109, 0
  %v193 = vsel %vm182, %v111, 0
  %v196 = vsel %vm182, %v113, 0
  %v199 = vsel %vm182, %v115, 0
  %v202 = vsel %vm182, %v117, 0
  %v205 = vsel %vm182, %v119, 0
  %207 = vmatprep.subr.bf16.mxu0 0
  %208 = vmatpush1.bf16.msra.mxu0 %v171
  %209 = vmatprep.subr.bf16.mxu0 0
  %210 = vmatpush1.bf16.msra.mxu0 %v170
  %211 = vmatprep.subr.bf16.mxu0 0
  %212 = vmatpush1.bf16.msra.mxu0 %v169
  %213 = vmatprep.subr.bf16.mxu0 0
  %214 = vmatpush1.bf16.msra.mxu0 %v168
  %215 = vmatprep.subr.bf16.mxu0 0
  %216 = vmatpush1.bf16.msra.mxu0 %v167
  %217 = vmatprep.subr.bf16.mxu0 0
  %218 = vmatpush1.bf16.msra.mxu0 %v166
  %219 = vmatprep.subr.bf16.mxu0 0
  %220 = vmatpush1.bf16.msra.mxu0 %v165
  %221 = vmatprep.subr.bf16.mxu0 0
  %222 = vmatpush1.bf16.msra.mxu0 %v164
  %223 = vmatprep.subr.bf16.mxu0 0
  %224 = vmatpush2.bf16.msra.mxu0 0
  %225 = vmatprep.subr.bf16.mxu0 0
  %226 = vmatpush2.bf16.msra.mxu0 0
  %227 = vmatprep.subr.bf16.mxu0 0
  %228 = vmatpush2.bf16.msra.mxu0 0
  %229 = vmatprep.subr.bf16.mxu0 0
  %230 = vmatpush2.bf16.msra.mxu0 0
  %231 = vmatprep.subr.bf16.mxu0 0
  %232 = vmatpush2.bf16.msra.mxu0 0
  %233 = vmatprep.subr.bf16.mxu0 0
  %234 = vmatpush2.bf16.msra.mxu0 0
  %235 = vmatprep.subr.bf16.mxu0 0
  %236 = vmatpush2.bf16.msra.mxu0 0
  %237 = vmatprep.subr.bf16.mxu0 0
  %238 = vmatpush2.bf16.msra.mxu0 %v172
  %239 = vmatprep.mubr.bf16.mxu0 %v184
  %240 = vmatmul.mubr.bf16.gmra.mxu0 %v104
  %v241 = vpop.f32.mrf.mxu0
  %v242 = vadd.f32 %v54, %v241
  %v243 = vpop.f32.mrf.mxu0
  %v244 = vpop.f32.mrf.mxu0
  %v245 = vadd.f32 %v54, %v244
  %v246 = vpop.f32.mrf.mxu0
  %247 = vmatprep.mubr.bf16.mxu0 %v187
  %248 = vmatmul.mubr.bf16.gmra.mxu0 %v106
  %v249 = vpop.f32.mrf.mxu0
  %v250 = vadd.f32 %v54, %v249
  %v251 = vpop.f32.mrf.mxu0
  %v252 = vpop.f32.mrf.mxu0
  %v253 = vadd.f32 %v54, %v252
  %v254 = vpop.f32.mrf.mxu0
  %255 = vmatprep.mubr.bf16.mxu0 %v190
  %256 = vmatmul.mubr.bf16.gmra.mxu0 %v108
  %v257 = vpop.f32.mrf.mxu0
  %v258 = vadd.f32 %v54, %v257
  %v259 = vpop.f32.mrf.mxu0
  %v260 = vpop.f32.mrf.mxu0
  %v261 = vadd.f32 %v54, %v260
  %v262 = vpop.f32.mrf.mxu0
  %263 = vmatprep.mubr.bf16.mxu0 %v193
  %264 = vmatmul.mubr.bf16.gmra.mxu0 %v110
  %v265 = vpop.f32.mrf.mxu0
  %v266 = vadd.f32 %v54, %v265
  %v267 = vpop.f32.mrf.mxu0
  %v268 = vpop.f32.mrf.mxu0
  %v269 = vadd.f32 %v54, %v268
  %v270 = vpop.f32.mrf.mxu0
  %271 = vmatprep.mubr.bf16.mxu0 %v196
  %272 = vmatmul.mubr.bf16.gmra.mxu0 %v112
  %v273 = vpop.f32.mrf.mxu0
  %v274 = vadd.f32 %v54, %v273
  %v275 = vpop.f32.mrf.mxu0
  %v276 = vpop.f32.mrf.mxu0
  %v277 = vadd.f32 %v54, %v276
  %v278 = vpop.f32.mrf.mxu0
  %279 = vmatprep.mubr.bf16.mxu0 %v199
  %280 = vmatmul.mubr.bf16.gmra.mxu0 %v114
  %v281 = vpop.f32.mrf.mxu0
  %v282 = vadd.f32 %v54, %v281
  %v283 = vpop.f32.mrf.mxu0
  %v284 = vpop.f32.mrf.mxu0
  %v285 = vadd.f32 %v54, %v284
  %v286 = vpop.f32.mrf.mxu0
  %287 = vmatprep.mubr.bf16.mxu0 %v202
  %288 = vmatmul.mubr.bf16.gmra.mxu0 %v116
  %v289 = vpop.f32.mrf.mxu0
  %v290 = vadd.f32 %v54, %v289
  %v291 = vpop.f32.mrf.mxu0
  %v292 = vpop.f32.mrf.mxu0
  %v293 = vadd.f32 %v54, %v292
  %v294 = vpop.f32.mrf.mxu0
  %295 = vmatprep.mubr.bf16.mxu0 %v205
  %296 = vmatmul.mubr.bf16.gmra.mxu0 %v118
  %v297 = vpop.f32.mrf.mxu0
  %v298 = vadd.f32 %v54, %v297
  %v299 = vpop.f32.mrf.mxu0
  %v300 = vpop.f32.mrf.mxu0
  %v301 = vadd.f32 %v54, %v300
  %v302 = vpop.f32.mrf.mxu0
  %303 = vdwg.mxu0
  %v304 = vmax.f32 %v242, 0.0
  %v305 = vmax.f32 %v245, 0.0
  %v306 = vmax.f32 %v250, 0.0
  %v307 = vmax.f32 %v253, 0.0
  %v308 = vmax.f32 %v258, 0.0
  %v309 = vmax.f32 %v261, 0.0
  %v310 = vmax.f32 %v266, 0.0
  %v311 = vmax.f32 %v269, 0.0
  %v312 = vmax.f32 %v274, 0.0
  %v313 = vmax.f32 %v277, 0.0
  %v314 = vmax.f32 %v282, 0.0
  %v315 = vmax.f32 %v285, 0.0
  %v316 = vmax.f32 %v290, 0.0
  %v317 = vmax.f32 %v293, 0.0
  %v318 = vmax.f32 %v298, 0.0
  %v319 = vmax.f32 %v301, 0.0
  %v320 = vpack.c.bf16 %v305, %v304
  %v321 = vpack.c.bf16 %v307, %v306
  %v322 = vpack.c.bf16 %v309, %v308
  %v323 = vpack.c.bf16 %v311, %v310
  %v324 = vpack.c.bf16 %v313, %v312
  %v325 = vpack.c.bf16 %v315, %v314
  %v326 = vpack.c.bf16 %v317, %v316
  %v327 = vpack.c.bf16 %v319, %v318
  %v336 = vunpack.c.l.b16 %v320
  %v337 = vunpack.c.h.b16 %v320
  %v338 = vunpack.c.l.b16 %v321
  %v339 = vunpack.c.h.b16 %v321
  %v340 = vunpack.c.l.b16 %v322
  %v341 = vunpack.c.h.b16 %v322
  %v342 = vunpack.c.l.b16 %v323
  %v343 = vunpack.c.h.b16 %v323
  %v344 = vunpack.c.l.b16 %v324
  %v345 = vunpack.c.h.b16 %v324
  %v346 = vunpack.c.l.b16 %v325
  %v347 = vunpack.c.h.b16 %v325
  %v348 = vunpack.c.l.b16 %v326
  %v349 = vunpack.c.h.b16 %v326
  %v350 = vunpack.c.l.b16 %v327
  %v351 = vunpack.c.h.b16 %v327
  %v352 = vpack.c.b16 %v336, %v336
  %v353 = vpack.c.b16 %v337, %v337
  %v354 = vpack.c.b16 %v338, %v338
  %v355 = vpack.c.b16 %v339, %v339
  %v356 = vpack.c.b16 %v340, %v340
  %v357 = vpack.c.b16 %v341, %v341
  %v358 = vpack.c.b16 %v342, %v342
  %v359 = vpack.c.b16 %v343, %v343
  %v360 = vpack.c.b16 %v344, %v344
  %v361 = vpack.c.b16 %v345, %v345
  %v362 = vpack.c.b16 %v346, %v346
  %v363 = vpack.c.b16 %v347, %v347
  %v364 = vpack.c.b16 %v348, %v348
  %v365 = vpack.c.b16 %v349, %v349
  %v366 = vpack.c.b16 %v350, %v350
  %v367 = vpack.c.b16 %v351, %v351
  %vm384 = vcmask 257024
  %385 = vst.msk [vmem:[%s3] sm:$0xf] %vm384, %v352
  %386 = vst.msk [vmem:[%s3 + $0x4] sm:$0xf] %vm384, %v353
  %387 = vst.msk [vmem:[%s3 + $0x8] sm:$0xf] %vm384, %v354
  %388 = vst.msk [vmem:[%s3 + $0xc] sm:$0xf] %vm384, %v355
  %389 = vst.msk [vmem:[%s3 + $0x10] sm:$0xf] %vm384, %v356
  %390 = vst.msk [vmem:[%s3 + $0x14] sm:$0xf] %vm384, %v357
  %391 = vst.msk [vmem:[%s3 + $0x18] sm:$0xf] %vm384, %v358
  %392 = vst.msk [vmem:[%s3 + $0x1c] sm:$0xf] %vm384, %v359
  %393 = vst.msk [vmem:[%s3 + $0x20] sm:$0xf] %vm384, %v360
  %394 = vst.msk [vmem:[%s3 + $0x24] sm:$0xf] %vm384, %v361
  %395 = vst.msk [vmem:[%s3 + $0x28] sm:$0xf] %vm384, %v362
  %396 = vst.msk [vmem:[%s3 + $0x2c] sm:$0xf] %vm384, %v363
  %397 = vst.msk [vmem:[%s3 + $0x30] sm:$0xf] %vm384, %v364
  %398 = vst.msk [vmem:[%s3 + $0x34] sm:$0xf] %vm384, %v365
  %399 = vst.msk [vmem:[%s3 + $0x38] sm:$0xf] %vm384, %v366
  %400 = vst.msk [vmem:[%s3 + $0x3c] sm:$0xf] %vm384, %v367
  // Predicated region
  $region14: #{vqcae_forward.10} parent=0 // pred_check
    _
  $region15: #{vqcae_forward.10} parent=0 // pred_check_branch
    %402 = sbr.rel (0) target = $region17
  $region16: #{vqcae_forward.10} parent=0 // pred_region
    _
  $region17: #{vqcae_forward.10} parent=0 // pred_fallthru
    _
  // Predicated region
  $region18: #{vqcae_forward.10} parent=0 // pred_check
    _
  $region19: #{vqcae_forward.10} parent=0 // pred_check_branch
    %404 = sbr.rel (0) target = $region21
  $region20: #{vqcae_forward.10} parent=0 // pred_region
    _
  $region21: #{vqcae_forward.10} parent=0 // pred_fallthru
    _

// kernel: vqcae_forward.11
$region0: #{vqcae_forward.11}
  #allocation0 [shape = 'u32[]', space=smem, size = 0x4, offset = 0x4, fixed_abs, tag = 'smem constant byte address 0x4 - core index']
  #allocation1 [shape = 'u32[144,128]{1,0:T(1,128)}', space=vmem, size = 0x12000, scoped, tag = 'internal scratch']
  %s0 = inlined_call_operand.vmem [shape: bf16[32,288], index: 0, kind: input, shape index: {}]
  %s1 = inlined_call_operand.vmem [shape: bf16[288,64], index: 1, kind: input, shape index: {}]
  %s2 = inlined_call_operand.vmem [shape: f32[1,64], index: 2, kind: input, shape index: {}]
  %s3 = inlined_call_operand.vmem [shape: bf16[32,64], index: 3, kind: output, shape index: {}]
  %s4 = sld [smem:[#allocation0]]
  $region22: #{vqcae_forward.11} parent=0
    _
  %s6 = ssub.s32 1, %s4
  %s7 = scalar_select 0, %s6, %s4
  // Predicated region
  $region2: #{vqcae_forward.11} parent=0 // pred_check
    _
  $region3: #{vqcae_forward.11} parent=0 // pred_check_branch
    %9 = sbr.rel (0) target = $region5
  $region4: #{vqcae_forward.11} parent=0 // pred_region
    _
  $region5: #{vqcae_forward.11} parent=0 // pred_fallthru
    _
  // Predicated region
  $region6: #{vqcae_forward.11} parent=0 // pred_check
    _
  $region7: #{vqcae_forward.11} parent=0 // pred_check_branch
    %11 = sbr.rel (0) target = $region9
  $region8: #{vqcae_forward.11} parent=0 // pred_region
    _
  $region9: #{vqcae_forward.11} parent=0 // pred_fallthru
    _
  // Predicated region
  $region10: #{vqcae_forward.11} parent=0 // pred_check
    _
  $region11: #{vqcae_forward.11} parent=0 // pred_check_branch
    %13 = sbr.rel (0) target = $region13
  $region12: #{vqcae_forward.11} parent=0 // pred_region
    _
  $region13: #{vqcae_forward.11} parent=0 // pred_fallthru
    _
  %v15 = vld [vmem:[%s0] sm:$0xff]
  %v16 = vld [vmem:[%s0 + $0x8] sm:$0xf]
  %v17 = vld [vmem:[%s0 + $0xc] sm:$0xff]
  %v18 = vld [vmem:[%s0 + $0x14] sm:$0xf]
  %v19 = vld [vmem:[%s0 + $0x18] sm:$0xff]
  %v20 = vld [vmem:[%s0 + $0x20] sm:$0xf]
  %v21 = vld [vmem:[%s0 + $0x24] sm:$0xff]
  %v22 = vld [vmem:[%s0 + $0x2c] sm:$0xf]
  %v23 = vld [vmem:[%s1] sm:$0xf]
  %v24 = vld [vmem:[%s1 + $0x4] sm:$0xf]
  %v25 = vld [vmem:[%s1 + $0x8] sm:$0xf]
  %v26 = vld [vmem:[%s1 + $0xc] sm:$0xf]
  %v27 = vld [vmem:[%s1 + $0x10] sm:$0xf]
  %v28 = vld [vmem:[%s1 + $0x14] sm:$0xf]
  %v29 = vld [vmem:[%s1 + $0x18] sm:$0xf]
  %v30 = vld [vmem:[%s1 + $0x1c] sm:$0xf]
  %v31 = vld [vmem:[%s1 + $0x20] sm:$0xf]
  %v32 = vld [vmem:[%s1 + $0x24] sm:$0xf]
  %v33 = vld [vmem:[%s1 + $0x28] sm:$0xf]
  %v34 = vld [vmem:[%s1 + $0x2c] sm:$0xf]
  %v35 = vld [vmem:[%s1 + $0x30] sm:$0xf]
  %v36 = vld [vmem:[%s1 + $0x34] sm:$0xf]
  %v37 = vld [vmem:[%s1 + $0x38] sm:$0xf]
  %v38 = vld [vmem:[%s1 + $0x3c] sm:$0xf]
  %v39 = vld [vmem:[%s1 + $0x40] sm:$0xf]
  %v40 = vld [vmem:[%s1 + $0x44] sm:$0xf]
  %v41 = vld [vmem:[%s1 + $0x48] sm:$0xf]
  %v42 = vld [vmem:[%s1 + $0x4c] sm:$0xf]
  %v43 = vld [vmem:[%s1 + $0x50] sm:$0xf]
  %v44 = vld [vmem:[%s1 + $0x54] sm:$0xf]
  %v45 = vld [vmem:[%s1 + $0x58] sm:$0xf]
  %v46 = vld [vmem:[%s1 + $0x5c] sm:$0xf]
  %v47 = vld [vmem:[%s1 + $0x60] sm:$0xf]
  %v48 = vld [vmem:[%s1 + $0x64] sm:$0xf]
  %v49 = vld [vmem:[%s1 + $0x68] sm:$0xf]
  %v50 = vld [vmem:[%s1 + $0x6c] sm:$0xf]
  %v51 = vld [vmem:[%s1 + $0x70] sm:$0xf]
  %v52 = vld [vmem:[%s1 + $0x74] sm:$0xf]
  %v53 = vld [vmem:[%s1 + $0x78] sm:$0xf]
  %v54 = vld [vmem:[%s1 + $0x7c] sm:$0xf]
  %v55 = vld [vmem:[%s1 + $0x80] sm:$0xf]
  %v56 = vld [vmem:[%s1 + $0x84] sm:$0xf]
  %v57 = vld [vmem:[%s1 + $0x88] sm:$0xf]
  %v58 = vld [vmem:[%s1 + $0x8c] sm:$0xf]
  %v59 = vld [vmem:[%s2] sm:$0x1]
  %v61 = vlaneseq
  %v62 = vshrl.u32 %v61, 7
  %v63 = vsub.s32 0, %v62
  %v64 = vrot.slane %v59, %v63
  %v74 = vunpack.c.l.b16 %v15
  %v75 = vunpack.c.h.b16 %v15
  %v76 = vunpack.c.l.b16 %v16
  %v77 = vunpack.c.l.b16 %v17
  %v78 = vunpack.c.h.b16 %v17
  %v79 = vunpack.c.l.b16 %v18
  %v80 = vunpack.c.l.b16 %v19
  %v81 = vunpack.c.h.b16 %v19
  %v82 = vunpack.c.l.b16 %v20
  %v83 = vunpack.c.l.b16 %v21
  %v84 = vunpack.c.h.b16 %v21
  %v85 = vunpack.c.l.b16 %v22
  %v86 = vpack.c.b16 %v77, %v74
  %v87 = vpack.c.b16 %v78, %v75
  %v88 = vpack.c.b16 %v79, %v76
  %v89 = vpack.c.b16 %v83, %v80
  %v90 = vpack.c.b16 %v84, %v81
  %v91 = vpack.c.b16 %v85, %v82
  %v132 = vunpack.c.l.b16 %v23
  %v133 = vunpack.c.l.b16 %v24
  %v134 = vunpack.c.l.b16 %v25
  %v135 = vunpack.c.l.b16 %v26
  %v136 = vunpack.c.l.b16 %v27
  %v137 = vunpack.c.l.b16 %v28
  %v138 = vunpack.c.l.b16 %v29
  %v139 = vunpack.c.l.b16 %v30
  %v140 = vunpack.c.l.b16 %v31
  %v141 = vunpack.c.l.b16 %v32
  %v142 = vunpack.c.l.b16 %v33
  %v143 = vunpack.c.l.b16 %v34
  %v144 = vunpack.c.l.b16 %v35
  %v145 = vunpack.c.l.b16 %v36
  %v146 = vunpack.c.l.b16 %v37
  %v147 = vunpack.c.l.b16 %v38
  %v148 = vunpack.c.l.b16 %v39
  %v149 = vunpack.c.l.b16 %v40
  %v150 = vunpack.c.l.b16 %v41
  %v151 = vunpack.c.l.b16 %v42
  %v152 = vunpack.c.l.b16 %v43
  %v153 = vunpack.c.l.b16 %v44
  %v154 = vunpack.c.l.b16 %v45
  %v155 = vunpack.c.l.b16 %v46
  %v156 = vunpack.c.l.b16 %v47
  %v157 = vunpack.c.l.b16 %v48
  %v158 = vunpack.c.l.b16 %v49
  %v159 = vunpack.c.l.b16 %v50
  %v160 = vunpack.c.l.b16 %v51
  %v161 = vunpack.c.l.b16 %v52
  %v162 = vunpack.c.l.b16 %v53
  %v163 = vunpack.c.l.b16 %v54
  %v164 = vunpack.c.l.b16 %v55
  %v165 = vunpack.c.l.b16 %v56
  %v166 = vunpack.c.l.b16 %v57
  %v167 = vunpack.c.l.b16 %v58
  %v168 = vpack.c.b16 %v133, %v132
  %v169 = vpack.c.b16 %v135, %v134
  %v170 = vpack.c.b16 %v137, %v136
  %v171 = vpack.c.b16 %v139, %v138
  %v172 = vpack.c.b16 %v141, %v140
  %v173 = vpack.c.b16 %v143, %v142
  %v174 = vpack.c.b16 %v145, %v144
  %v175 = vpack.c.b16 %v147, %v146
  %v176 = vpack.c.b16 %v149, %v148
  %v177 = vpack.c.b16 %v151, %v150
  %v178 = vpack.c.b16 %v153, %v152
  %v179 = vpack.c.b16 %v155, %v154
  %v180 = vpack.c.b16 %v157, %v156
  %v181 = vpack.c.b16 %v159, %v158
  %v182 = vpack.c.b16 %v161, %v160
  %v183 = vpack.c.b16 %v163, %v162
  %v184 = vpack.c.b16 %v165, %v164
  %v185 = vpack.c.b16 %v167, %v166
  %vm204 = vcmask 261120
  %v206 = vsel %vm204, %v88, 0
  %v209 = vsel %vm204, %v91, 0
  %211 = vmatprep.subr.bf16.mxu0 0
  %212 = vmatpush1.bf16.msra.mxu0 %v175
  %213 = vmatprep.subr.bf16.mxu0 0
  %214 = vmatpush1.bf16.msra.mxu0 %v174
  %215 = vmatprep.subr.bf16.mxu0 0
  %216 = vmatpush1.bf16.msra.mxu0 %v173
  %217 = vmatprep.subr.bf16.mxu0 0
  %218 = vmatpush1.bf16.msra.mxu0 %v172
  %219 = vmatprep.subr.bf16.mxu0 0
  %220 = vmatpush1.bf16.msra.mxu0 %v171
  %221 = vmatprep.subr.bf16.mxu0 0
  %222 = vmatpush1.bf16.msra.mxu0 %v170
  %223 = vmatprep.subr.bf16.mxu0 0
  %224 = vmatpush1.bf16.msra.mxu0 %v169
  %225 = vmatprep.subr.bf16.mxu0 0
  %226 = vmatpush1.bf16.msra.mxu0 %v168
  %227 = vmatprep.subr.bf16.mxu0 0
  %228 = vmatpush2.bf16.msra.mxu0 %v183
  %229 = vmatprep.subr.bf16.mxu0 0
  %230 = vmatpush2.bf16.msra.mxu0 %v182
  %231 = vmatprep.subr.bf16.mxu0 0
  %232 = vmatpush2.bf16.msra.mxu0 %v181
  %233 = vmatprep.subr.bf16.mxu0 0
  %234 = vmatpush2.bf16.msra.mxu0 %v180
  %235 = vmatprep.subr.bf16.mxu0 0
  %236 = vmatpush2.bf16.msra.mxu0 %v179
  %237 = vmatprep.subr.bf16.mxu0 0
  %238 = vmatpush2.bf16.msra.mxu0 %v178
  %239 = vmatprep.subr.bf16.mxu0 0
  %240 = vmatpush2.bf16.msra.mxu0 %v177
  %241 = vmatprep.subr.bf16.mxu0 0
  %242 = vmatpush2.bf16.msra.mxu0 %v176
  %243 = vmatprep.mubr.bf16.mxu0 %v87
  %244 = vmatmul.mubr.bf16.gmra.mxu0 %v86
  %v245 = vpop.f32.mrf.mxu0
  %v246 = vadd.f32 %v64, %v245
  %v247 = vpop.f32.mrf.mxu0
  %v248 = vpop.f32.mrf.mxu0
  %v249 = vadd.f32 %v64, %v248
  %v250 = vpop.f32.mrf.mxu0
  %251 = vmatprep.mubr.bf16.mxu0 %v90
  %252 = vmatmul.mubr.bf16.gmra.mxu0 %v89
  %v253 = vpop.f32.mrf.mxu0
  %v254 = vadd.f32 %v64, %v253
  %v255 = vpop.f32.mrf.mxu0
  %v256 = vpop.f32.mrf.mxu0
  %v257 = vadd.f32 %v64, %v256
  %v258 = vpop.f32.mrf.mxu0
  %259 = vdwg.mxu0
  %260 = vmatprep.subr.bf16.mxu0 0
  %261 = vmatpush1.bf16.msra.mxu0 0
  %262 = vmatprep.subr.bf16.mxu0 0
  %263 = vmatpush1.bf16.msra.mxu0 0
  %264 = vmatprep.subr.bf16.mxu0 0
  %265 = vmatpush1.bf16.msra.mxu0 0
  %266 = vmatprep.subr.bf16.mxu0 0
  %267 = vmatpush1.bf16.msra.mxu0 0
  %268 = vmatprep.subr.bf16.mxu0 0
  %269 = vmatpush1.bf16.msra.mxu0 0
  %270 = vmatprep.subr.bf16.mxu0 0
  %271 = vmatpush1.bf16.msra.mxu0 0
  %272 = vmatprep.subr.bf16.mxu0 0
  %273 = vmatpush1.bf16.msra.mxu0 %v185
  %274 = vmatprep.subr.bf16.mxu0 0
  %275 = vmatpush1.bf16.msra.mxu0 %v184
  %276 = vmatprep.subr.bf16.mxu0 0
  %277 = vmatpush2.bf16.msra.mxu0 0
  %278 = vmatprep.subr.bf16.mxu0 0
  %279 = vmatpush2.bf16.msra.mxu0 0
  %280 = vmatprep.subr.bf16.mxu0 0
  %281 = vmatpush2.bf16.msra.mxu0 0
  %282 = vmatprep.subr.bf16.mxu0 0
  %283 = vmatpush2.bf16.msra.mxu0 0
  %284 = vmatprep.subr.bf16.mxu0 0
  %285 = vmatpush2.bf16.msra.mxu0 0
  %286 = vmatprep.subr.bf16.mxu0 0
  %287 = vmatpush2.bf16.msra.mxu0 0
  %288 = vmatprep.subr.bf16.mxu0 0
  %289 = vmatpush2.bf16.msra.mxu0 0
  %290 = vmatprep.subr.bf16.mxu0 0
  %291 = vmatpush2.bf16.msra.mxu0 0
  %292 = vmatprep.mubr.bf16.mxu0 0
  %293 = vmatmul.mubr.bf16.gmra.mxu0 %v206
  %v294 = vpop.f32.mrf.mxu0
  %v295 = vadd.f32 %v246, %v294
  %v296 = vpop.f32.mrf.mxu0
  %v297 = vpop.f32.mrf.mxu0
  %v298 = vadd.f32 %v249, %v297
  %v299 = vpop.f32.mrf.mxu0
  %300 = vmatprep.mubr.bf16.mxu0 0
  %301 = vmatmul.mubr.bf16.gmra.mxu0 %v209
  %v302 = vpop.f32.mrf.mxu0
  %v303 = vadd.f32 %v254, %v302
  %v304 = vpop.f32.mrf.mxu0
  %v305 = vpop.f32.mrf.mxu0
  %v306 = vadd.f32 %v257, %v305
  %v307 = vpop.f32.mrf.mxu0
  %308 = vdwg.mxu0
  %v309 = vmax.f32 %v295, 0.0
  %v310 = vmax.f32 %v298, 0.0
  %v311 = vmax.f32 %v303, 0.0
  %v312 = vmax.f32 %v306, 0.0
  %v313 = vpack.c.bf16 %v310, %v309
  %v314 = vpack.c.bf16 %v312, %v311
  %v317 = vunpack.c.l.b16 %v313
  %v318 = vunpack.c.h.b16 %v313
  %v319 = vunpack.c.l.b16 %v314
  %v320 = vunpack.c.h.b16 %v314
  %v321 = vpack.c.b16 %v317, %v317
  %v322 = vpack.c.b16 %v318, %v318
  %v323 = vpack.c.b16 %v319, %v319
  %v324 = vpack.c.b16 %v320, %v320
  %vm329 = vcmask 519168
  %330 = vst.msk [vmem:[%s3] sm:$0xf] %vm329, %v321
  %331 = vst.msk [vmem:[%s3 + $0x4] sm:$0xf] %vm329, %v322
  %332 = vst.msk [vmem:[%s3 + $0x8] sm:$0xf] %vm329, %v323
  %333 = vst.msk [vmem:[%s3 + $0xc] sm:$0xf] %vm329, %v324
  // Predicated region
  $region14: #{vqcae_forward.11} parent=0 // pred_check
    _
  $region15: #{vqcae_forward.11} parent=0 // pred_check_branch
    %335 = sbr.rel (0) target = $region17
  $region16: #{vqcae_forward.11} parent=0 // pred_region
    _
  $region17: #{vqcae_forward.11} parent=0 // pred_fallthru
    _
  // Predicated region
  $region18: #{vqcae_forward.11} parent=0 // pred_check
    _
  $region19: #{vqcae_forward.11} parent=0 // pred_check_branch
    %337 = sbr.rel (0) target = $region21
  $region20: #{vqcae_forward.11} parent=0 // pred_region
    _
  $region21: #{vqcae_forward.11} parent=0 // pred_fallthru
    _

// kernel: vqcae_forward.12
$region0: #{vqcae_forward.12}
  #allocation0 [shape = 'u32[]', space=smem, size = 0x4, offset = 0x4, fixed_abs, tag = 'smem constant byte address 0x4 - core index']
  #allocation1 [shape = 'u32[144,128]{1,0:T(1,128)}', space=vmem, size = 0x12000, scoped, tag = 'internal scratch']
  %s0 = inlined_call_operand.vmem [shape: bf16[16,576], index: 0, kind: input, shape index: {}]
  %s1 = inlined_call_operand.vmem [shape: bf16[576,128], index: 1, kind: input, shape index: {}]
  %s2 = inlined_call_operand.vmem [shape: f32[1,128], index: 2, kind: input, shape index: {}]
  %s3 = inlined_call_operand.vmem [shape: f32[16,128], index: 3, kind: output, shape index: {}]
  %s4 = sld [smem:[#allocation0]]
  $region22: #{vqcae_forward.12} parent=0
    _
  %s6 = ssub.s32 1, %s4
  %s7 = scalar_select 0, %s6, %s4
  // Predicated region
  $region2: #{vqcae_forward.12} parent=0 // pred_check
    _
  $region3: #{vqcae_forward.12} parent=0 // pred_check_branch
    %9 = sbr.rel (0) target = $region5
  $region4: #{vqcae_forward.12} parent=0 // pred_region
    _
  $region5: #{vqcae_forward.12} parent=0 // pred_fallthru
    _
  // Predicated region
  $region6: #{vqcae_forward.12} parent=0 // pred_check
    _
  $region7: #{vqcae_forward.12} parent=0 // pred_check_branch
    %11 = sbr.rel (0) target = $region9
  $region8: #{vqcae_forward.12} parent=0 // pred_region
    _
  $region9: #{vqcae_forward.12} parent=0 // pred_fallthru
    _
  // Predicated region
  $region10: #{vqcae_forward.12} parent=0 // pred_check
    _
  $region11: #{vqcae_forward.12} parent=0 // pred_check_branch
    %13 = sbr.rel (0) target = $region13
  $region12: #{vqcae_forward.12} parent=0 // pred_region
    _
  $region13: #{vqcae_forward.12} parent=0 // pred_fallthru
    _
  %v15 = vld [vmem:[%s0] sm:$0xff]
  %v16 = vld [vmem:[%s0 + $0x8] sm:$0xff]
  %v17 = vld [vmem:[%s0 + $0x10] sm:$0xf]
  %v18 = vld [vmem:[%s0 + $0x14] sm:$0xff]
  %v19 = vld [vmem:[%s0 + $0x1c] sm:$0xff]
  %v20 = vld [vmem:[%s0 + $0x24] sm:$0xf]
  %v21 = vld [vmem:[%s1] sm:$0xf]
  %v22 = vld [vmem:[%s1 + $0x4] sm:$0xf]
  %v23 = vld [vmem:[%s1 + $0x8] sm:$0xf]
  %v24 = vld [vmem:[%s1 + $0xc] sm:$0xf]
  %v25 = vld [vmem:[%s1 + $0x10] sm:$0xf]
  %v26 = vld [vmem:[%s1 + $0x14] sm:$0xf]
  %v27 = vld [vmem:[%s1 + $0x18] sm:$0xf]
  %v28 = vld [vmem:[%s1 + $0x1c] sm:$0xf]
  %v29 = vld [vmem:[%s1 + $0x20] sm:$0xf]
  %v30 = vld [vmem:[%s1 + $0x24] sm:$0xf]
  %v31 = vld [vmem:[%s1 + $0x28] sm:$0xf]
  %v32 = vld [vmem:[%s1 + $0x2c] sm:$0xf]
  %v33 = vld [vmem:[%s1 + $0x30] sm:$0xf]
  %v34 = vld [vmem:[%s1 + $0x34] sm:$0xf]
  %v35 = vld [vmem:[%s1 + $0x38] sm:$0xf]
  %v36 = vld [vmem:[%s1 + $0x3c] sm:$0xf]
  %v37 = vld [vmem:[%s1 + $0x40] sm:$0xf]
  %v38 = vld [vmem:[%s1 + $0x44] sm:$0xf]
  %v39 = vld [vmem:[%s1 + $0x48] sm:$0xf]
  %v40 = vld [vmem:[%s1 + $0x4c] sm:$0xf]
  %v41 = vld [vmem:[%s1 + $0x50] sm:$0xf]
  %v42 = vld [vmem:[%s1 + $0x54] sm:$0xf]
  %v43 = vld [vmem:[%s1 + $0x58] sm:$0xf]
  %v44 = vld [vmem:[%s1 + $0x5c] sm:$0xf]
  %v45 = vld [vmem:[%s1 + $0x60] sm:$0xf]
  %v46 = vld [vmem:[%s1 + $0x64] sm:$0xf]
  %v47 = vld [vmem:[%s1 + $0x68] sm:$0xf]
  %v48 = vld [vmem:[%s1 + $0x6c] sm:$0xf]
  %v49 = vld [vmem:[%s1 + $0x70] sm:$0xf]
  %v50 = vld [vmem:[%s1 + $0x74] sm:$0xf]
  %v51 = vld [vmem:[%s1 + $0x78] sm:$0xf]
  %v52 = vld [vmem:[%s1 + $0x7c] sm:$0xf]
  %v53 = vld [vmem:[%s1 + $0x80] sm:$0xf]
  %v54 = vld [vmem:[%s1 + $0x84] sm:$0xf]
  %v55 = vld [vmem:[%s1 + $0x88] sm:$0xf]
  %v56 = vld [vmem:[%s1 + $0x8c] sm:$0xf]
  %v57 = vld [vmem:[%s1 + $0x90] sm:$0xf]
  %v58 = vld [vmem:[%s1 + $0x94] sm:$0xf]
  %v59 = vld [vmem:[%s1 + $0x98] sm:$0xf]
  %v60 = vld [vmem:[%s1 + $0x9c] sm:$0xf]
  %v61 = vld [vmem:[%s1 + $0xa0] sm:$0xf]
  %v62 = vld [vmem:[%s1 + $0xa4] sm:$0xf]
  %v63 = vld [vmem:[%s1 + $0xa8] sm:$0xf]
  %v64 = vld [vmem:[%s1 + $0xac] sm:$0xf]
  %v65 = vld [vmem:[%s1 + $0xb0] sm:$0xf]
  %v66 = vld [vmem:[%s1 + $0xb4] sm:$0xf]
  %v67 = vld [vmem:[%s1 + $0xb8] sm:$0xf]
  %v68 = vld [vmem:[%s1 + $0xbc] sm:$0xf]
  %v69 = vld [vmem:[%s1 + $0xc0] sm:$0xf]
  %v70 = vld [vmem:[%s1 + $0xc4] sm:$0xf]
  %v71 = vld [vmem:[%s1 + $0xc8] sm:$0xf]
  %v72 = vld [vmem:[%s1 + $0xcc] sm:$0xf]
  %v73 = vld [vmem:[%s1 + $0xd0] sm:$0xf]
  %v74 = vld [vmem:[%s1 + $0xd4] sm:$0xf]
  %v75 = vld [vmem:[%s1 + $0xd8] sm:$0xf]
  %v76 = vld [vmem:[%s1 + $0xdc] sm:$0xf]
  %v77 = vld [vmem:[%s1 + $0xe0] sm:$0xf]
  %v78 = vld [vmem:[%s1 + $0xe4] sm:$0xf]
  %v79 = vld [vmem:[%s1 + $0xe8] sm:$0xf]
  %v80 = vld [vmem:[%s1 + $0xec] sm:$0xf]
  %v81 = vld [vmem:[%s1 + $0xf0] sm:$0xf]
  %v82 = vld [vmem:[%s1 + $0xf4] sm:$0xf]
  %v83 = vld [vmem:[%s1 + $0xf8] sm:$0xf]
  %v84 = vld [vmem:[%s1 + $0xfc] sm:$0xf]
  %v85 = vld [vmem:[%s1 + $0x100] sm:$0xf]
  %v86 = vld [vmem:[%s1 + $0x104] sm:$0xf]
  %v87 = vld [vmem:[%s1 + $0x108] sm:$0xf]
  %v88 = vld [vmem:[%s1 + $0x10c] sm:$0xf]
  %v89 = vld [vmem:[%s1 + $0x110] sm:$0xf]
  %v90 = vld [vmem:[%s1 + $0x114] sm:$0xf]
  %v91 = vld [vmem:[%s1 + $0x118] sm:$0xf]
  %v92 = vld [vmem:[%s1 + $0x11c] sm:$0xf]
  %v93 = vld [vmem:[%s2] sm:$0x1]
  %v95 = vlaneseq
  %v96 = vshrl.u32 %v95, 7
  %v97 = vsub.s32 0, %v96
  %v98 = vrot.slane %v93, %v97
  %v106 = vunpack.c.l.b16 %v15
  %v107 = vunpack.c.h.b16 %v15
  %v108 = vunpack.c.l.b16 %v16
  %v109 = vunpack.c.h.b16 %v16
  %v110 = vunpack.c.l.b16 %v17
  %v111 = vunpack.c.l.b16 %v18
  %v112 = vunpack.c.h.b16 %v18
  %v113 = vunpack.c.l.b16 %v19
  %v114 = vunpack.c.h.b16 %v19
  %v115 = vunpack.c.l.b16 %v20
  %v116 = vpack.c.b16 %v111, %v106
  %v117 = vpack.c.b16 %v112, %v107
  %v118 = vpack.c.b16 %v113, %v108
  %v119 = vpack.c.b16 %v114, %v109
  %v120 = vpack.c.b16 %v115, %v110
  %v197 = vunpack.c.l.b16 %v21
  %v198 = vunpack.c.l.b16 %v22
  %v199 = vunpack.c.l.b16 %v23
  %v200 = vunpack.c.l.b16 %v24
  %v201 = vunpack.c.l.b16 %v25
  %v202 = vunpack.c.l.b16 %v26
  %v203 = vunpack.c.l.b16 %v27
  %v204 = vunpack.c.l.b16 %v28
  %v205 = vunpack.c.l.b16 %v29
  %v206 = vunpack.c.l.b16 %v30
  %v207 = vunpack.c.l.b16 %v31
  %v208 = vunpack.c.l.b16 %v32
  %v209 = vunpack.c.l.b16 %v33
  %v210 = vunpack.c.l.b16 %v34
  %v211 = vunpack.c.l.b16 %v35
  %v212 = vunpack.c.l.b16 %v36
  %v213 = vunpack.c.l.b16 %v37
  %v214 = vunpack.c.l.b16 %v38
  %v215 = vunpack.c.l.b16 %v39
  %v216 = vunpack.c.l.b16 %v40
  %v217 = vunpack.c.l.b16 %v41
  %v218 = vunpack.c.l.b16 %v42
  %v219 = vunpack.c.l.b16 %v43
  %v220 = vunpack.c.l.b16 %v44
  %v221 = vunpack.c.l.b16 %v45
  %v222 = vunpack.c.l.b16 %v46
  %v223 = vunpack.c.l.b16 %v47
  %v224 = vunpack.c.l.b16 %v48
  %v225 = vunpack.c.l.b16 %v49
  %v226 = vunpack.c.l.b16 %v50
  %v227 = vunpack.c.l.b16 %v51
  %v228 = vunpack.c.l.b16 %v52
  %v229 = vunpack.c.l.b16 %v53
  %v230 = vunpack.c.l.b16 %v54
  %v231 = vunpack.c.l.b16 %v55
  %v232 = vunpack.c.l.b16 %v56
  %v233 = vunpack.c.l.b16 %v57
  %v234 = vunpack.c.l.b16 %v58
  %v235 = vunpack.c.l.b16 %v59
  %v236 = vunpack.c.l.b16 %v60
  %v237 = vunpack.c.l.b16 %v61
  %v238 = vunpack.c.l.b16 %v62
  %v239 = vunpack.c.l.b16 %v63
  %v240 = vunpack.c.l.b16 %v64
  %v241 = vunpack.c.l.b16 %v65
  %v242 = vunpack.c.l.b16 %v66
  %v243 = vunpack.c.l.b16 %v67
  %v244 = vunpack.c.l.b16 %v68
  %v245 = vunpack.c.l.b16 %v69
  %v246 = vunpack.c.l.b16 %v70
  %v247 = vunpack.c.l.b16 %v71
  %v248 = vunpack.c.l.b16 %v72
  %v249 = vunpack.c.l.b16 %v73
  %v250 = vunpack.c.l.b16 %v74
  %v251 = vunpack.c.l.b16 %v75
  %v252 = vunpack.c.l.b16 %v76
  %v253 = vunpack.c.l.b16 %v77
  %v254 = vunpack.c.l.b16 %v78
  %v255 = vunpack.c.l.b16 %v79
  %v256 = vunpack.c.l.b16 %v80
  %v257 = vunpack.c.l.b16 %v81
  %v258 = vunpack.c.l.b16 %v82
  %v259 = vunpack.c.l.b16 %v83
  %v260 = vunpack.c.l.b16 %v84
  %v261 = vunpack.c.l.b16 %v85
  %v262 = vunpack.c.l.b16 %v86
  %v263 = vunpack.c.l.b16 %v87
  %v264 = vunpack.c.l.b16 %v88
  %v265 = vunpack.c.l.b16 %v89
  %v266 = vunpack.c.l.b16 %v90
  %v267 = vunpack.c.l.b16 %v91
  %v268 = vunpack.c.l.b16 %v92
  %v269 = vpack.c.b16 %v198, %v197
  %v270 = vpack.c.b16 %v200, %v199
  %v271 = vpack.c.b16 %v202, %v201
  %v272 = vpack.c.b16 %v204, %v203
  %v273 = vpack.c.b16 %v206, %v205
  %v274 = vpack.c.b16 %v208, %v207
  %v275 = vpack.c.b16 %v210, %v209
  %v276 = vpack.c.b16 %v212, %v211
  %v277 = vpack.c.b16 %v214, %v213
  %v278 = vpack.c.b16 %v216, %v215
  %v279 = vpack.c.b16 %v218, %v217
  %v280 = vpack.c.b16 %v220, %v219
  %v281 = vpack.c.b16 %v222, %v221
  %v282 = vpack.c.b16 %v224, %v223
  %v283 = vpack.c.b16 %v226, %v225
  %v284 = vpack.c.b16 %v228, %v227
  %v285 = vpack.c.b16 %v230, %v229
  %v286 = vpack.c.b16 %v232, %v231
  %v287 = vpack.c.b16 %v234, %v233
  %v288 = vpack.c.b16 %v236, %v235
  %v289 = vpack.c.b16 %v238, %v237
  %v290 = vpack.c.b16 %v240, %v239
  %v291 = vpack.c.b16 %v242, %v241
  %v292 = vpack.c.b16 %v244, %v243
  %v293 = vpack.c.b16 %v246, %v245
  %v294 = vpack.c.b16 %v248, %v247
  %v295 = vpack.c.b16 %v250, %v249
  %v296 = vpack.c.b16 %v252, %v251
  %v297 = vpack.c.b16 %v254, %v253
  %v298 = vpack.c.b16 %v256, %v255
  %v299 = vpack.c.b16 %v258, %v257
  %v300 = vpack.c.b16 %v260, %v259
  %v301 = vpack.c.b16 %v262, %v261
  %v302 = vpack.c.b16 %v264, %v263
  %v303 = vpack.c.b16 %v266, %v265
  %v304 = vpack.c.b16 %v268, %v267
  %vm341 = vcmask 523264
  %v343 = vsel %vm341, %v120, 0
  %345 = vmatprep.subr.bf16.mxu0 0
  %346 = vmatpush1.bf16.msra.mxu0 %v276
  %347 = vmatprep.subr.bf16.mxu0 0
  %348 = vmatpush1.bf16.msra.mxu0 %v275
  %349 = vmatprep.subr.bf16.mxu0 0
  %350 = vmatpush1.bf16.msra.mxu0 %v274
  %351 = vmatprep.subr.bf16.mxu0 0
  %352 = vmatpush1.bf16.msra.mxu0 %v273
  %353 = vmatprep.subr.bf16.mxu0 0
  %354 = vmatpush1.bf16.msra.mxu0 %v272
  %355 = vmatprep.subr.bf16.mxu0 0
  %356 = vmatpush1.bf16.msra.mxu0 %v271
  %357 = vmatprep.subr.bf16.mxu0 0
  %358 = vmatpush1.bf16.msra.mxu0 %v270
  %359 = vmatprep.subr.bf16.mxu0 0
  %360 = vmatpush1.bf16.msra.mxu0 %v269
  %361 = vmatprep.subr.bf16.mxu0 0
  %362 = vmatpush2.bf16.msra.mxu0 %v284
  %363 = vmatprep.subr.bf16.mxu0 0
  %364 = vmatpush2.bf16.msra.mxu0 %v283
  %365 = vmatprep.subr.bf16.mxu0 0
  %366 = vmatpush2.bf16.msra.mxu0 %v282
  %367 = vmatprep.subr.bf16.mxu0 0
  %368 = vmatpush2.bf16.msra.mxu0 %v281
  %369 = vmatprep.subr.bf16.mxu0 0
  %370 = vmatpush2.bf16.msra.mxu0 %v280
  %371 = vmatprep.subr.bf16.mxu0 0
  %372 = vmatpush2.bf16.msra.mxu0 %v279
  %373 = vmatprep.subr.bf16.mxu0 0
  %374 = vmatpush2.bf16.msra.mxu0 %v278
  %375 = vmatprep.subr.bf16.mxu0 0
  %376 = vmatpush2.bf16.msra.mxu0 %v277
  %377 = vmatprep.mubr.bf16.mxu0 %v117
  %378 = vmatmul.mubr.bf16.gmra.mxu0 %v116
  %v379 = vpop.f32.mrf.mxu0
  %v380 = vadd.f32 %v98, %v379
  %v381 = vpop.f32.mrf.mxu0
  %v382 = vpop.f32.mrf.mxu0
  %v383 = vadd.f32 %v98, %v382
  %v384 = vpop.f32.mrf.mxu0
  %385 = vdwg.mxu0
  %386 = vmatprep.subr.bf16.mxu0 0
  %387 = vmatpush1.bf16.msra.mxu0 %v292
  %388 = vmatprep.subr.bf16.mxu0 0
  %389 = vmatpush1.bf16.msra.mxu0 %v291
  %390 = vmatprep.subr.bf16.mxu0 0
  %391 = vmatpush1.bf16.msra.mxu0 %v290
  %392 = vmatprep.subr.bf16.mxu0 0
  %393 = vmatpush1.bf16.msra.mxu0 %v289
  %394 = vmatprep.subr.bf16.mxu0 0
  %395 = vmatpush1.bf16.msra.mxu0 %v288
  %396 = vmatprep.subr.bf16.mxu0 0
  %397 = vmatpush1.bf16.msra.mxu0 %v287
  %398 = vmatprep.subr.bf16.mxu0 0
  %399 = vmatpush1.bf16.msra.mxu0 %v286
  %400 = vmatprep.subr.bf16.mxu0 0
  %401 = vmatpush1.bf16.msra.mxu0 %v285
  %402 = vmatprep.subr.bf16.mxu0 0
  %403 = vmatpush2.bf16.msra.mxu0 %v300
  %404 = vmatprep.subr.bf16.mxu0 0
  %405 = vmatpush2.bf16.msra.mxu0 %v299
  %406 = vmatprep.subr.bf16.mxu0 0
  %407 = vmatpush2.bf16.msra.mxu0 %v298
  %408 = vmatprep.subr.bf16.mxu0 0
  %409 = vmatpush2.bf16.msra.mxu0 %v297
  %410 = vmatprep.subr.bf16.mxu0 0
  %411 = vmatpush2.bf16.msra.mxu0 %v296
  %412 = vmatprep.subr.bf16.mxu0 0
  %413 = vmatpush2.bf16.msra.mxu0 %v295
  %414 = vmatprep.subr.bf16.mxu0 0
  %415 = vmatpush2.bf16.msra.mxu0 %v294
  %416 = vmatprep.subr.bf16.mxu0 0
  %417 = vmatpush2.bf16.msra.mxu0 %v293
  %418 = vmatprep.mubr.bf16.mxu0 %v119
  %419 = vmatmul.mubr.bf16.gmra.mxu0 %v118
  %v420 = vpop.f32.mrf.mxu0
  %v421 = vadd.f32 %v380, %v420
  %v422 = vpop.f32.mrf.mxu0
  %v423 = vpop.f32.mrf.mxu0
  %v424 = vadd.f32 %v383, %v423
  %v425 = vpop.f32.mrf.mxu0
  %426 = vdwg.mxu0
  %427 = vmatprep.subr.bf16.mxu0 0
  %428 = vmatpush1.bf16.msra.mxu0 0
  %429 = vmatprep.subr.bf16.mxu0 0
  %430 = vmatpush1.bf16.msra.mxu0 0
  %431 = vmatprep.subr.bf16.mxu0 0
  %432 = vmatpush1.bf16.msra.mxu0 0
  %433 = vmatprep.subr.bf16.mxu0 0
  %434 = vmatpush1.bf16.msra.mxu0 0
  %435 = vmatprep.subr.bf16.mxu0 0
  %436 = vmatpush1.bf16.msra.mxu0 %v304
  %437 = vmatprep.subr.bf16.mxu0 0
  %438 = vmatpush1.bf16.msra.mxu0 %v303
  %439 = vmatprep.subr.bf16.mxu0 0
  %440 = vmatpush1.bf16.msra.mxu0 %v302
  %441 = vmatprep.subr.bf16.mxu0 0
  %442 = vmatpush1.bf16.msra.mxu0 %v301
  %443 = vmatprep.subr.bf16.mxu0 0
  %444 = vmatpush2.bf16.msra.mxu0 0
  %445 = vmatprep.subr.bf16.mxu0 0
  %446 = vmatpush2.bf16.msra.mxu0 0
  %447 = vmatprep.subr.bf16.mxu0 0
  %448 = vmatpush2.bf16.msra.mxu0 0
  %449 = vmatprep.subr.bf16.mxu0 0
  %450 = vmatpush2.bf16.msra.mxu0 0
  %451 = vmatprep.subr.bf16.mxu0 0
  %452 = vmatpush2.bf16.msra.mxu0 0
  %453 = vmatprep.subr.bf16.mxu0 0
  %454 = vmatpush2.bf16.msra.mxu0 0
  %455 = vmatprep.subr.bf16.mxu0 0
  %456 = vmatpush2.bf16.msra.mxu0 0
  %457 = vmatprep.subr.bf16.mxu0 0
  %458 = vmatpush2.bf16.msra.mxu0 0
  %459 = vmatprep.mubr.bf16.mxu0 0
  %460 = vmatmul.mubr.bf16.gmra.mxu0 %v343
  %v461 = vpop.f32.mrf.mxu0
  %v462 = vadd.f32 %v421, %v461
  %v463 = vpop.f32.mrf.mxu0
  %v464 = vpop.f32.mrf.mxu0
  %v465 = vadd.f32 %v424, %v464
  %v466 = vpop.f32.mrf.mxu0
  %467 = vdwg.mxu0
  %v468 = vmax.f32 %v462, 0.0
  %v469 = vmax.f32 %v465, 0.0
  %470 = vst [vmem:[%s3] sm:$0xff] %v468
  %471 = vst [vmem:[%s3 + $0x8] sm:$0xff] %v469
  // Predicated region
  $region14: #{vqcae_forward.12} parent=0 // pred_check
    _
  $region15: #{vqcae_forward.12} parent=0 // pred_check_branch
    %473 = sbr.rel (0) target = $region17
  $region16: #{vqcae_forward.12} parent=0 // pred_region
    _
  $region17: #{vqcae_forward.12} parent=0 // pred_fallthru
    _
  // Predicated region
  $region18: #{vqcae_forward.12} parent=0 // pred_check
    _
  $region19: #{vqcae_forward.12} parent=0 // pred_check_branch
    %475 = sbr.rel (0) target = $region21
  $region20: #{vqcae_forward.12} parent=0 // pred_region
    _
  $region21: #{vqcae_forward.12} parent=0 // pred_fallthru
    _

// kernel: vqcae_forward.14
$region0: #{vqcae_forward.14}
  #allocation0 [shape = 'u32[]', space=smem, size = 0x4, offset = 0x4, fixed_abs, tag = 'smem constant byte address 0x4 - core index']
  #allocation1 [shape = 'u32[144,128]{1,0:T(1,128)}', space=vmem, size = 0x12000, scoped, tag = 'internal scratch']
  %s0 = inlined_call_operand.vmem [shape: bf16[16,512], index: 0, kind: input, shape index: {}]
  %s1 = inlined_call_operand.vmem [shape: bf16[512,256], index: 1, kind: input, shape index: {}]
  %s2 = inlined_call_operand.vmem [shape: f32[1,256], index: 2, kind: input, shape index: {}]
  %s3 = inlined_call_operand.vmem [shape: bf16[16,256], index: 3, kind: output, shape index: {}]
  %s4 = sld [smem:[#allocation0]]
  $region22: #{vqcae_forward.14} parent=0
    _
  %s6 = ssub.s32 1, %s4
  %s7 = scalar_select 0, %s6, %s4
  // Predicated region
  $region2: #{vqcae_forward.14} parent=0 // pred_check
    _
  $region3: #{vqcae_forward.14} parent=0 // pred_check_branch
    %9 = sbr.rel (0) target = $region5
  $region4: #{vqcae_forward.14} parent=0 // pred_region
    _
  $region5: #{vqcae_forward.14} parent=0 // pred_fallthru
    _
  // Predicated region
  $region6: #{vqcae_forward.14} parent=0 // pred_check
    _
  $region7: #{vqcae_forward.14} parent=0 // pred_check_branch
    %11 = sbr.rel (0) target = $region9
  $region8: #{vqcae_forward.14} parent=0 // pred_region
    _
  $region9: #{vqcae_forward.14} parent=0 // pred_fallthru
    _
  // Predicated region
  $region10: #{vqcae_forward.14} parent=0 // pred_check
    _
  $region11: #{vqcae_forward.14} parent=0 // pred_check_branch
    %13 = sbr.rel (0) target = $region13
  $region12: #{vqcae_forward.14} parent=0 // pred_region
    _
  $region13: #{vqcae_forward.14} parent=0 // pred_fallthru
    _
  %v14 = vld [vmem:[%s0] sm:$0xff]
  %v15 = vld [vmem:[%s0 + $0x8] sm:$0xff]
  %v16 = vld [vmem:[%s0 + $0x10] sm:$0xff]
  %v17 = vld [vmem:[%s0 + $0x18] sm:$0xff]
  %v18 = vld [vmem:[%s1] sm:$0xff]
  %v19 = vld [vmem:[%s1 + $0x8] sm:$0xff]
  %v20 = vld [vmem:[%s1 + $0x10] sm:$0xff]
  %v21 = vld [vmem:[%s1 + $0x18] sm:$0xff]
  %v22 = vld [vmem:[%s1 + $0x20] sm:$0xff]
  %v23 = vld [vmem:[%s1 + $0x28] sm:$0xff]
  %v24 = vld [vmem:[%s1 + $0x30] sm:$0xff]
  %v25 = vld [vmem:[%s1 + $0x38] sm:$0xff]
  %v26 = vld [vmem:[%s1 + $0x40] sm:$0xff]
  %v27 = vld [vmem:[%s1 + $0x48] sm:$0xff]
  %v28 = vld [vmem:[%s1 + $0x50] sm:$0xff]
  %v29 = vld [vmem:[%s1 + $0x58] sm:$0xff]
  %v30 = vld [vmem:[%s1 + $0x60] sm:$0xff]
  %v31 = vld [vmem:[%s1 + $0x68] sm:$0xff]
  %v32 = vld [vmem:[%s1 + $0x70] sm:$0xff]
  %v33 = vld [vmem:[%s1 + $0x78] sm:$0xff]
  %v34 = vld [vmem:[%s1 + $0x80] sm:$0xff]
  %v35 = vld [vmem:[%s1 + $0x88] sm:$0xff]
  %v36 = vld [vmem:[%s1 + $0x90] sm:$0xff]
  %v37 = vld [vmem:[%s1 + $0x98] sm:$0xff]
  %v38 = vld [vmem:[%s1 + $0xa0] sm:$0xff]
  %v39 = vld [vmem:[%s1 + $0xa8] sm:$0xff]
  %v40 = vld [vmem:[%s1 + $0xb0] sm:$0xff]
  %v41 = vld [vmem:[%s1 + $0xb8] sm:$0xff]
  %v42 = vld [vmem:[%s1 + $0xc0] sm:$0xff]
  %v43 = vld [vmem:[%s1 + $0xc8] sm:$0xff]
  %v44 = vld [vmem:[%s1 + $0xd0] sm:$0xff]
  %v45 = vld [vmem:[%s1 + $0xd8] sm:$0xff]
  %v46 = vld [vmem:[%s1 + $0xe0] sm:$0xff]
  %v47 = vld [vmem:[%s1 + $0xe8] sm:$0xff]
  %v48 = vld [vmem:[%s1 + $0xf0] sm:$0xff]
  %v49 = vld [vmem:[%s1 + $0xf8] sm:$0xff]
  %v50 = vld [vmem:[%s1 + $0x100] sm:$0xff]
  %v51 = vld [vmem:[%s1 + $0x108] sm:$0xff]
  %v52 = vld [vmem:[%s1 + $0x110] sm:$0xff]
  %v53 = vld [vmem:[%s1 + $0x118] sm:$0xff]
  %v54 = vld [vmem:[%s1 + $0x120] sm:$0xff]
  %v55 = vld [vmem:[%s1 + $0x128] sm:$0xff]
  %v56 = vld [vmem:[%s1 + $0x130] sm:$0xff]
  %v57 = vld [vmem:[%s1 + $0x138] sm:$0xff]
  %v58 = vld [vmem:[%s1 + $0x140] sm:$0xff]
  %v59 = vld [vmem:[%s1 + $0x148] sm:$0xff]
  %v60 = vld [vmem:[%s1 + $0x150] sm:$0xff]
  %v61 = vld [vmem:[%s1 + $0x158] sm:$0xff]
  %v62 = vld [vmem:[%s1 + $0x160] sm:$0xff]
  %v63 = vld [vmem:[%s1 + $0x168] sm:$0xff]
  %v64 = vld [vmem:[%s1 + $0x170] sm:$0xff]
  %v65 = vld [vmem:[%s1 + $0x178] sm:$0xff]
  %v66 = vld [vmem:[%s1 + $0x180] sm:$0xff]
  %v67 = vld [vmem:[%s1 + $0x188] sm:$0xff]
  %v68 = vld [vmem:[%s1 + $0x190] sm:$0xff]
  %v69 = vld [vmem:[%s1 + $0x198] sm:$0xff]
  %v70 = vld [vmem:[%s1 + $0x1a0] sm:$0xff]
  %v71 = vld [vmem:[%s1 + $0x1a8] sm:$0xff]
  %v72 = vld [vmem:[%s1 + $0x1b0] sm:$0xff]
  %v73 = vld [vmem:[%s1 + $0x1b8] sm:$0xff]
  %v74 = vld [vmem:[%s1 + $0x1c0] sm:$0xff]
  %v75 = vld [vmem:[%s1 + $0x1c8] sm:$0xff]
  %v76 = vld [vmem:[%s1 + $0x1d0] sm:$0xff]
  %v77 = vld [vmem:[%s1 + $0x1d8] sm:$0xff]
  %v78 = vld [vmem:[%s1 + $0x1e0] sm:$0xff]
  %v79 = vld [vmem:[%s1 + $0x1e8] sm:$0xff]
  %v80 = vld [vmem:[%s1 + $0x1f0] sm:$0xff]
  %v81 = vld [vmem:[%s1 + $0x1f8] sm:$0xff]
  %v82 = vld [vmem:[%s2] sm:$0x3]
  %v84 = vlaneseq
  %v85 = vshrl.u32 %v84, 7
  %v86 = vsub.s32 0, %v85
  %v87 = vrot.slane %v82, %v86
  %v88 = vlaneseq
  %v89 = vshrl.u32 %v88, 7
  %v90 = vsub.s32 1, %v89
  %v91 = vrot.slane %v82, %v90
  %v98 = vunpack.c.l.b16 %v14
  %v99 = vunpack.c.h.b16 %v14
  %v100 = vunpack.c.l.b16 %v15
  %v101 = vunpack.c.h.b16 %v15
  %v102 = vunpack.c.l.b16 %v16
  %v103 = vunpack.c.h.b16 %v16
  %v104 = vunpack.c.l.b16 %v17
  %v105 = vunpack.c.h.b16 %v17
  %v106 = vpack.c.b16 %v102, %v98
  %v107 = vpack.c.b16 %v103, %v99
  %v108 = vpack.c.b16 %v104, %v100
  %v109 = vpack.c.b16 %v105, %v101
  %v178 = vunpack.c.l.b16 %v18
  %v179 = vunpack.c.h.b16 %v18
  %v180 = vunpack.c.l.b16 %v19
  %v181 = vunpack.c.h.b16 %v19
  %v182 = vunpack.c.l.b16 %v20
  %v183 = vunpack.c.h.b16 %v20
  %v184 = vunpack.c.l.b16 %v21
  %v185 = vunpack.c.h.b16 %v21
  %v186 = vunpack.c.l.b16 %v22
  %v187 = vunpack.c.h.b16 %v22
  %v188 = vunpack.c.l.b16 %v23
  %v189 = vunpack.c.h.b16 %v23
  %v190 = vunpack.c.l.b16 %v24
  %v191 = vunpack.c.h.b16 %v24
  %v192 = vunpack.c.l.b16 %v25
  %v193 = vunpack.c.h.b16 %v25
  %v194 = vunpack.c.l.b16 %v26
  %v195 = vunpack.c.h.b16 %v26
  %v196 = vunpack.c.l.b16 %v27
  %v197 = vunpack.c.h.b16 %v27
  %v198 = vunpack.c.l.b16 %v28
  %v199 = vunpack.c.h.b16 %v28
  %v200 = vunpack.c.l.b16 %v29
  %v201 = vunpack.c.h.b16 %v29
  %v202 = vunpack.c.l.b16 %v30
  %v203 = vunpack.c.h.b16 %v30
  %v204 = vunpack.c.l.b16 %v31
  %v205 = vunpack.c.h.b16 %v31
  %v206 = vunpack.c.l.b16 %v32
  %v207 = vunpack.c.h.b16 %v32
  %v208 = vunpack.c.l.b16 %v33
  %v209 = vunpack.c.h.b16 %v33
  %v210 = vunpack.c.l.b16 %v34
  %v211 = vunpack.c.h.b16 %v34
  %v212 = vunpack.c.l.b16 %v35
  %v213 = vunpack.c.h.b16 %v35
  %v214 = vunpack.c.l.b16 %v36
  %v215 = vunpack.c.h.b16 %v36
  %v216 = vunpack.c.l.b16 %v37
  %v217 = vunpack.c.h.b16 %v37
  %v218 = vunpack.c.l.b16 %v38
  %v219 = vunpack.c.h.b16 %v38
  %v220 = vunpack.c.l.b16 %v39
  %v221 = vunpack.c.h.b16 %v39
  %v222 = vunpack.c.l.b16 %v40
  %v223 = vunpack.c.h.b16 %v40
  %v224 = vunpack.c.l.b16 %v41
  %v225 = vunpack.c.h.b16 %v41
  %v226 = vunpack.c.l.b16 %v42
  %v227 = vunpack.c.h.b16 %v42
  %v228 = vunpack.c.l.b16 %v43
  %v229 = vunpack.c.h.b16 %v43
  %v230 = vunpack.c.l.b16 %v44
  %v231 = vunpack.c.h.b16 %v44
  %v232 = vunpack.c.l.b16 %v45
  %v233 = vunpack.c.h.b16 %v45
  %v234 = vunpack.c.l.b16 %v46
  %v235 = vunpack.c.h.b16 %v46
  %v236 = vunpack.c.l.b16 %v47
  %v237 = vunpack.c.h.b16 %v47
  %v238 = vunpack.c.l.b16 %v48
  %v239 = vunpack.c.h.b16 %v48
  %v240 = vunpack.c.l.b16 %v49
  %v241 = vunpack.c.h.b16 %v49
  %v242 = vunpack.c.l.b16 %v50
  %v243 = vunpack.c.h.b16 %v50
  %v244 = vunpack.c.l.b16 %v51
  %v245 = vunpack.c.h.b16 %v51
  %v246 = vunpack.c.l.b16 %v52
  %v247 = vunpack.c.h.b16 %v52
  %v248 = vunpack.c.l.b16 %v53
  %v249 = vunpack.c.h.b16 %v53
  %v250 = vunpack.c.l.b16 %v54
  %v251 = vunpack.c.h.b16 %v54
  %v252 = vunpack.c.l.b16 %v55
  %v253 = vunpack.c.h.b16 %v55
  %v254 = vunpack.c.l.b16 %v56
  %v255 = vunpack.c.h.b16 %v56
  %v256 = vunpack.c.l.b16 %v57
  %v257 = vunpack.c.h.b16 %v57
  %v258 = vunpack.c.l.b16 %v58
  %v259 = vunpack.c.h.b16 %v58
  %v260 = vunpack.c.l.b16 %v59
  %v261 = vunpack.c.h.b16 %v59
  %v262 = vunpack.c.l.b16 %v60
  %v263 = vunpack.c.h.b16 %v60
  %v264 = vunpack.c.l.b16 %v61
  %v265 = vunpack.c.h.b16 %v61
  %v266 = vunpack.c.l.b16 %v62
  %v267 = vunpack.c.h.b16 %v62
  %v268 = vunpack.c.l.b16 %v63
  %v269 = vunpack.c.h.b16 %v63
  %v270 = vunpack.c.l.b16 %v64
  %v271 = vunpack.c.h.b16 %v64
  %v272 = vunpack.c.l.b16 %v65
  %v273 = vunpack.c.h.b16 %v65
  %v274 = vunpack.c.l.b16 %v66
  %v275 = vunpack.c.h.b16 %v66
  %v276 = vunpack.c.l.b16 %v67
  %v277 = vunpack.c.h.b16 %v67
  %v278 = vunpack.c.l.b16 %v68
  %v279 = vunpack.c.h.b16 %v68
  %v280 = vunpack.c.l.b16 %v69
  %v281 = vunpack.c.h.b16 %v69
  %v282 = vunpack.c.l.b16 %v70
  %v283 = vunpack.c.h.b16 %v70
  %v284 = vunpack.c.l.b16 %v71
  %v285 = vunpack.c.h.b16 %v71
  %v286 = vunpack.c.l.b16 %v72
  %v287 = vunpack.c.h.b16 %v72
  %v288 = vunpack.c.l.b16 %v73
  %v289 = vunpack.c.h.b16 %v73
  %v290 = vunpack.c.l.b16 %v74
  %v291 = vunpack.c.h.b16 %v74
  %v292 = vunpack.c.l.b16 %v75
  %v293 = vunpack.c.h.b16 %v75
  %v294 = vunpack.c.l.b16 %v76
  %v295 = vunpack.c.h.b16 %v76
  %v296 = vunpack.c.l.b16 %v77
  %v297 = vunpack.c.h.b16 %v77
  %v298 = vunpack.c.l.b16 %v78
  %v299 = vunpack.c.h.b16 %v78
  %v300 = vunpack.c.l.b16 %v79
  %v301 = vunpack.c.h.b16 %v79
  %v302 = vunpack.c.l.b16 %v80
  %v303 = vunpack.c.h.b16 %v80
  %v304 = vunpack.c.l.b16 %v81
  %v305 = vunpack.c.h.b16 %v81
  %v306 = vpack.c.b16 %v180, %v178
  %v307 = vpack.c.b16 %v181, %v179
  %v308 = vpack.c.b16 %v184, %v182
  %v309 = vpack.c.b16 %v185, %v183
  %v310 = vpack.c.b16 %v188, %v186
  %v311 = vpack.c.b16 %v189, %v187
  %v312 = vpack.c.b16 %v192, %v190
  %v313 = vpack.c.b16 %v193, %v191
  %v314 = vpack.c.b16 %v196, %v194
  %v315 = vpack.c.b16 %v197, %v195
  %v316 = vpack.c.b16 %v200, %v198
  %v317 = vpack.c.b16 %v201, %v199
  %v318 = vpack.c.b16 %v204, %v202
  %v319 = vpack.c.b16 %v205, %v203
  %v320 = vpack.c.b16 %v208, %v206
  %v321 = vpack.c.b16 %v209, %v207
  %v322 = vpack.c.b16 %v212, %v210
  %v323 = vpack.c.b16 %v213, %v211
  %v324 = vpack.c.b16 %v216, %v214
  %v325 = vpack.c.b16 %v217, %v215
  %v326 = vpack.c.b16 %v220, %v218
  %v327 = vpack.c.b16 %v221, %v219
  %v328 = vpack.c.b16 %v224, %v222
  %v329 = vpack.c.b16 %v225, %v223
  %v330 = vpack.c.b16 %v228, %v226
  %v331 = vpack.c.b16 %v229, %v227
  %v332 = vpack.c.b16 %v232, %v230
  %v333 = vpack.c.b16 %v233, %v231
  %v334 = vpack.c.b16 %v236, %v234
  %v335 = vpack.c.b16 %v237, %v235
  %v336 = vpack.c.b16 %v240, %v238
  %v337 = vpack.c.b16 %v241, %v239
  %v338 = vpack.c.b16 %v244, %v242
  %v339 = vpack.c.b16 %v245, %v243
  %v340 = vpack.c.b16 %v248, %v246
  %v341 = vpack.c.b16 %v249, %v247
  %v342 = vpack.c.b16 %v252, %v250
  %v343 = vpack.c.b16 %v253, %v251
  %v344 = vpack.c.b16 %v256, %v254
  %v345 = vpack.c.b16 %v257, %v255
  %v346 = vpack.c.b16 %v260, %v258
  %v347 = vpack.c.b16 %v261, %v259
  %v348 = vpack.c.b16 %v264, %v262
  %v349 = vpack.c.b16 %v265, %v263
  %v350 = vpack.c.b16 %v268, %v266
  %v351 = vpack.c.b16 %v269, %v267
  %v352 = vpack.c.b16 %v272, %v270
  %v353 = vpack.c.b16 %v273, %v271
  %v354 = vpack.c.b16 %v276, %v274
  %v355 = vpack.c.b16 %v277, %v275
  %v356 = vpack.c.b16 %v280, %v278
  %v357 = vpack.c.b16 %v281, %v279
  %v358 = vpack.c.b16 %v284, %v282
  %v359 = vpack.c.b16 %v285, %v283
  %v360 = vpack.c.b16 %v288, %v286
  %v361 = vpack.c.b16 %v289, %v287
  %v362 = vpack.c.b16 %v292, %v290
  %v363 = vpack.c.b16 %v293, %v291
  %v364 = vpack.c.b16 %v296, %v294
  %v365 = vpack.c.b16 %v297, %v295
  %v366 = vpack.c.b16 %v300, %v298
  %v367 = vpack.c.b16 %v301, %v299
  %v368 = vpack.c.b16 %v304, %v302
  %v369 = vpack.c.b16 %v305, %v303
  %434 = vmatprep.subr.bf16.mxu0 %v321
  %435 = vmatpush1.bf16.msra.mxu0 %v320
  %436 = vmatprep.subr.bf16.mxu0 %v319
  %437 = vmatpush1.bf16.msra.mxu0 %v318
  %438 = vmatprep.subr.bf16.mxu0 %v317
  %439 = vmatpush1.bf16.msra.mxu0 %v316
  %440 = vmatprep.subr.bf16.mxu0 %v315
  %441 = vmatpush1.bf16.msra.mxu0 %v314
  %442 = vmatprep.subr.bf16.mxu0 %v313
  %443 = vmatpush1.bf16.msra.mxu0 %v312
  %444 = vmatprep.subr.bf16.mxu0 %v311
  %445 = vmatpush1.bf16.msra.mxu0 %v310
  %446 = vmatprep.subr.bf16.mxu0 %v309
  %447 = vmatpush1.bf16.msra.mxu0 %v308
  %448 = vmatprep.subr.bf16.mxu0 %v307
  %449 = vmatpush1.bf16.msra.mxu0 %v306
  %450 = vmatprep.subr.bf16.mxu0 %v337
  %451 = vmatpush2.bf16.msra.mxu0 %v336
  %452 = vmatprep.subr.bf16.mxu0 %v335
  %453 = vmatpush2.bf16.msra.mxu0 %v334
  %454 = vmatprep.subr.bf16.mxu0 %v333
  %455 = vmatpush2.bf16.msra.mxu0 %v332
  %456 = vmatprep.subr.bf16.mxu0 %v331
  %457 = vmatpush2.bf16.msra.mxu0 %v330
  %458 = vmatprep.subr.bf16.mxu0 %v329
  %459 = vmatpush2.bf16.msra.mxu0 %v328
  %460 = vmatprep.subr.bf16.mxu0 %v327
  %461 = vmatpush2.bf16.msra.mxu0 %v326
  %462 = vmatprep.subr.bf16.mxu0 %v325
  %463 = vmatpush2.bf16.msra.mxu0 %v324
  %464 = vmatprep.subr.bf16.mxu0 %v323
  %465 = vmatpush2.bf16.msra.mxu0 %v322
  %466 = vmatprep.mubr.bf16.mxu0 %v107
  %467 = vmatmul.mubr.bf16.gmra.mxu0 %v106
  %v468 = vpop.f32.mrf.mxu0
  %v469 = vadd.f32 %v87, %v468
  %v470 = vpop.f32.mrf.mxu0
  %v471 = vadd.f32 %v91, %v470
  %v472 = vpop.f32.mrf.mxu0
  %v473 = vadd.f32 %v87, %v472
  %v474 = vpop.f32.mrf.mxu0
  %v475 = vadd.f32 %v91, %v474
  %476 = vdwg.mxu0
  %477 = vmatprep.subr.bf16.mxu0 %v353
  %478 = vmatpush1.bf16.msra.mxu0 %v352
  %479 = vmatprep.subr.bf16.mxu0 %v351
  %480 = vmatpush1.bf16.msra.mxu0 %v350
  %481 = vmatprep.subr.bf16.mxu0 %v349
  %482 = vmatpush1.bf16.msra.mxu0 %v348
  %483 = vmatprep.subr.bf16.mxu0 %v347
  %484 = vmatpush1.bf16.msra.mxu0 %v346
  %485 = vmatprep.subr.bf16.mxu0 %v345
  %486 = vmatpush1.bf16.msra.mxu0 %v344
  %487 = vmatprep.subr.bf16.mxu0 %v343
  %488 = vmatpush1.bf16.msra.mxu0 %v342
  %489 = vmatprep.subr.bf16.mxu0 %v341
  %490 = vmatpush1.bf16.msra.mxu0 %v340
  %491 = vmatprep.subr.bf16.mxu0 %v339
  %492 = vmatpush1.bf16.msra.mxu0 %v338
  %493 = vmatprep.subr.bf16.mxu0 %v369
  %494 = vmatpush2.bf16.msra.mxu0 %v368
  %495 = vmatprep.subr.bf16.mxu0 %v367
  %496 = vmatpush2.bf16.msra.mxu0 %v366
  %497 = vmatprep.subr.bf16.mxu0 %v365
  %498 = vmatpush2.bf16.msra.mxu0 %v364
  %499 = vmatprep.subr.bf16.mxu0 %v363
  %500 = vmatpush2.bf16.msra.mxu0 %v362
  %501 = vmatprep.subr.bf16.mxu0 %v361
  %502 = vmatpush2.bf16.msra.mxu0 %v360
  %503 = vmatprep.subr.bf16.mxu0 %v359
  %504 = vmatpush2.bf16.msra.mxu0 %v358
  %505 = vmatprep.subr.bf16.mxu0 %v357
  %506 = vmatpush2.bf16.msra.mxu0 %v356
  %507 = vmatprep.subr.bf16.mxu0 %v355
  %508 = vmatpush2.bf16.msra.mxu0 %v354
  %509 = vmatprep.mubr.bf16.mxu0 %v109
  %510 = vmatmul.mubr.bf16.gmra.mxu0 %v108
  %v511 = vpop.f32.mrf.mxu0
  %v512 = vadd.f32 %v469, %v511
  %v513 = vpop.f32.mrf.mxu0
  %v514 = vadd.f32 %v471, %v513
  %v515 = vpop.f32.mrf.mxu0
  %v516 = vadd.f32 %v473, %v515
  %v517 = vpop.f32.mrf.mxu0
  %v518 = vadd.f32 %v475, %v517
  %519 = vdwg.mxu0
  %v520 = vmax.f32 %v512, 0.0
  %v521 = vmax.f32 %v514, 0.0
  %v522 = vmax.f32 %v516, 0.0
  %v523 = vmax.f32 %v518, 0.0
  %v524 = vpack.c.bf16 %v522, %v520
  %v525 = vpack.c.bf16 %v523, %v521
  %v528 = vunpack.c.l.b16 %v524
  %v529 = vunpack.c.l.b16 %v525
  %v530 = vunpack.c.h.b16 %v524
  %v531 = vunpack.c.h.b16 %v525
  %v532 = vpack.c.b16 %v529, %v528
  %v533 = vpack.c.b16 %v531, %v530
  %536 = vst [vmem:[%s3] sm:$0xff] %v532
  %537 = vst [vmem:[%s3 + $0x8] sm:$0xff] %v533
  // Predicated region
  $region14: #{vqcae_forward.14} parent=0 // pred_check
    _
  $region15: #{vqcae_forward.14} parent=0 // pred_check_branch
    %539 = sbr.rel (0) target = $region17
  $region16: #{vqcae_forward.14} parent=0 // pred_region
    _
  $region17: #{vqcae_forward.14} parent=0 // pred_fallthru
    _
  // Predicated region
  $region18: #{vqcae_forward.14} parent=0 // pred_check
    _
  $region19: #{vqcae_forward.14} parent=0 // pred_check_branch
    %541 = sbr.rel (0) target = $region21
  $region20: #{vqcae_forward.14} parent=0 // pred_region
    _
  $region21: #{vqcae_forward.14} parent=0 // pred_fallthru
    _

// kernel: vqcae_forward.13
$region0: #{vqcae_forward.13}
  #allocation0 [shape = 'u32[]', space=smem, size = 0x4, offset = 0x4, fixed_abs, tag = 'smem constant byte address 0x4 - core index']
  #allocation1 [shape = 'u32[144,128]{1,0:T(1,128)}', space=vmem, size = 0x12000, scoped, tag = 'internal scratch']
  %s0 = inlined_call_operand.vmem [shape: f32[8,128], index: 0, kind: input, shape index: {}]
  %s1 = inlined_call_operand.vmem [shape: f32[128,128], index: 1, kind: input, shape index: {}]
  %s2 = inlined_call_operand.vmem [shape: f32[1,128], index: 2, kind: input, shape index: {}]
  %s3 = inlined_call_operand.vmem [shape: f32[8,128], index: 3, kind: output, shape index: {0}]
  %s4 = inlined_call_operand.hbm [shape: s32[8,1], index: 4, kind: output, shape index: {1}]
  %s5 = inlined_call_operand.hbm [shape: f32[1,1], index: 5, kind: output, shape index: {2}]
  %6 = xla_tuple %s3, %s4, %s5
  %s7 = sld [smem:[#allocation0]]
  $region38: #{vqcae_forward.13} parent=0
    _
  %s9 = ssub.s32 1, %s7
  %s10 = scalar_select 0, %s9, %s7
  $region1: #{vqcae_forward.13} parent=0
    #allocation2 [shape = 'u8[4096]{0}', space=vmem, size = 0x1000, scoped, tag = 'output window, operand 1, single buffered']
    #allocation3 [shape = 's32[1]{0}', space=sflag, size = 0x4, scoped, tag = 'scoped memory for vqcae_forward.13']
    #allocation4 [shape = 's32[1]{0}', space=sflag, size = 0x4, scoped, tag = 'scoped memory for vqcae_forward.13']
    #allocation5 [shape = 'u8[512]{0}', space=smem, size = 0x200, scoped, tag = 'output window, operand 2, single buffered']
    %11 = vsyncpa [#allocation3], 0
    %12 = vsyncpa [#allocation4], 0
    // Predicated region
    $region2: #{vqcae_forward.13} parent=1 // pred_check
      _
    $region3: #{vqcae_forward.13} parent=1 // pred_check_branch
      %14 = sbr.rel (0) target = $region5
    $region4: #{vqcae_forward.13} parent=1 // pred_region
      _
    $region5: #{vqcae_forward.13} parent=1 // pred_fallthru
      _
    // Predicated region
    $region6: #{vqcae_forward.13} parent=1 // pred_check
      _
    $region7: #{vqcae_forward.13} parent=1 // pred_check_branch
      %16 = sbr.rel (0) target = $region9
    $region8: #{vqcae_forward.13} parent=1 // pred_region
      _
    $region9: #{vqcae_forward.13} parent=1 // pred_fallthru
      _
    // Predicated region
    $region10: #{vqcae_forward.13} parent=1 // pred_check
      _
    $region11: #{vqcae_forward.13} parent=1 // pred_check_branch
      %18 = sbr.rel (0) target = $region13
    $region12: #{vqcae_forward.13} parent=1 // pred_region
      _
    $region13: #{vqcae_forward.13} parent=1 // pred_fallthru
      _
    %v20 = vld [vmem:[%s0] sm:$0xff]
    %v21 = vld [vmem:[%s1] sm:$0xff]
    %v22 = vld [vmem:[%s1 + $0x8] sm:$0xff]
    %v23 = vld [vmem:[%s1 + $0x10] sm:$0xff]
    %v24 = vld [vmem:[%s1 + $0x18] sm:$0xff]
    %v25 = vld [vmem:[%s1 + $0x20] sm:$0xff]
    %v26 = vld [vmem:[%s1 + $0x28] sm:$0xff]
    %v27 = vld [vmem:[%s1 + $0x30] sm:$0xff]
    %v28 = vld [vmem:[%s1 + $0x38] sm:$0xff]
    %v29 = vld [vmem:[%s1 + $0x40] sm:$0xff]
    %v30 = vld [vmem:[%s1 + $0x48] sm:$0xff]
    %v31 = vld [vmem:[%s1 + $0x50] sm:$0xff]
    %v32 = vld [vmem:[%s1 + $0x58] sm:$0xff]
    %v33 = vld [vmem:[%s1 + $0x60] sm:$0xff]
    %v34 = vld [vmem:[%s1 + $0x68] sm:$0xff]
    %v35 = vld [vmem:[%s1 + $0x70] sm:$0xff]
    %v36 = vld [vmem:[%s1 + $0x78] sm:$0xff]
    %v37 = vpack.c.bf16 %v20, %v20
    %v38 = vpack.c.bf16 %v22, %v21
    %v39 = vpack.c.bf16 %v24, %v23
    %v40 = vpack.c.bf16 %v26, %v25
    %v41 = vpack.c.bf16 %v28, %v27
    %v42 = vpack.c.bf16 %v30, %v29
    %v43 = vpack.c.bf16 %v32, %v31
    %v44 = vpack.c.bf16 %v34, %v33
    %v45 = vpack.c.bf16 %v36, %v35
    %46 = vmatprep.subr.bf16.mxu0 0
    %47 = vmatpush1.bf16.xpose.msra.mxu0 %v45
    %48 = vmatprep.subr.bf16.mxu0 0
    %49 = vmatpush1.bf16.xpose.msra.mxu0 %v44
    %50 = vmatprep.subr.bf16.mxu0 0
    %51 = vmatpush1.bf16.xpose.msra.mxu0 %v43
    %52 = vmatprep.subr.bf16.mxu0 0
    %53 = vmatpush1.bf16.xpose.msra.mxu0 %v42
    %54 = vmatprep.subr.bf16.mxu0 0
    %55 = vmatpush1.bf16.xpose.msra.mxu0 %v41
    %56 = vmatprep.subr.bf16.mxu0 0
    %57 = vmatpush1.bf16.xpose.msra.mxu0 %v40
    %58 = vmatprep.subr.bf16.mxu0 0
    %59 = vmatpush1.bf16.xpose.msra.mxu0 %v39
    %60 = vmatprep.subr.bf16.mxu0 0
    %61 = vmatpush1.bf16.xpose.msra.mxu0 %v38
    %62 = vmatprep.subr.bf16.mxu0 0
    %63 = vmatpush2.bf16.xpose.msra.mxu0 0
    %64 = vmatprep.subr.bf16.mxu0 0
    %65 = vmatpush2.bf16.xpose.msra.mxu0 0
    %66 = vmatprep.subr.bf16.mxu0 0
    %67 = vmatpush2.bf16.xpose.msra.mxu0 0
    %68 = vmatprep.subr.bf16.mxu0 0
    %69 = vmatpush2.bf16.xpose.msra.mxu0 0
    %70 = vmatprep.subr.bf16.mxu0 0
    %71 = vmatpush2.bf16.xpose.msra.mxu0 0
    %72 = vmatprep.subr.bf16.mxu0 0
    %73 = vmatpush2.bf16.xpose.msra.mxu0 0
    %74 = vmatprep.subr.bf16.mxu0 0
    %75 = vmatpush2.bf16.xpose.msra.mxu0 0
    %76 = vmatprep.subr.bf16.mxu0 0
    %77 = vmatpush2.bf16.xpose.msra.mxu0 0
    %78 = vmatprep.mubr.bf16.mxu0 0
    %79 = vmatmul.mubr.bf16.gmra.mxu0 %v37
    %v80 = vpop.f32.mrf.mxu0
    %v81 = vadd.f32 0.0, %v80
    %v82 = vpop.f32.mrf.mxu0
    %v83 = vpop.f32.mrf.mxu0
    %v84 = vpop.f32.mrf.mxu0
    %85 = vdwg.mxu0
    %v86 = vld [vmem:[%s2] sm:$0x1]
    %v87 = vmul.f32 %v81, 2.0
    %v89 = vlaneseq
    %v90 = vshrl.u32 %v89, 7
    %v91 = vsub.s32 0, %v90
    %v92 = vrot.slane %v86, %v91
    %v94 = vsub.f32 %v92, %v87
    %95 = vmin.xlane.f32.xlu0 %v94
    %v96 = vpop.xlane.xlu0 %95
    %v97 = vlaneseq
    %v98 = vand.u32 %v97, 127
    %vm99 = vcmp.eq.f32.partialorder %v94, %v96
    %v100 = vsel %vm99, %v98, 128
    %v101 = vand.u32 %v100, 65535
    %v102 = vshra.s32 %v100, 16
    %v103 = vcvt.s32.f32 %v101
    %v104 = vcvt.s32.f32 %v102
    %105 = vmin.xlane.f32.xlu0 %v104
    %v106 = vpop.xlane.xlu0 %105
    %vm107 = vcmp.eq.f32.partialorder %v104, %v106
    %v108 = vsel %vm107, %v103, inf
    %109 = vmin.xlane.f32.xlu0 %v108
    %v110 = vpop.xlane.xlu0 %109
    %v111 = vcvt.f32.s32 %v110
    %v112 = vcvt.f32.s32 %v106
    %v113 = vshll.u32 %v112, 16
    %v114 = vadd.s32 %v113, %v111
    %vm115 = vcmp.eq.s32.totalorder %v98, %v114
    %v116 = vsel %vm115, 1, 0
    %v117 = vcvt.s32.f32 %v116
    %118 = vmatprep.subr.mxu0 0.0
    %119 = vmatpush1.msra.mxu0 %v36
    %120 = vmatprep.subr.mxu0 0.0
    %121 = vmatpush1.msra.mxu0 %v35
    %122 = vmatprep.subr.mxu0 0.0
    %123 = vmatpush1.msra.mxu0 %v34
    %124 = vmatprep.subr.mxu0 0.0
    %125 = vmatpush1.msra.mxu0 %v33
    %126 = vmatprep.subr.mxu0 0.0
    %127 = vmatpush1.msra.mxu0 %v32
    %128 = vmatprep.subr.mxu0 0.0
    %129 = vmatpush1.msra.mxu0 %v31
    %130 = vmatprep.subr.mxu0 0.0
    %131 = vmatpush1.msra.mxu0 %v30
    %132 = vmatprep.subr.mxu0 0.0
    %133 = vmatpush1.msra.mxu0 %v29
    %134 = vmatprep.subr.mxu0 0.0
    %135 = vmatpush1.msra.mxu0 %v28
    %136 = vmatprep.subr.mxu0 0.0
    %137 = vmatpush1.msra.mxu0 %v27
    %138 = vmatprep.subr.mxu0 0.0
    %139 = vmatpush1.msra.mxu0 %v26
    %140 = vmatprep.subr.mxu0 0.0
    %141 = vmatpush1.msra.mxu0 %v25
    %142 = vmatprep.subr.mxu0 0.0
    %143 = vmatpush1.msra.mxu0 %v24
    %144 = vmatprep.subr.mxu0 0.0
    %145 = vmatpush1.msra.mxu0 %v23
    %146 = vmatprep.subr.mxu0 0.0
    %147 = vmatpush1.msra.mxu0 %v22
    %148 = vmatprep.subr.mxu0 0.0
    %149 = vmatpush1.msra.mxu0 %v21
    %150 = vmatprep.subr.mxu0 0.0
    %151 = vmatpush2.msra.mxu0 0.0
    %152 = vmatprep.subr.mxu0 0.0
    %153 = vmatpush2.msra.mxu0 0.0
    %154 = vmatprep.subr.mxu0 0.0
    %155 = vmatpush2.msra.mxu0 0.0
    %156 = vmatprep.subr.mxu0 0.0
    %157 = vmatpush2.msra.mxu0 0.0
    %158 = vmatprep.subr.mxu0 0.0
    %159 = vmatpush2.msra.mxu0 0.0
    %160 = vmatprep.subr.mxu0 0.0
    %161 = vmatpush2.msra.mxu0 0.0
    %162 = vmatprep.subr.mxu0 0.0
    %163 = vmatpush2.msra.mxu0 0.0
    %164 = vmatprep.subr.mxu0 0.0
    %165 = vmatpush2.msra.mxu0 0.0
    %166 = vmatprep.subr.mxu0 0.0
    %167 = vmatpush2.msra.mxu0 0.0
    %168 = vmatprep.subr.mxu0 0.0
    %169 = vmatpush2.msra.mxu0 0.0
    %170 = vmatprep.subr.mxu0 0.0
    %171 = vmatpush2.msra.mxu0 0.0
    %172 = vmatprep.subr.mxu0 0.0
    %173 = vmatpush2.msra.mxu0 0.0
    %174 = vmatprep.subr.mxu0 0.0
    %175 = vmatpush2.msra.mxu0 0.0
    %176 = vmatprep.subr.mxu0 0.0
    %177 = vmatpush2.msra.mxu0 0.0
    %178 = vmatprep.subr.mxu0 0.0
    %179 = vmatpush2.msra.mxu0 0.0
    %180 = vmatprep.subr.mxu0 0.0
    %181 = vmatpush2.msra.mxu0 0.0
    %182 = vmatprep.mubr.f32.mxu0 0.0
    %183 = vmatmul.mubr.f32.gmra.mxu0 %v117
    %v184 = vpop.f32.mrf.mxu0
    %v185 = vadd.f32 0.0, %v184
    %v186 = vpop.f32.mrf.mxu0
    %187 = vdwg.mxu0
    %188 = vst [vmem:[%s3] sm:$0xff] %v185
    %vm189 = vcmask 7168
    %190 = vst.msk [vmem:[#allocation2] sm:$0xff] %vm189, %v114
    %s191 = smul.u32 0, 8
    %v192 = vlaneseq
    %v193 = vshrl.u32 %v192, 7
    %v194 = vstv %s191
    %v195 = vadd.s32 %v194, %v193
    %vm196 = vcmp.lt.s32.totalorder %v195, 8
    %v197 = vsel %vm196, 1, 0
    %v198 = vcvt.s32.f32 %v197
    %v199 = vsub.f32 %v185, %v20
    %v200 = vmul.f32 %v199, %v199
    %v201 = vmul.f32 %v198, %v200
    %202 = vadd.xlane.f32.xlu0 %v201
    %v203 = vpop.xlane.xlu0 %202
    %v204 = vrot.slane %v203, 4
    %v205 = vadd.f32 %v203, %v204
    %v206 = vrot.slane %v205, 2
    %v207 = vadd.f32 %v205, %v206
    %v208 = vrot.slane %v207, 1
    %v209 = vadd.f32 %v207, %v208
    %s210 = vtos %v209
    %s211 = scalar_lea.smem [#allocation5], 0
    %212 = sst [smem:[%s211]] %s210
    // Predicated region
    $region14: #{vqcae_forward.13} parent=1 // pred_check
      _
    $region15: #{vqcae_forward.13} parent=1 // pred_check_branch
      %214 = sbr.rel (0) target = $region17
    $region16: #{vqcae_forward.13} parent=1 // pred_region
      _
    $region17: #{vqcae_forward.13} parent=1 // pred_fallthru
      _
    // Predicated region
    $region18: #{vqcae_forward.13} parent=1 // pred_check
      _
    $region19: #{vqcae_forward.13} parent=1 // pred_check_branch
      %216 = sbr.rel (0) target = $region21
    $region20: #{vqcae_forward.13} parent=1 // pred_region
      %s218 = ssub.s32 128, 128
      %219 = vsyncadd [#allocation3], %s218
      %s221 = sshll.u32 [#allocation2], 4
      %s222 = int_to_ptr.vmem [resolvable:$true] %s221
      %224 = dma.vmem_to_hbm [thread:$0]  %s222, 128, %s4, [#allocation3]
    $region21: #{vqcae_forward.13} parent=1 // pred_fallthru
      _
    // Predicated region
    $region22: #{vqcae_forward.13} parent=1 // pred_check
      _
    $region23: #{vqcae_forward.13} parent=1 // pred_check_branch
      %226 = sbr.rel (0) target = $region25
    $region24: #{vqcae_forward.13} parent=1 // pred_region
      %s228 = ssub.s32 16, 16
      %229 = vsyncadd [#allocation4], %s228
      %232 = dma.smem_to_hbm [#allocation5], 16, %s5, [#allocation4]
    $region25: #{vqcae_forward.13} parent=1 // pred_fallthru
      _
    // Predicated region
    $region26: #{vqcae_forward.13} parent=1 // pred_check
      _
    $region27: #{vqcae_forward.13} parent=1 // pred_check_branch
      %234 = sbr.rel (0) target = $region29
    $region28: #{vqcae_forward.13} parent=1 // pred_region
      _
    $region29: #{vqcae_forward.13} parent=1 // pred_fallthru
      _
    // Predicated region
    $region30: #{vqcae_forward.13} parent=1 // pred_check
      _
    $region31: #{vqcae_forward.13} parent=1 // pred_check_branch
      %236 = sbr.rel (0) target = $region33
    $region32: #{vqcae_forward.13} parent=1 // pred_region
      %237 = dma.done [#allocation3], 128
    $region33: #{vqcae_forward.13} parent=1 // pred_fallthru
      _
    // Predicated region
    $region34: #{vqcae_forward.13} parent=1 // pred_check
      _
    $region35: #{vqcae_forward.13} parent=1 // pred_check_branch
      %239 = sbr.rel (0) target = $region37
    $region36: #{vqcae_forward.13} parent=1 // pred_region
      %240 = dma.done [#allocation4], 16
    $region37: #{vqcae_forward.13} parent=1 // pred_fallthru
      _
    %241 = sfence
    %242 = vsyncpa [#allocation3], 1
    %243 = vsyncpa [#allocation4], 1

// kernel: vqcae_forward.15
$region0: #{vqcae_forward.15}
  #allocation0 [shape = 'u32[]', space=smem, size = 0x4, offset = 0x4, fixed_abs, tag = 'smem constant byte address 0x4 - core index']
  #allocation1 [shape = 'u32[144,128]{1,0:T(1,128)}', space=vmem, size = 0x12000, scoped, tag = 'internal scratch']
  %s0 = inlined_call_operand.vmem [shape: bf16[32,256], index: 0, kind: input, shape index: {}]
  %s1 = inlined_call_operand.vmem [shape: bf16[256,128], index: 1, kind: input, shape index: {}]
  %s2 = inlined_call_operand.vmem [shape: f32[1,128], index: 2, kind: input, shape index: {}]
  %s3 = inlined_call_operand.vmem [shape: bf16[32,128], index: 3, kind: output, shape index: {}]
  %s4 = sld [smem:[#allocation0]]
  $region22: #{vqcae_forward.15} parent=0
    _
  %s6 = ssub.s32 1, %s4
  %s7 = scalar_select 0, %s6, %s4
  // Predicated region
  $region2: #{vqcae_forward.15} parent=0 // pred_check
    _
  $region3: #{vqcae_forward.15} parent=0 // pred_check_branch
    %9 = sbr.rel (0) target = $region5
  $region4: #{vqcae_forward.15} parent=0 // pred_region
    _
  $region5: #{vqcae_forward.15} parent=0 // pred_fallthru
    _
  // Predicated region
  $region6: #{vqcae_forward.15} parent=0 // pred_check
    _
  $region7: #{vqcae_forward.15} parent=0 // pred_check_branch
    %11 = sbr.rel (0) target = $region9
  $region8: #{vqcae_forward.15} parent=0 // pred_region
    _
  $region9: #{vqcae_forward.15} parent=0 // pred_fallthru
    _
  // Predicated region
  $region10: #{vqcae_forward.15} parent=0 // pred_check
    _
  $region11: #{vqcae_forward.15} parent=0 // pred_check_branch
    %13 = sbr.rel (0) target = $region13
  $region12: #{vqcae_forward.15} parent=0 // pred_region
    _
  $region13: #{vqcae_forward.15} parent=0 // pred_fallthru
    _
  %v15 = vld [vmem:[%s0] sm:$0xff]
  %v16 = vld [vmem:[%s0 + $0x8] sm:$0xff]
  %v17 = vld [vmem:[%s0 + $0x10] sm:$0xff]
  %v18 = vld [vmem:[%s0 + $0x18] sm:$0xff]
  %v19 = vld [vmem:[%s1] sm:$0xf]
  %v20 = vld [vmem:[%s1 + $0x4] sm:$0xf]
  %v21 = vld [vmem:[%s1 + $0x8] sm:$0xf]
  %v22 = vld [vmem:[%s1 + $0xc] sm:$0xf]
  %v23 = vld [vmem:[%s1 + $0x10] sm:$0xf]
  %v24 = vld [vmem:[%s1 + $0x14] sm:$0xf]
  %v25 = vld [vmem:[%s1 + $0x18] sm:$0xf]
  %v26 = vld [vmem:[%s1 + $0x1c] sm:$0xf]
  %v27 = vld [vmem:[%s1 + $0x20] sm:$0xf]
  %v28 = vld [vmem:[%s1 + $0x24] sm:$0xf]
  %v29 = vld [vmem:[%s1 + $0x28] sm:$0xf]
  %v30 = vld [vmem:[%s1 + $0x2c] sm:$0xf]
  %v31 = vld [vmem:[%s1 + $0x30] sm:$0xf]
  %v32 = vld [vmem:[%s1 + $0x34] sm:$0xf]
  %v33 = vld [vmem:[%s1 + $0x38] sm:$0xf]
  %v34 = vld [vmem:[%s1 + $0x3c] sm:$0xf]
  %v35 = vld [vmem:[%s1 + $0x40] sm:$0xf]
  %v36 = vld [vmem:[%s1 + $0x44] sm:$0xf]
  %v37 = vld [vmem:[%s1 + $0x48] sm:$0xf]
  %v38 = vld [vmem:[%s1 + $0x4c] sm:$0xf]
  %v39 = vld [vmem:[%s1 + $0x50] sm:$0xf]
  %v40 = vld [vmem:[%s1 + $0x54] sm:$0xf]
  %v41 = vld [vmem:[%s1 + $0x58] sm:$0xf]
  %v42 = vld [vmem:[%s1 + $0x5c] sm:$0xf]
  %v43 = vld [vmem:[%s1 + $0x60] sm:$0xf]
  %v44 = vld [vmem:[%s1 + $0x64] sm:$0xf]
  %v45 = vld [vmem:[%s1 + $0x68] sm:$0xf]
  %v46 = vld [vmem:[%s1 + $0x6c] sm:$0xf]
  %v47 = vld [vmem:[%s1 + $0x70] sm:$0xf]
  %v48 = vld [vmem:[%s1 + $0x74] sm:$0xf]
  %v49 = vld [vmem:[%s1 + $0x78] sm:$0xf]
  %v50 = vld [vmem:[%s1 + $0x7c] sm:$0xf]
  %v51 = vld [vmem:[%s2] sm:$0x1]
  %v53 = vlaneseq
  %v54 = vshrl.u32 %v53, 7
  %v55 = vsub.s32 0, %v54
  %v56 = vrot.slane %v51, %v55
  %v62 = vunpack.c.l.b16 %v15
  %v63 = vunpack.c.h.b16 %v15
  %v64 = vunpack.c.l.b16 %v16
  %v65 = vunpack.c.h.b16 %v16
  %v66 = vunpack.c.l.b16 %v17
  %v67 = vunpack.c.h.b16 %v17
  %v68 = vunpack.c.l.b16 %v18
  %v69 = vunpack.c.h.b16 %v18
  %v70 = vpack.c.b16 %v64, %v62
  %v71 = vpack.c.b16 %v65, %v63
  %v72 = vpack.c.b16 %v68, %v66
  %v73 = vpack.c.b16 %v69, %v67
  %v110 = vunpack.c.l.b16 %v19
  %v111 = vunpack.c.l.b16 %v20
  %v112 = vunpack.c.l.b16 %v21
  %v113 = vunpack.c.l.b16 %v22
  %v114 = vunpack.c.l.b16 %v23
  %v115 = vunpack.c.l.b16 %v24
  %v116 = vunpack.c.l.b16 %v25
  %v117 = vunpack.c.l.b16 %v26
  %v118 = vunpack.c.l.b16 %v27
  %v119 = vunpack.c.l.b16 %v28
  %v120 = vunpack.c.l.b16 %v29
  %v121 = vunpack.c.l.b16 %v30
  %v122 = vunpack.c.l.b16 %v31
  %v123 = vunpack.c.l.b16 %v32
  %v124 = vunpack.c.l.b16 %v33
  %v125 = vunpack.c.l.b16 %v34
  %v126 = vunpack.c.l.b16 %v35
  %v127 = vunpack.c.l.b16 %v36
  %v128 = vunpack.c.l.b16 %v37
  %v129 = vunpack.c.l.b16 %v38
  %v130 = vunpack.c.l.b16 %v39
  %v131 = vunpack.c.l.b16 %v40
  %v132 = vunpack.c.l.b16 %v41
  %v133 = vunpack.c.l.b16 %v42
  %v134 = vunpack.c.l.b16 %v43
  %v135 = vunpack.c.l.b16 %v44
  %v136 = vunpack.c.l.b16 %v45
  %v137 = vunpack.c.l.b16 %v46
  %v138 = vunpack.c.l.b16 %v47
  %v139 = vunpack.c.l.b16 %v48
  %v140 = vunpack.c.l.b16 %v49
  %v141 = vunpack.c.l.b16 %v50
  %v142 = vpack.c.b16 %v111, %v110
  %v143 = vpack.c.b16 %v113, %v112
  %v144 = vpack.c.b16 %v115, %v114
  %v145 = vpack.c.b16 %v117, %v116
  %v146 = vpack.c.b16 %v119, %v118
  %v147 = vpack.c.b16 %v121, %v120
  %v148 = vpack.c.b16 %v123, %v122
  %v149 = vpack.c.b16 %v125, %v124
  %v150 = vpack.c.b16 %v127, %v126
  %v151 = vpack.c.b16 %v129, %v128
  %v152 = vpack.c.b16 %v131, %v130
  %v153 = vpack.c.b16 %v133, %v132
  %v154 = vpack.c.b16 %v135, %v134
  %v155 = vpack.c.b16 %v137, %v136
  %v156 = vpack.c.b16 %v139, %v138
  %v157 = vpack.c.b16 %v141, %v140
  %174 = vmatprep.subr.bf16.mxu0 0
  %175 = vmatpush1.bf16.msra.mxu0 %v149
  %176 = vmatprep.subr.bf16.mxu0 0
  %177 = vmatpush1.bf16.msra.mxu0 %v148
  %178 = vmatprep.subr.bf16.mxu0 0
  %179 = vmatpush1.bf16.msra.mxu0 %v147
  %180 = vmatprep.subr.bf16.mxu0 0
  %181 = vmatpush1.bf16.msra.mxu0 %v146
  %182 = vmatprep.subr.bf16.mxu0 0
  %183 = vmatpush1.bf16.msra.mxu0 %v145
  %184 = vmatprep.subr.bf16.mxu0 0
  %185 = vmatpush1.bf16.msra.mxu0 %v144
  %186 = vmatprep.subr.bf16.mxu0 0
  %187 = vmatpush1.bf16.msra.mxu0 %v143
  %188 = vmatprep.subr.bf16.mxu0 0
  %189 = vmatpush1.bf16.msra.mxu0 %v142
  %190 = vmatprep.subr.bf16.mxu0 0
  %191 = vmatpush2.bf16.msra.mxu0 %v157
  %192 = vmatprep.subr.bf16.mxu0 0
  %193 = vmatpush2.bf16.msra.mxu0 %v156
  %194 = vmatprep.subr.bf16.mxu0 0
  %195 = vmatpush2.bf16.msra.mxu0 %v155
  %196 = vmatprep.subr.bf16.mxu0 0
  %197 = vmatpush2.bf16.msra.mxu0 %v154
  %198 = vmatprep.subr.bf16.mxu0 0
  %199 = vmatpush2.bf16.msra.mxu0 %v153
  %200 = vmatprep.subr.bf16.mxu0 0
  %201 = vmatpush2.bf16.msra.mxu0 %v152
  %202 = vmatprep.subr.bf16.mxu0 0
  %203 = vmatpush2.bf16.msra.mxu0 %v151
  %204 = vmatprep.subr.bf16.mxu0 0
  %205 = vmatpush2.bf16.msra.mxu0 %v150
  %206 = vmatprep.mubr.bf16.mxu0 %v71
  %207 = vmatmul.mubr.bf16.gmra.mxu0 %v70
  %v208 = vpop.f32.mrf.mxu0
  %v209 = vadd.f32 %v56, %v208
  %v210 = vpop.f32.mrf.mxu0
  %v211 = vpop.f32.mrf.mxu0
  %v212 = vadd.f32 %v56, %v211
  %v213 = vpop.f32.mrf.mxu0
  %214 = vmatprep.mubr.bf16.mxu0 %v73
  %215 = vmatmul.mubr.bf16.gmra.mxu0 %v72
  %v216 = vpop.f32.mrf.mxu0
  %v217 = vadd.f32 %v56, %v216
  %v218 = vpop.f32.mrf.mxu0
  %v219 = vpop.f32.mrf.mxu0
  %v220 = vadd.f32 %v56, %v219
  %v221 = vpop.f32.mrf.mxu0
  %222 = vdwg.mxu0
  %v223 = vmax.f32 %v209, 0.0
  %v224 = vmax.f32 %v212, 0.0
  %v225 = vmax.f32 %v217, 0.0
  %v226 = vmax.f32 %v220, 0.0
  %v227 = vpack.c.bf16 %v224, %v223
  %v228 = vpack.c.bf16 %v226, %v225
  %v231 = vunpack.c.l.b16 %v227
  %v232 = vunpack.c.h.b16 %v227
  %v233 = vunpack.c.l.b16 %v228
  %v234 = vunpack.c.h.b16 %v228
  %v235 = vpack.c.b16 %v231, %v231
  %v236 = vpack.c.b16 %v232, %v232
  %v237 = vpack.c.b16 %v233, %v233
  %v238 = vpack.c.b16 %v234, %v234
  %243 = vst [vmem:[%s3] sm:$0xf] %v235
  %244 = vst [vmem:[%s3 + $0x4] sm:$0xf] %v236
  %245 = vst [vmem:[%s3 + $0x8] sm:$0xf] %v237
  %246 = vst [vmem:[%s3 + $0xc] sm:$0xf] %v238
  // Predicated region
  $region14: #{vqcae_forward.15} parent=0 // pred_check
    _
  $region15: #{vqcae_forward.15} parent=0 // pred_check_branch
    %248 = sbr.rel (0) target = $region17
  $region16: #{vqcae_forward.15} parent=0 // pred_region
    _
  $region17: #{vqcae_forward.15} parent=0 // pred_fallthru
    _
  // Predicated region
  $region18: #{vqcae_forward.15} parent=0 // pred_check
    _
  $region19: #{vqcae_forward.15} parent=0 // pred_check_branch
    %250 = sbr.rel (0) target = $region21
  $region20: #{vqcae_forward.15} parent=0 // pred_region
    _
  $region21: #{vqcae_forward.15} parent=0 // pred_fallthru
    _

// kernel: vqcae_forward.16
$region0: #{vqcae_forward.16}
  #allocation0 [shape = 'u32[]', space=smem, size = 0x4, offset = 0x4, fixed_abs, tag = 'smem constant byte address 0x4 - core index']
  #allocation1 [shape = 'u32[144,128]{1,0:T(1,128)}', space=vmem, size = 0x12000, scoped, tag = 'internal scratch']
  %s0 = inlined_call_operand.vmem [shape: bf16[128,128], index: 0, kind: input, shape index: {}]
  %s1 = inlined_call_operand.vmem [shape: bf16[128,64], index: 1, kind: input, shape index: {}]
  %s2 = inlined_call_operand.vmem [shape: f32[1,64], index: 2, kind: input, shape index: {}]
  %s3 = inlined_call_operand.vmem [shape: bf16[128,64], index: 3, kind: output, shape index: {}]
  %s4 = sld [smem:[#allocation0]]
  $region22: #{vqcae_forward.16} parent=0
    _
  %s6 = ssub.s32 1, %s4
  %s7 = scalar_select 0, %s6, %s4
  // Predicated region
  $region2: #{vqcae_forward.16} parent=0 // pred_check
    _
  $region3: #{vqcae_forward.16} parent=0 // pred_check_branch
    %9 = sbr.rel (0) target = $region5
  $region4: #{vqcae_forward.16} parent=0 // pred_region
    _
  $region5: #{vqcae_forward.16} parent=0 // pred_fallthru
    _
  // Predicated region
  $region6: #{vqcae_forward.16} parent=0 // pred_check
    _
  $region7: #{vqcae_forward.16} parent=0 // pred_check_branch
    %11 = sbr.rel (0) target = $region9
  $region8: #{vqcae_forward.16} parent=0 // pred_region
    _
  $region9: #{vqcae_forward.16} parent=0 // pred_fallthru
    _
  // Predicated region
  $region10: #{vqcae_forward.16} parent=0 // pred_check
    _
  $region11: #{vqcae_forward.16} parent=0 // pred_check_branch
    %13 = sbr.rel (0) target = $region13
  $region12: #{vqcae_forward.16} parent=0 // pred_region
    _
  $region13: #{vqcae_forward.16} parent=0 // pred_fallthru
    _
  %v15 = vld [vmem:[%s0] sm:$0xf]
  %v16 = vld [vmem:[%s0 + $0x4] sm:$0xf]
  %v17 = vld [vmem:[%s0 + $0x8] sm:$0xf]
  %v18 = vld [vmem:[%s0 + $0xc] sm:$0xf]
  %v19 = vld [vmem:[%s0 + $0x10] sm:$0xf]
  %v20 = vld [vmem:[%s0 + $0x14] sm:$0xf]
  %v21 = vld [vmem:[%s0 + $0x18] sm:$0xf]
  %v22 = vld [vmem:[%s0 + $0x1c] sm:$0xf]
  %v23 = vld [vmem:[%s0 + $0x20] sm:$0xf]
  %v24 = vld [vmem:[%s0 + $0x24] sm:$0xf]
  %v25 = vld [vmem:[%s0 + $0x28] sm:$0xf]
  %v26 = vld [vmem:[%s0 + $0x2c] sm:$0xf]
  %v27 = vld [vmem:[%s0 + $0x30] sm:$0xf]
  %v28 = vld [vmem:[%s0 + $0x34] sm:$0xf]
  %v29 = vld [vmem:[%s0 + $0x38] sm:$0xf]
  %v30 = vld [vmem:[%s0 + $0x3c] sm:$0xf]
  %v31 = vld [vmem:[%s1] sm:$0xf]
  %v32 = vld [vmem:[%s1 + $0x4] sm:$0xf]
  %v33 = vld [vmem:[%s1 + $0x8] sm:$0xf]
  %v34 = vld [vmem:[%s1 + $0xc] sm:$0xf]
  %v35 = vld [vmem:[%s1 + $0x10] sm:$0xf]
  %v36 = vld [vmem:[%s1 + $0x14] sm:$0xf]
  %v37 = vld [vmem:[%s1 + $0x18] sm:$0xf]
  %v38 = vld [vmem:[%s1 + $0x1c] sm:$0xf]
  %v39 = vld [vmem:[%s1 + $0x20] sm:$0xf]
  %v40 = vld [vmem:[%s1 + $0x24] sm:$0xf]
  %v41 = vld [vmem:[%s1 + $0x28] sm:$0xf]
  %v42 = vld [vmem:[%s1 + $0x2c] sm:$0xf]
  %v43 = vld [vmem:[%s1 + $0x30] sm:$0xf]
  %v44 = vld [vmem:[%s1 + $0x34] sm:$0xf]
  %v45 = vld [vmem:[%s1 + $0x38] sm:$0xf]
  %v46 = vld [vmem:[%s1 + $0x3c] sm:$0xf]
  %v47 = vld [vmem:[%s2] sm:$0x1]
  %v49 = vlaneseq
  %v50 = vshrl.u32 %v49, 7
  %v51 = vsub.s32 0, %v50
  %v52 = vrot.slane %v47, %v51
  %v70 = vunpack.c.l.b16 %v15
  %v71 = vunpack.c.l.b16 %v16
  %v72 = vunpack.c.l.b16 %v17
  %v73 = vunpack.c.l.b16 %v18
  %v74 = vunpack.c.l.b16 %v19
  %v75 = vunpack.c.l.b16 %v20
  %v76 = vunpack.c.l.b16 %v21
  %v77 = vunpack.c.l.b16 %v22
  %v78 = vunpack.c.l.b16 %v23
  %v79 = vunpack.c.l.b16 %v24
  %v80 = vunpack.c.l.b16 %v25
  %v81 = vunpack.c.l.b16 %v26
  %v82 = vunpack.c.l.b16 %v27
  %v83 = vunpack.c.l.b16 %v28
  %v84 = vunpack.c.l.b16 %v29
  %v85 = vunpack.c.l.b16 %v30
  %v86 = vpack.c.b16 %v71, %v70
  %v87 = vpack.c.b16 %v73, %v72
  %v88 = vpack.c.b16 %v75, %v74
  %v89 = vpack.c.b16 %v77, %v76
  %v90 = vpack.c.b16 %v79, %v78
  %v91 = vpack.c.b16 %v81, %v80
  %v92 = vpack.c.b16 %v83, %v82
  %v93 = vpack.c.b16 %v85, %v84
  %v118 = vunpack.c.l.b16 %v31
  %v119 = vunpack.c.l.b16 %v32
  %v120 = vunpack.c.l.b16 %v33
  %v121 = vunpack.c.l.b16 %v34
  %v122 = vunpack.c.l.b16 %v35
  %v123 = vunpack.c.l.b16 %v36
  %v124 = vunpack.c.l.b16 %v37
  %v125 = vunpack.c.l.b16 %v38
  %v126 = vunpack.c.l.b16 %v39
  %v127 = vunpack.c.l.b16 %v40
  %v128 = vunpack.c.l.b16 %v41
  %v129 = vunpack.c.l.b16 %v42
  %v130 = vunpack.c.l.b16 %v43
  %v131 = vunpack.c.l.b16 %v44
  %v132 = vunpack.c.l.b16 %v45
  %v133 = vunpack.c.l.b16 %v46
  %v134 = vpack.c.b16 %v119, %v118
  %v135 = vpack.c.b16 %v121, %v120
  %v136 = vpack.c.b16 %v123, %v122
  %v137 = vpack.c.b16 %v125, %v124
  %v138 = vpack.c.b16 %v127, %v126
  %v139 = vpack.c.b16 %v129, %v128
  %v140 = vpack.c.b16 %v131, %v130
  %v141 = vpack.c.b16 %v133, %v132
  %150 = vmatprep.subr.bf16.mxu0 0
  %151 = vmatpush1.bf16.msra.mxu0 %v141
  %152 = vmatprep.subr.bf16.mxu0 0
  %153 = vmatpush1.bf16.msra.mxu0 %v140
  %154 = vmatprep.subr.bf16.mxu0 0
  %155 = vmatpush1.bf16.msra.mxu0 %v139
  %156 = vmatprep.subr.bf16.mxu0 0
  %157 = vmatpush1.bf16.msra.mxu0 %v138
  %158 = vmatprep.subr.bf16.mxu0 0
  %159 = vmatpush1.bf16.msra.mxu0 %v137
  %160 = vmatprep.subr.bf16.mxu0 0
  %161 = vmatpush1.bf16.msra.mxu0 %v136
  %162 = vmatprep.subr.bf16.mxu0 0
  %163 = vmatpush1.bf16.msra.mxu0 %v135
  %164 = vmatprep.subr.bf16.mxu0 0
  %165 = vmatpush1.bf16.msra.mxu0 %v134
  %166 = vmatprep.subr.bf16.mxu0 0
  %167 = vmatpush2.bf16.msra.mxu0 0
  %168 = vmatprep.subr.bf16.mxu0 0
  %169 = vmatpush2.bf16.msra.mxu0 0
  %170 = vmatprep.subr.bf16.mxu0 0
  %171 = vmatpush2.bf16.msra.mxu0 0
  %172 = vmatprep.subr.bf16.mxu0 0
  %173 = vmatpush2.bf16.msra.mxu0 0
  %174 = vmatprep.subr.bf16.mxu0 0
  %175 = vmatpush2.bf16.msra.mxu0 0
  %176 = vmatprep.subr.bf16.mxu0 0
  %177 = vmatpush2.bf16.msra.mxu0 0
  %178 = vmatprep.subr.bf16.mxu0 0
  %179 = vmatpush2.bf16.msra.mxu0 0
  %180 = vmatprep.subr.bf16.mxu0 0
  %181 = vmatpush2.bf16.msra.mxu0 0
  %182 = vmatprep.mubr.bf16.mxu0 0
  %183 = vmatmul.mubr.bf16.gmra.mxu0 %v86
  %v184 = vpop.f32.mrf.mxu0
  %v185 = vadd.f32 %v52, %v184
  %v186 = vpop.f32.mrf.mxu0
  %v187 = vpop.f32.mrf.mxu0
  %v188 = vadd.f32 %v52, %v187
  %v189 = vpop.f32.mrf.mxu0
  %190 = vmatprep.mubr.bf16.mxu0 0
  %191 = vmatmul.mubr.bf16.gmra.mxu0 %v87
  %v192 = vpop.f32.mrf.mxu0
  %v193 = vadd.f32 %v52, %v192
  %v194 = vpop.f32.mrf.mxu0
  %v195 = vpop.f32.mrf.mxu0
  %v196 = vadd.f32 %v52, %v195
  %v197 = vpop.f32.mrf.mxu0
  %198 = vmatprep.mubr.bf16.mxu0 0
  %199 = vmatmul.mubr.bf16.gmra.mxu0 %v88
  %v200 = vpop.f32.mrf.mxu0
  %v201 = vadd.f32 %v52, %v200
  %v202 = vpop.f32.mrf.mxu0
  %v203 = vpop.f32.mrf.mxu0
  %v204 = vadd.f32 %v52, %v203
  %v205 = vpop.f32.mrf.mxu0
  %206 = vmatprep.mubr.bf16.mxu0 0
  %207 = vmatmul.mubr.bf16.gmra.mxu0 %v89
  %v208 = vpop.f32.mrf.mxu0
  %v209 = vadd.f32 %v52, %v208
  %v210 = vpop.f32.mrf.mxu0
  %v211 = vpop.f32.mrf.mxu0
  %v212 = vadd.f32 %v52, %v211
  %v213 = vpop.f32.mrf.mxu0
  %214 = vmatprep.mubr.bf16.mxu0 0
  %215 = vmatmul.mubr.bf16.gmra.mxu0 %v90
  %v216 = vpop.f32.mrf.mxu0
  %v217 = vadd.f32 %v52, %v216
  %v218 = vpop.f32.mrf.mxu0
  %v219 = vpop.f32.mrf.mxu0
  %v220 = vadd.f32 %v52, %v219
  %v221 = vpop.f32.mrf.mxu0
  %222 = vmatprep.mubr.bf16.mxu0 0
  %223 = vmatmul.mubr.bf16.gmra.mxu0 %v91
  %v224 = vpop.f32.mrf.mxu0
  %v225 = vadd.f32 %v52, %v224
  %v226 = vpop.f32.mrf.mxu0
  %v227 = vpop.f32.mrf.mxu0
  %v228 = vadd.f32 %v52, %v227
  %v229 = vpop.f32.mrf.mxu0
  %230 = vmatprep.mubr.bf16.mxu0 0
  %231 = vmatmul.mubr.bf16.gmra.mxu0 %v92
  %v232 = vpop.f32.mrf.mxu0
  %v233 = vadd.f32 %v52, %v232
  %v234 = vpop.f32.mrf.mxu0
  %v235 = vpop.f32.mrf.mxu0
  %v236 = vadd.f32 %v52, %v235
  %v237 = vpop.f32.mrf.mxu0
  %238 = vmatprep.mubr.bf16.mxu0 0
  %239 = vmatmul.mubr.bf16.gmra.mxu0 %v93
  %v240 = vpop.f32.mrf.mxu0
  %v241 = vadd.f32 %v52, %v240
  %v242 = vpop.f32.mrf.mxu0
  %v243 = vpop.f32.mrf.mxu0
  %v244 = vadd.f32 %v52, %v243
  %v245 = vpop.f32.mrf.mxu0
  %246 = vdwg.mxu0
  %v247 = vmax.f32 %v185, 0.0
  %v248 = vmax.f32 %v188, 0.0
  %v249 = vmax.f32 %v193, 0.0
  %v250 = vmax.f32 %v196, 0.0
  %v251 = vmax.f32 %v201, 0.0
  %v252 = vmax.f32 %v204, 0.0
  %v253 = vmax.f32 %v209, 0.0
  %v254 = vmax.f32 %v212, 0.0
  %v255 = vmax.f32 %v217, 0.0
  %v256 = vmax.f32 %v220, 0.0
  %v257 = vmax.f32 %v225, 0.0
  %v258 = vmax.f32 %v228, 0.0
  %v259 = vmax.f32 %v233, 0.0
  %v260 = vmax.f32 %v236, 0.0
  %v261 = vmax.f32 %v241, 0.0
  %v262 = vmax.f32 %v244, 0.0
  %v263 = vpack.c.bf16 %v248, %v247
  %v264 = vpack.c.bf16 %v250, %v249
  %v265 = vpack.c.bf16 %v252, %v251
  %v266 = vpack.c.bf16 %v254, %v253
  %v267 = vpack.c.bf16 %v256, %v255
  %v268 = vpack.c.bf16 %v258, %v257
  %v269 = vpack.c.bf16 %v260, %v259
  %v270 = vpack.c.bf16 %v262, %v261
  %v279 = vunpack.c.l.b16 %v263
  %v280 = vunpack.c.h.b16 %v263
  %v281 = vunpack.c.l.b16 %v264
  %v282 = vunpack.c.h.b16 %v264
  %v283 = vunpack.c.l.b16 %v265
  %v284 = vunpack.c.h.b16 %v265
  %v285 = vunpack.c.l.b16 %v266
  %v286 = vunpack.c.h.b16 %v266
  %v287 = vunpack.c.l.b16 %v267
  %v288 = vunpack.c.h.b16 %v267
  %v289 = vunpack.c.l.b16 %v268
  %v290 = vunpack.c.h.b16 %v268
  %v291 = vunpack.c.l.b16 %v269
  %v292 = vunpack.c.h.b16 %v269
  %v293 = vunpack.c.l.b16 %v270
  %v294 = vunpack.c.h.b16 %v270
  %v295 = vpack.c.b16 %v279, %v279
  %v296 = vpack.c.b16 %v280, %v280
  %v297 = vpack.c.b16 %v281, %v281
  %v298 = vpack.c.b16 %v282, %v282
  %v299 = vpack.c.b16 %v283, %v283
  %v300 = vpack.c.b16 %v284, %v284
  %v301 = vpack.c.b16 %v285, %v285
  %v302 = vpack.c.b16 %v286, %v286
  %v303 = vpack.c.b16 %v287, %v287
  %v304 = vpack.c.b16 %v288, %v288
  %v305 = vpack.c.b16 %v289, %v289
  %v306 = vpack.c.b16 %v290, %v290
  %v307 = vpack.c.b16 %v291, %v291
  %v308 = vpack.c.b16 %v292, %v292
  %v309 = vpack.c.b16 %v293, %v293
  %v310 = vpack.c.b16 %v294, %v294
  %vm327 = vcmask 519168
  %328 = vst.msk [vmem:[%s3] sm:$0xf] %vm327, %v295
  %329 = vst.msk [vmem:[%s3 + $0x4] sm:$0xf] %vm327, %v296
  %330 = vst.msk [vmem:[%s3 + $0x8] sm:$0xf] %vm327, %v297
  %331 = vst.msk [vmem:[%s3 + $0xc] sm:$0xf] %vm327, %v298
  %332 = vst.msk [vmem:[%s3 + $0x10] sm:$0xf] %vm327, %v299
  %333 = vst.msk [vmem:[%s3 + $0x14] sm:$0xf] %vm327, %v300
  %334 = vst.msk [vmem:[%s3 + $0x18] sm:$0xf] %vm327, %v301
  %335 = vst.msk [vmem:[%s3 + $0x1c] sm:$0xf] %vm327, %v302
  %336 = vst.msk [vmem:[%s3 + $0x20] sm:$0xf] %vm327, %v303
  %337 = vst.msk [vmem:[%s3 + $0x24] sm:$0xf] %vm327, %v304
  %338 = vst.msk [vmem:[%s3 + $0x28] sm:$0xf] %vm327, %v305
  %339 = vst.msk [vmem:[%s3 + $0x2c] sm:$0xf] %vm327, %v306
  %340 = vst.msk [vmem:[%s3 + $0x30] sm:$0xf] %vm327, %v307
  %341 = vst.msk [vmem:[%s3 + $0x34] sm:$0xf] %vm327, %v308
  %342 = vst.msk [vmem:[%s3 + $0x38] sm:$0xf] %vm327, %v309
  %343 = vst.msk [vmem:[%s3 + $0x3c] sm:$0xf] %vm327, %v310
  // Predicated region
  $region14: #{vqcae_forward.16} parent=0 // pred_check
    _
  $region15: #{vqcae_forward.16} parent=0 // pred_check_branch
    %345 = sbr.rel (0) target = $region17
  $region16: #{vqcae_forward.16} parent=0 // pred_region
    _
  $region17: #{vqcae_forward.16} parent=0 // pred_fallthru
    _
  // Predicated region
  $region18: #{vqcae_forward.16} parent=0 // pred_check
    _
  $region19: #{vqcae_forward.16} parent=0 // pred_check_branch
    %347 = sbr.rel (0) target = $region21
  $region20: #{vqcae_forward.16} parent=0 // pred_region
    _
  $region21: #{vqcae_forward.16} parent=0 // pred_fallthru
    _

// kernel: vqcae_forward.17
$region0: #{vqcae_forward.17}
  #allocation0 [shape = 'u32[]', space=smem, size = 0x4, offset = 0x4, fixed_abs, tag = 'smem constant byte address 0x4 - core index']
  #allocation1 [shape = 'u32[144,128]{1,0:T(1,128)}', space=vmem, size = 0x12000, scoped, tag = 'internal scratch']
  %s0 = inlined_call_operand.vmem [shape: bf16[512,144], index: 0, kind: input, shape index: {}]
  %s1 = inlined_call_operand.vmem [shape: bf16[144,128], index: 1, kind: input, shape index: {}]
  %s2 = inlined_call_operand.vmem [shape: f32[1,128], index: 2, kind: input, shape index: {}]
  %s3 = inlined_call_operand.vmem [shape: f32[512,128], index: 3, kind: input, shape index: {}]
  %s4 = inlined_call_operand.vmem [shape: f32[512,128], index: 4, kind: output, shape index: {0}]
  %s5 = inlined_call_operand.hbm [shape: f32[1,1], index: 5, kind: output, shape index: {1}]
  %6 = xla_tuple %s4, %s5
  %s7 = sld [smem:[#allocation0]]
  $region34: #{vqcae_forward.17} parent=0
    _
  %s9 = ssub.s32 1, %s7
  %s10 = scalar_select 0, %s9, %s7
  $region1: #{vqcae_forward.17} parent=0
    #allocation2 [shape = 'u8[512]{0}', space=smem, size = 0x200, scoped, tag = 'output window, operand 1, single buffered']
    #allocation3 [shape = 's32[1]{0}', space=sflag, size = 0x4, scoped, tag = 'scoped memory for vqcae_forward.17']
    %11 = vsyncpa [#allocation3], 0
    // Predicated region
    $region2: #{vqcae_forward.17} parent=1 // pred_check
      _
    $region3: #{vqcae_forward.17} parent=1 // pred_check_branch
      %13 = sbr.rel (0) target = $region5
    $region4: #{vqcae_forward.17} parent=1 // pred_region
      _
    $region5: #{vqcae_forward.17} parent=1 // pred_fallthru
      _
    // Predicated region
    $region6: #{vqcae_forward.17} parent=1 // pred_check
      _
    $region7: #{vqcae_forward.17} parent=1 // pred_check_branch
      %15 = sbr.rel (0) target = $region9
    $region8: #{vqcae_forward.17} parent=1 // pred_region
      _
    $region9: #{vqcae_forward.17} parent=1 // pred_fallthru
      _
    // Predicated region
    $region10: #{vqcae_forward.17} parent=1 // pred_check
      _
    $region11: #{vqcae_forward.17} parent=1 // pred_check_branch
      %17 = sbr.rel (0) target = $region13
    $region12: #{vqcae_forward.17} parent=1 // pred_region
      _
    $region13: #{vqcae_forward.17} parent=1 // pred_fallthru
      _
    // Predicated region
    $region14: #{vqcae_forward.17} parent=1 // pred_check
      _
    $region15: #{vqcae_forward.17} parent=1 // pred_check_branch
      %19 = sbr.rel (0) target = $region17
    $region16: #{vqcae_forward.17} parent=1 // pred_region
      _
    $region17: #{vqcae_forward.17} parent=1 // pred_fallthru
      _
    %v21 = vld [vmem:[%s0] sm:$0xff]
    %v22 = vld [vmem:[%s0 + $0x8] sm:$0xff]
    %v23 = vld [vmem:[%s0 + $0x10] sm:$0xff]
    %v24 = vld [vmem:[%s0 + $0x18] sm:$0xff]
    %v25 = vld [vmem:[%s0 + $0x20] sm:$0xff]
    %v26 = vld [vmem:[%s0 + $0x28] sm:$0xff]
    %v27 = vld [vmem:[%s0 + $0x30] sm:$0xff]
    %v28 = vld [vmem:[%s0 + $0x38] sm:$0xff]
    %v29 = vld [vmem:[%s0 + $0x40] sm:$0xff]
    %v30 = vld [vmem:[%s0 + $0x48] sm:$0xff]
    %v31 = vld [vmem:[%s0 + $0x50] sm:$0xff]
    %v32 = vld [vmem:[%s0 + $0x58] sm:$0xff]
    %v33 = vld [vmem:[%s0 + $0x60] sm:$0xff]
    %v34 = vld [vmem:[%s0 + $0x68] sm:$0xff]
    %v35 = vld [vmem:[%s0 + $0x70] sm:$0xff]
    %v36 = vld [vmem:[%s0 + $0x78] sm:$0xff]
    %v37 = vld [vmem:[%s0 + $0x80] sm:$0xff]
    %v38 = vld [vmem:[%s0 + $0x88] sm:$0xff]
    %v39 = vld [vmem:[%s0 + $0x90] sm:$0xff]
    %v40 = vld [vmem:[%s0 + $0x98] sm:$0xff]
    %v41 = vld [vmem:[%s0 + $0xa0] sm:$0xff]
    %v42 = vld [vmem:[%s0 + $0xa8] sm:$0xff]
    %v43 = vld [vmem:[%s0 + $0xb0] sm:$0xff]
    %v44 = vld [vmem:[%s0 + $0xb8] sm:$0xff]
    %v45 = vld [vmem:[%s0 + $0xc0] sm:$0xff]
    %v46 = vld [vmem:[%s0 + $0xc8] sm:$0xff]
    %v47 = vld [vmem:[%s0 + $0xd0] sm:$0xff]
    %v48 = vld [vmem:[%s0 + $0xd8] sm:$0xff]
    %v49 = vld [vmem:[%s0 + $0xe0] sm:$0xff]
    %v50 = vld [vmem:[%s0 + $0xe8] sm:$0xff]
    %v51 = vld [vmem:[%s0 + $0xf0] sm:$0xff]
    %v52 = vld [vmem:[%s0 + $0xf8] sm:$0xff]
    %v53 = vld [vmem:[%s0 + $0x100] sm:$0xff]
    %v54 = vld [vmem:[%s0 + $0x108] sm:$0xff]
    %v55 = vld [vmem:[%s0 + $0x110] sm:$0xff]
    %v56 = vld [vmem:[%s0 + $0x118] sm:$0xff]
    %v57 = vld [vmem:[%s0 + $0x120] sm:$0xff]
    %v58 = vld [vmem:[%s0 + $0x128] sm:$0xff]
    %v59 = vld [vmem:[%s0 + $0x130] sm:$0xff]
    %v60 = vld [vmem:[%s0 + $0x138] sm:$0xff]
    %v61 = vld [vmem:[%s0 + $0x140] sm:$0xff]
    %v62 = vld [vmem:[%s0 + $0x148] sm:$0xff]
    %v63 = vld [vmem:[%s0 + $0x150] sm:$0xff]
    %v64 = vld [vmem:[%s0 + $0x158] sm:$0xff]
    %v65 = vld [vmem:[%s0 + $0x160] sm:$0xff]
    %v66 = vld [vmem:[%s0 + $0x168] sm:$0xff]
    %v67 = vld [vmem:[%s0 + $0x170] sm:$0xff]
    %v68 = vld [vmem:[%s0 + $0x178] sm:$0xff]
    %v69 = vld [vmem:[%s0 + $0x180] sm:$0xff]
    %v70 = vld [vmem:[%s0 + $0x188] sm:$0xff]
    %v71 = vld [vmem:[%s0 + $0x190] sm:$0xff]
    %v72 = vld [vmem:[%s0 + $0x198] sm:$0xff]
    %v73 = vld [vmem:[%s0 + $0x1a0] sm:$0xff]
    %v74 = vld [vmem:[%s0 + $0x1a8] sm:$0xff]
    %v75 = vld [vmem:[%s0 + $0x1b0] sm:$0xff]
    %v76 = vld [vmem:[%s0 + $0x1b8] sm:$0xff]
    %v77 = vld [vmem:[%s0 + $0x1c0] sm:$0xff]
    %v78 = vld [vmem:[%s0 + $0x1c8] sm:$0xff]
    %v79 = vld [vmem:[%s0 + $0x1d0] sm:$0xff]
    %v80 = vld [vmem:[%s0 + $0x1d8] sm:$0xff]
    %v81 = vld [vmem:[%s0 + $0x1e0] sm:$0xff]
    %v82 = vld [vmem:[%s0 + $0x1e8] sm:$0xff]
    %v83 = vld [vmem:[%s0 + $0x1f0] sm:$0xff]
    %v84 = vld [vmem:[%s0 + $0x1f8] sm:$0xff]
    %v85 = vld [vmem:[%s1] sm:$0xf]
    %v86 = vld [vmem:[%s1 + $0x4] sm:$0xf]
    %v87 = vld [vmem:[%s1 + $0x8] sm:$0xf]
    %v88 = vld [vmem:[%s1 + $0xc] sm:$0xf]
    %v89 = vld [vmem:[%s1 + $0x10] sm:$0xf]
    %v90 = vld [vmem:[%s1 + $0x14] sm:$0xf]
    %v91 = vld [vmem:[%s1 + $0x18] sm:$0xf]
    %v92 = vld [vmem:[%s1 + $0x1c] sm:$0xf]
    %v93 = vld [vmem:[%s1 + $0x20] sm:$0xf]
    %v94 = vld [vmem:[%s1 + $0x24] sm:$0xf]
    %v95 = vld [vmem:[%s1 + $0x28] sm:$0xf]
    %v96 = vld [vmem:[%s1 + $0x2c] sm:$0xf]
    %v97 = vld [vmem:[%s1 + $0x30] sm:$0xf]
    %v98 = vld [vmem:[%s1 + $0x34] sm:$0xf]
    %v99 = vld [vmem:[%s1 + $0x38] sm:$0xf]
    %v100 = vld [vmem:[%s1 + $0x3c] sm:$0xf]
    %v101 = vld [vmem:[%s1 + $0x40] sm:$0xf]
    %v102 = vld [vmem:[%s1 + $0x44] sm:$0xf]
    %v103 = vld [vmem:[%s2] sm:$0x1]
    %v105 = vlaneseq
    %v106 = vshrl.u32 %v105, 7
    %v107 = vsub.s32 0, %v106
    %v108 = vrot.slane %v103, %v107
    %v174 = vunpack.c.l.b16 %v21
    %v175 = vunpack.c.h.b16 %v21
    %v176 = vunpack.c.l.b16 %v22
    %v177 = vunpack.c.h.b16 %v22
    %v178 = vunpack.c.l.b16 %v23
    %v179 = vunpack.c.h.b16 %v23
    %v180 = vunpack.c.l.b16 %v24
    %v181 = vunpack.c.h.b16 %v24
    %v182 = vunpack.c.l.b16 %v25
    %v183 = vunpack.c.h.b16 %v25
    %v184 = vunpack.c.l.b16 %v26
    %v185 = vunpack.c.h.b16 %v26
    %v186 = vunpack.c.l.b16 %v27
    %v187 = vunpack.c.h.b16 %v27
    %v188 = vunpack.c.l.b16 %v28
    %v189 = vunpack.c.h.b16 %v28
    %v190 = vunpack.c.l.b16 %v29
    %v191 = vunpack.c.h.b16 %v29
    %v192 = vunpack.c.l.b16 %v30
    %v193 = vunpack.c.h.b16 %v30
    %v194 = vunpack.c.l.b16 %v31
    %v195 = vunpack.c.h.b16 %v31
    %v196 = vunpack.c.l.b16 %v32
    %v197 = vunpack.c.h.b16 %v32
    %v198 = vunpack.c.l.b16 %v33
    %v199 = vunpack.c.h.b16 %v33
    %v200 = vunpack.c.l.b16 %v34
    %v201 = vunpack.c.h.b16 %v34
    %v202 = vunpack.c.l.b16 %v35
    %v203 = vunpack.c.h.b16 %v35
    %v204 = vunpack.c.l.b16 %v36
    %v205 = vunpack.c.h.b16 %v36
    %v206 = vunpack.c.l.b16 %v37
    %v207 = vunpack.c.h.b16 %v37
    %v208 = vunpack.c.l.b16 %v38
    %v209 = vunpack.c.h.b16 %v38
    %v210 = vunpack.c.l.b16 %v39
    %v211 = vunpack.c.h.b16 %v39
    %v212 = vunpack.c.l.b16 %v40
    %v213 = vunpack.c.h.b16 %v40
    %v214 = vunpack.c.l.b16 %v41
    %v215 = vunpack.c.h.b16 %v41
    %v216 = vunpack.c.l.b16 %v42
    %v217 = vunpack.c.h.b16 %v42
    %v218 = vunpack.c.l.b16 %v43
    %v219 = vunpack.c.h.b16 %v43
    %v220 = vunpack.c.l.b16 %v44
    %v221 = vunpack.c.h.b16 %v44
    %v222 = vunpack.c.l.b16 %v45
    %v223 = vunpack.c.h.b16 %v45
    %v224 = vunpack.c.l.b16 %v46
    %v225 = vunpack.c.h.b16 %v46
    %v226 = vunpack.c.l.b16 %v47
    %v227 = vunpack.c.h.b16 %v47
    %v228 = vunpack.c.l.b16 %v48
    %v229 = vunpack.c.h.b16 %v48
    %v230 = vunpack.c.l.b16 %v49
    %v231 = vunpack.c.h.b16 %v49
    %v232 = vunpack.c.l.b16 %v50
    %v233 = vunpack.c.h.b16 %v50
    %v234 = vunpack.c.l.b16 %v51
    %v235 = vunpack.c.h.b16 %v51
    %v236 = vunpack.c.l.b16 %v52
    %v237 = vunpack.c.h.b16 %v52
    %v238 = vunpack.c.l.b16 %v53
    %v239 = vunpack.c.h.b16 %v53
    %v240 = vunpack.c.l.b16 %v54
    %v241 = vunpack.c.h.b16 %v54
    %v242 = vunpack.c.l.b16 %v55
    %v243 = vunpack.c.h.b16 %v55
    %v244 = vunpack.c.l.b16 %v56
    %v245 = vunpack.c.h.b16 %v56
    %v246 = vunpack.c.l.b16 %v57
    %v247 = vunpack.c.h.b16 %v57
    %v248 = vunpack.c.l.b16 %v58
    %v249 = vunpack.c.h.b16 %v58
    %v250 = vunpack.c.l.b16 %v59
    %v251 = vunpack.c.h.b16 %v59
    %v252 = vunpack.c.l.b16 %v60
    %v253 = vunpack.c.h.b16 %v60
    %v254 = vunpack.c.l.b16 %v61
    %v255 = vunpack.c.h.b16 %v61
    %v256 = vunpack.c.l.b16 %v62
    %v257 = vunpack.c.h.b16 %v62
    %v258 = vunpack.c.l.b16 %v63
    %v259 = vunpack.c.h.b16 %v63
    %v260 = vunpack.c.l.b16 %v64
    %v261 = vunpack.c.h.b16 %v64
    %v262 = vunpack.c.l.b16 %v65
    %v263 = vunpack.c.h.b16 %v65
    %v264 = vunpack.c.l.b16 %v66
    %v265 = vunpack.c.h.b16 %v66
    %v266 = vunpack.c.l.b16 %v67
    %v267 = vunpack.c.h.b16 %v67
    %v268 = vunpack.c.l.b16 %v68
    %v269 = vunpack.c.h.b16 %v68
    %v270 = vunpack.c.l.b16 %v69
    %v271 = vunpack.c.h.b16 %v69
    %v272 = vunpack.c.l.b16 %v70
    %v273 = vunpack.c.h.b16 %v70
    %v274 = vunpack.c.l.b16 %v71
    %v275 = vunpack.c.h.b16 %v71
    %v276 = vunpack.c.l.b16 %v72
    %v277 = vunpack.c.h.b16 %v72
    %v278 = vunpack.c.l.b16 %v73
    %v279 = vunpack.c.h.b16 %v73
    %v280 = vunpack.c.l.b16 %v74
    %v281 = vunpack.c.h.b16 %v74
    %v282 = vunpack.c.l.b16 %v75
    %v283 = vunpack.c.h.b16 %v75
    %v284 = vunpack.c.l.b16 %v76
    %v285 = vunpack.c.h.b16 %v76
    %v286 = vunpack.c.l.b16 %v77
    %v287 = vunpack.c.h.b16 %v77
    %v288 = vunpack.c.l.b16 %v78
    %v289 = vunpack.c.h.b16 %v78
    %v290 = vunpack.c.l.b16 %v79
    %v291 = vunpack.c.h.b16 %v79
    %v292 = vunpack.c.l.b16 %v80
    %v293 = vunpack.c.h.b16 %v80
    %v294 = vunpack.c.l.b16 %v81
    %v295 = vunpack.c.h.b16 %v81
    %v296 = vunpack.c.l.b16 %v82
    %v297 = vunpack.c.h.b16 %v82
    %v298 = vunpack.c.l.b16 %v83
    %v299 = vunpack.c.h.b16 %v83
    %v300 = vunpack.c.l.b16 %v84
    %v301 = vunpack.c.h.b16 %v84
    %v302 = vpack.c.b16 %v176, %v174
    %v303 = vpack.c.b16 %v177, %v175
    %v304 = vpack.c.b16 %v180, %v178
    %v305 = vpack.c.b16 %v181, %v179
    %v306 = vpack.c.b16 %v184, %v182
    %v307 = vpack.c.b16 %v185, %v183
    %v308 = vpack.c.b16 %v188, %v186
    %v309 = vpack.c.b16 %v189, %v187
    %v310 = vpack.c.b16 %v192, %v190
    %v311 = vpack.c.b16 %v193, %v191
    %v312 = vpack.c.b16 %v196, %v194
    %v313 = vpack.c.b16 %v197, %v195
    %v314 = vpack.c.b16 %v200, %v198
    %v315 = vpack.c.b16 %v201, %v199
    %v316 = vpack.c.b16 %v204, %v202
    %v317 = vpack.c.b16 %v205, %v203
    %v318 = vpack.c.b16 %v208, %v206
    %v319 = vpack.c.b16 %v209, %v207
    %v320 = vpack.c.b16 %v212, %v210
    %v321 = vpack.c.b16 %v213, %v211
    %v322 = vpack.c.b16 %v216, %v214
    %v323 = vpack.c.b16 %v217, %v215
    %v324 = vpack.c.b16 %v220, %v218
    %v325 = vpack.c.b16 %v221, %v219
    %v326 = vpack.c.b16 %v224, %v222
    %v327 = vpack.c.b16 %v225, %v223
    %v328 = vpack.c.b16 %v228, %v226
    %v329 = vpack.c.b16 %v229, %v227
    %v330 = vpack.c.b16 %v232, %v230
    %v331 = vpack.c.b16 %v233, %v231
    %v332 = vpack.c.b16 %v236, %v234
    %v333 = vpack.c.b16 %v237, %v235
    %v334 = vpack.c.b16 %v240, %v238
    %v335 = vpack.c.b16 %v241, %v239
    %v336 = vpack.c.b16 %v244, %v242
    %v337 = vpack.c.b16 %v245, %v243
    %v338 = vpack.c.b16 %v248, %v246
    %v339 = vpack.c.b16 %v249, %v247
    %v340 = vpack.c.b16 %v252, %v250
    %v341 = vpack.c.b16 %v253, %v251
    %v342 = vpack.c.b16 %v256, %v254
    %v343 = vpack.c.b16 %v257, %v255
    %v344 = vpack.c.b16 %v260, %v258
    %v345 = vpack.c.b16 %v261, %v259
    %v346 = vpack.c.b16 %v264, %v262
    %v347 = vpack.c.b16 %v265, %v263
    %v348 = vpack.c.b16 %v268, %v266
    %v349 = vpack.c.b16 %v269, %v267
    %v350 = vpack.c.b16 %v272, %v270
    %v351 = vpack.c.b16 %v273, %v271
    %v352 = vpack.c.b16 %v276, %v274
    %v353 = vpack.c.b16 %v277, %v275
    %v354 = vpack.c.b16 %v280, %v278
    %v355 = vpack.c.b16 %v281, %v279
    %v356 = vpack.c.b16 %v284, %v282
    %v357 = vpack.c.b16 %v285, %v283
    %v358 = vpack.c.b16 %v288, %v286
    %v359 = vpack.c.b16 %v289, %v287
    %v360 = vpack.c.b16 %v292, %v290
    %v361 = vpack.c.b16 %v293, %v291
    %v362 = vpack.c.b16 %v296, %v294
    %v363 = vpack.c.b16 %v297, %v295
    %v364 = vpack.c.b16 %v300, %v298
    %v365 = vpack.c.b16 %v301, %v299
    %v416 = vunpack.c.l.b16 %v85
    %v417 = vunpack.c.l.b16 %v86
    %v418 = vunpack.c.l.b16 %v87
    %v419 = vunpack.c.l.b16 %v88
    %v420 = vunpack.c.l.b16 %v89
    %v421 = vunpack.c.l.b16 %v90
    %v422 = vunpack.c.l.b16 %v91
    %v423 = vunpack.c.l.b16 %v92
    %v424 = vunpack.c.l.b16 %v93
    %v425 = vunpack.c.l.b16 %v94
    %v426 = vunpack.c.l.b16 %v95
    %v427 = vunpack.c.l.b16 %v96
    %v428 = vunpack.c.l.b16 %v97
    %v429 = vunpack.c.l.b16 %v98
    %v430 = vunpack.c.l.b16 %v99
    %v431 = vunpack.c.l.b16 %v100
    %v432 = vunpack.c.l.b16 %v101
    %v433 = vunpack.c.l.b16 %v102
    %v434 = vpack.c.b16 %v417, %v416
    %v435 = vpack.c.b16 %v419, %v418
    %v436 = vpack.c.b16 %v421, %v420
    %v437 = vpack.c.b16 %v423, %v422
    %v438 = vpack.c.b16 %v425, %v424
    %v439 = vpack.c.b16 %v427, %v426
    %v440 = vpack.c.b16 %v429, %v428
    %v441 = vpack.c.b16 %v431, %v430
    %v442 = vpack.c.b16 %v433, %v432
    %vm452 = vcmask 130048
    %v454 = vsel %vm452, %v303, 0
    %v457 = vsel %vm452, %v305, 0
    %v460 = vsel %vm452, %v307, 0
    %v463 = vsel %vm452, %v309, 0
    %v466 = vsel %vm452, %v311, 0
    %v469 = vsel %vm452, %v313, 0
    %v472 = vsel %vm452, %v315, 0
    %v475 = vsel %vm452, %v317, 0
    %v478 = vsel %vm452, %v319, 0
    %v481 = vsel %vm452, %v321, 0
    %v484 = vsel %vm452, %v323, 0
    %v487 = vsel %vm452, %v325, 0
    %v490 = vsel %vm452, %v327, 0
    %v493 = vsel %vm452, %v329, 0
    %v496 = vsel %vm452, %v331, 0
    %v499 = vsel %vm452, %v333, 0
    %v502 = vsel %vm452, %v335, 0
    %v505 = vsel %vm452, %v337, 0
    %v508 = vsel %vm452, %v339, 0
    %v511 = vsel %vm452, %v341, 0
    %v514 = vsel %vm452, %v343, 0
    %v517 = vsel %vm452, %v345, 0
    %v520 = vsel %vm452, %v347, 0
    %v523 = vsel %vm452, %v349, 0
    %v526 = vsel %vm452, %v351, 0
    %v529 = vsel %vm452, %v353, 0
    %v532 = vsel %vm452, %v355, 0
    %v535 = vsel %vm452, %v357, 0
    %v538 = vsel %vm452, %v359, 0
    %v541 = vsel %vm452, %v361, 0
    %v544 = vsel %vm452, %v363, 0
    %v547 = vsel %vm452, %v365, 0
    %549 = vmatprep.subr.bf16.mxu0 0
    %550 = vmatpush1.bf16.msra.mxu0 %v441
    %551 = vmatprep.subr.bf16.mxu0 0
    %552 = vmatpush1.bf16.msra.mxu0 %v440
    %553 = vmatprep.subr.bf16.mxu0 0
    %554 = vmatpush1.bf16.msra.mxu0 %v439
    %555 = vmatprep.subr.bf16.mxu0 0
    %556 = vmatpush1.bf16.msra.mxu0 %v438
    %557 = vmatprep.subr.bf16.mxu0 0
    %558 = vmatpush1.bf16.msra.mxu0 %v437
    %559 = vmatprep.subr.bf16.mxu0 0
    %560 = vmatpush1.bf16.msra.mxu0 %v436
    %561 = vmatprep.subr.bf16.mxu0 0
    %562 = vmatpush1.bf16.msra.mxu0 %v435
    %563 = vmatprep.subr.bf16.mxu0 0
    %564 = vmatpush1.bf16.msra.mxu0 %v434
    %565 = vmatprep.subr.bf16.mxu0 0
    %566 = vmatpush2.bf16.msra.mxu0 0
    %567 = vmatprep.subr.bf16.mxu0 0
    %568 = vmatpush2.bf16.msra.mxu0 0
    %569 = vmatprep.subr.bf16.mxu0 0
    %570 = vmatpush2.bf16.msra.mxu0 0
    %571 = vmatprep.subr.bf16.mxu0 0
    %572 = vmatpush2.bf16.msra.mxu0 0
    %573 = vmatprep.subr.bf16.mxu0 0
    %574 = vmatpush2.bf16.msra.mxu0 0
    %575 = vmatprep.subr.bf16.mxu0 0
    %576 = vmatpush2.bf16.msra.mxu0 0
    %577 = vmatprep.subr.bf16.mxu0 0
    %578 = vmatpush2.bf16.msra.mxu0 0
    %579 = vmatprep.subr.bf16.mxu0 0
    %580 = vmatpush2.bf16.msra.mxu0 %v442
    %581 = vmatprep.mubr.bf16.mxu0 %v454
    %582 = vmatmul.mubr.bf16.gmra.mxu0 %v302
    %v583 = vpop.f32.mrf.mxu0
    %v584 = vadd.f32 %v108, %v583
    %v585 = vpop.f32.mrf.mxu0
    %v586 = vpop.f32.mrf.mxu0
    %v587 = vadd.f32 %v108, %v586
    %v588 = vpop.f32.mrf.mxu0
    %589 = vmatprep.mubr.bf16.mxu0 %v457
    %590 = vmatmul.mubr.bf16.gmra.mxu0 %v304
    %v591 = vpop.f32.mrf.mxu0
    %v592 = vadd.f32 %v108, %v591
    %v593 = vpop.f32.mrf.mxu0
    %v594 = vpop.f32.mrf.mxu0
    %v595 = vadd.f32 %v108, %v594
    %v596 = vpop.f32.mrf.mxu0
    %597 = vmatprep.mubr.bf16.mxu0 %v460
    %598 = vmatmul.mubr.bf16.gmra.mxu0 %v306
    %v599 = vpop.f32.mrf.mxu0
    %v600 = vadd.f32 %v108, %v599
    %v601 = vpop.f32.mrf.mxu0
    %v602 = vpop.f32.mrf.mxu0
    %v603 = vadd.f32 %v108, %v602
    %v604 = vpop.f32.mrf.mxu0
    %605 = vmatprep.mubr.bf16.mxu0 %v463
    %606 = vmatmul.mubr.bf16.gmra.mxu0 %v308
    %v607 = vpop.f32.mrf.mxu0
    %v608 = vadd.f32 %v108, %v607
    %v609 = vpop.f32.mrf.mxu0
    %v610 = vpop.f32.mrf.mxu0
    %v611 = vadd.f32 %v108, %v610
    %v612 = vpop.f32.mrf.mxu0
    %613 = vmatprep.mubr.bf16.mxu0 %v466
    %614 = vmatmul.mubr.bf16.gmra.mxu0 %v310
    %v615 = vpop.f32.mrf.mxu0
    %v616 = vadd.f32 %v108, %v615
    %v617 = vpop.f32.mrf.mxu0
    %v618 = vpop.f32.mrf.mxu0
    %v619 = vadd.f32 %v108, %v618
    %v620 = vpop.f32.mrf.mxu0
    %621 = vmatprep.mubr.bf16.mxu0 %v469
    %622 = vmatmul.mubr.bf16.gmra.mxu0 %v312
    %v623 = vpop.f32.mrf.mxu0
    %v624 = vadd.f32 %v108, %v623
    %v625 = vpop.f32.mrf.mxu0
    %v626 = vpop.f32.mrf.mxu0
    %v627 = vadd.f32 %v108, %v626
    %v628 = vpop.f32.mrf.mxu0
    %629 = vmatprep.mubr.bf16.mxu0 %v472
    %630 = vmatmul.mubr.bf16.gmra.mxu0 %v314
    %v631 = vpop.f32.mrf.mxu0
    %v632 = vadd.f32 %v108, %v631
    %v633 = vpop.f32.mrf.mxu0
    %v634 = vpop.f32.mrf.mxu0
    %v635 = vadd.f32 %v108, %v634
    %v636 = vpop.f32.mrf.mxu0
    %637 = vmatprep.mubr.bf16.mxu0 %v475
    %638 = vmatmul.mubr.bf16.gmra.mxu0 %v316
    %v639 = vpop.f32.mrf.mxu0
    %v640 = vadd.f32 %v108, %v639
    %v641 = vpop.f32.mrf.mxu0
    %v642 = vpop.f32.mrf.mxu0
    %v643 = vadd.f32 %v108, %v642
    %v644 = vpop.f32.mrf.mxu0
    %645 = vmatprep.mubr.bf16.mxu0 %v478
    %646 = vmatmul.mubr.bf16.gmra.mxu0 %v318
    %v647 = vpop.f32.mrf.mxu0
    %v648 = vadd.f32 %v108, %v647
    %v649 = vpop.f32.mrf.mxu0
    %v650 = vpop.f32.mrf.mxu0
    %v651 = vadd.f32 %v108, %v650
    %v652 = vpop.f32.mrf.mxu0
    %653 = vmatprep.mubr.bf16.mxu0 %v481
    %654 = vmatmul.mubr.bf16.gmra.mxu0 %v320
    %v655 = vpop.f32.mrf.mxu0
    %v656 = vadd.f32 %v108, %v655
    %v657 = vpop.f32.mrf.mxu0
    %v658 = vpop.f32.mrf.mxu0
    %v659 = vadd.f32 %v108, %v658
    %v660 = vpop.f32.mrf.mxu0
    %661 = vmatprep.mubr.bf16.mxu0 %v484
    %662 = vmatmul.mubr.bf16.gmra.mxu0 %v322
    %v663 = vpop.f32.mrf.mxu0
    %v664 = vadd.f32 %v108, %v663
    %v665 = vpop.f32.mrf.mxu0
    %v666 = vpop.f32.mrf.mxu0
    %v667 = vadd.f32 %v108, %v666
    %v668 = vpop.f32.mrf.mxu0
    %669 = vmatprep.mubr.bf16.mxu0 %v487
    %670 = vmatmul.mubr.bf16.gmra.mxu0 %v324
    %v671 = vpop.f32.mrf.mxu0
    %v672 = vadd.f32 %v108, %v671
    %v673 = vpop.f32.mrf.mxu0
    %v674 = vpop.f32.mrf.mxu0
    %v675 = vadd.f32 %v108, %v674
    %v676 = vpop.f32.mrf.mxu0
    %677 = vmatprep.mubr.bf16.mxu0 %v490
    %678 = vmatmul.mubr.bf16.gmra.mxu0 %v326
    %v679 = vpop.f32.mrf.mxu0
    %v680 = vadd.f32 %v108, %v679
    %v681 = vpop.f32.mrf.mxu0
    %v682 = vpop.f32.mrf.mxu0
    %v683 = vadd.f32 %v108, %v682
    %v684 = vpop.f32.mrf.mxu0
    %685 = vmatprep.mubr.bf16.mxu0 %v493
    %686 = vmatmul.mubr.bf16.gmra.mxu0 %v328
    %v687 = vpop.f32.mrf.mxu0
    %v688 = vadd.f32 %v108, %v687
    %v689 = vpop.f32.mrf.mxu0
    %v690 = vpop.f32.mrf.mxu0
    %v691 = vadd.f32 %v108, %v690
    %v692 = vpop.f32.mrf.mxu0
    %693 = vmatprep.mubr.bf16.mxu0 %v496
    %694 = vmatmul.mubr.bf16.gmra.mxu0 %v330
    %v695 = vpop.f32.mrf.mxu0
    %v696 = vadd.f32 %v108, %v695
    %v697 = vpop.f32.mrf.mxu0
    %v698 = vpop.f32.mrf.mxu0
    %v699 = vadd.f32 %v108, %v698
    %v700 = vpop.f32.mrf.mxu0
    %701 = vmatprep.mubr.bf16.mxu0 %v499
    %702 = vmatmul.mubr.bf16.gmra.mxu0 %v332
    %v703 = vpop.f32.mrf.mxu0
    %v704 = vadd.f32 %v108, %v703
    %v705 = vpop.f32.mrf.mxu0
    %v706 = vpop.f32.mrf.mxu0
    %v707 = vadd.f32 %v108, %v706
    %v708 = vpop.f32.mrf.mxu0
    %709 = vmatprep.mubr.bf16.mxu0 %v502
    %710 = vmatmul.mubr.bf16.gmra.mxu0 %v334
    %v711 = vpop.f32.mrf.mxu0
    %v712 = vadd.f32 %v108, %v711
    %v713 = vpop.f32.mrf.mxu0
    %v714 = vpop.f32.mrf.mxu0
    %v715 = vadd.f32 %v108, %v714
    %v716 = vpop.f32.mrf.mxu0
    %717 = vmatprep.mubr.bf16.mxu0 %v505
    %718 = vmatmul.mubr.bf16.gmra.mxu0 %v336
    %v719 = vpop.f32.mrf.mxu0
    %v720 = vadd.f32 %v108, %v719
    %v721 = vpop.f32.mrf.mxu0
    %v722 = vpop.f32.mrf.mxu0
    %v723 = vadd.f32 %v108, %v722
    %v724 = vpop.f32.mrf.mxu0
    %725 = vmatprep.mubr.bf16.mxu0 %v508
    %726 = vmatmul.mubr.bf16.gmra.mxu0 %v338
    %v727 = vpop.f32.mrf.mxu0
    %v728 = vadd.f32 %v108, %v727
    %v729 = vpop.f32.mrf.mxu0
    %v730 = vpop.f32.mrf.mxu0
    %v731 = vadd.f32 %v108, %v730
    %v732 = vpop.f32.mrf.mxu0
    %733 = vmatprep.mubr.bf16.mxu0 %v511
    %734 = vmatmul.mubr.bf16.gmra.mxu0 %v340
    %v735 = vpop.f32.mrf.mxu0
    %v736 = vadd.f32 %v108, %v735
    %v737 = vpop.f32.mrf.mxu0
    %v738 = vpop.f32.mrf.mxu0
    %v739 = vadd.f32 %v108, %v738
    %v740 = vpop.f32.mrf.mxu0
    %741 = vmatprep.mubr.bf16.mxu0 %v514
    %742 = vmatmul.mubr.bf16.gmra.mxu0 %v342
    %v743 = vpop.f32.mrf.mxu0
    %v744 = vadd.f32 %v108, %v743
    %v745 = vpop.f32.mrf.mxu0
    %v746 = vpop.f32.mrf.mxu0
    %v747 = vadd.f32 %v108, %v746
    %v748 = vpop.f32.mrf.mxu0
    %749 = vmatprep.mubr.bf16.mxu0 %v517
    %750 = vmatmul.mubr.bf16.gmra.mxu0 %v344
    %v751 = vpop.f32.mrf.mxu0
    %v752 = vadd.f32 %v108, %v751
    %v753 = vpop.f32.mrf.mxu0
    %v754 = vpop.f32.mrf.mxu0
    %v755 = vadd.f32 %v108, %v754
    %v756 = vpop.f32.mrf.mxu0
    %757 = vmatprep.mubr.bf16.mxu0 %v520
    %758 = vmatmul.mubr.bf16.gmra.mxu0 %v346
    %v759 = vpop.f32.mrf.mxu0
    %v760 = vadd.f32 %v108, %v759
    %v761 = vpop.f32.mrf.mxu0
    %v762 = vpop.f32.mrf.mxu0
    %v763 = vadd.f32 %v108, %v762
    %v764 = vpop.f32.mrf.mxu0
    %765 = vmatprep.mubr.bf16.mxu0 %v523
    %766 = vmatmul.mubr.bf16.gmra.mxu0 %v348
    %v767 = vpop.f32.mrf.mxu0
    %v768 = vadd.f32 %v108, %v767
    %v769 = vpop.f32.mrf.mxu0
    %v770 = vpop.f32.mrf.mxu0
    %v771 = vadd.f32 %v108, %v770
    %v772 = vpop.f32.mrf.mxu0
    %773 = vmatprep.mubr.bf16.mxu0 %v526
    %774 = vmatmul.mubr.bf16.gmra.mxu0 %v350
    %v775 = vpop.f32.mrf.mxu0
    %v776 = vadd.f32 %v108, %v775
    %v777 = vpop.f32.mrf.mxu0
    %v778 = vpop.f32.mrf.mxu0
    %v779 = vadd.f32 %v108, %v778
    %v780 = vpop.f32.mrf.mxu0
    %781 = vmatprep.mubr.bf16.mxu0 %v529
    %782 = vmatmul.mubr.bf16.gmra.mxu0 %v352
    %v783 = vpop.f32.mrf.mxu0
    %v784 = vadd.f32 %v108, %v783
    %v785 = vpop.f32.mrf.mxu0
    %v786 = vpop.f32.mrf.mxu0
    %v787 = vadd.f32 %v108, %v786
    %v788 = vpop.f32.mrf.mxu0
    %789 = vmatprep.mubr.bf16.mxu0 %v532
    %790 = vmatmul.mubr.bf16.gmra.mxu0 %v354
    %v791 = vpop.f32.mrf.mxu0
    %v792 = vadd.f32 %v108, %v791
    %v793 = vpop.f32.mrf.mxu0
    %v794 = vpop.f32.mrf.mxu0
    %v795 = vadd.f32 %v108, %v794
    %v796 = vpop.f32.mrf.mxu0
    %797 = vmatprep.mubr.bf16.mxu0 %v535
    %798 = vmatmul.mubr.bf16.gmra.mxu0 %v356
    %v799 = vpop.f32.mrf.mxu0
    %v800 = vadd.f32 %v108, %v799
    %v801 = vpop.f32.mrf.mxu0
    %v802 = vpop.f32.mrf.mxu0
    %v803 = vadd.f32 %v108, %v802
    %v804 = vpop.f32.mrf.mxu0
    %805 = vmatprep.mubr.bf16.mxu0 %v538
    %806 = vmatmul.mubr.bf16.gmra.mxu0 %v358
    %v807 = vpop.f32.mrf.mxu0
    %v808 = vadd.f32 %v108, %v807
    %v809 = vpop.f32.mrf.mxu0
    %v810 = vpop.f32.mrf.mxu0
    %v811 = vadd.f32 %v108, %v810
    %v812 = vpop.f32.mrf.mxu0
    %813 = vmatprep.mubr.bf16.mxu0 %v541
    %814 = vmatmul.mubr.bf16.gmra.mxu0 %v360
    %v815 = vpop.f32.mrf.mxu0
    %v816 = vadd.f32 %v108, %v815
    %v817 = vpop.f32.mrf.mxu0
    %v818 = vpop.f32.mrf.mxu0
    %v819 = vadd.f32 %v108, %v818
    %v820 = vpop.f32.mrf.mxu0
    %821 = vmatprep.mubr.bf16.mxu0 %v544
    %822 = vmatmul.mubr.bf16.gmra.mxu0 %v362
    %v823 = vpop.f32.mrf.mxu0
    %v824 = vadd.f32 %v108, %v823
    %v825 = vpop.f32.mrf.mxu0
    %v826 = vpop.f32.mrf.mxu0
    %v827 = vadd.f32 %v108, %v826
    %v828 = vpop.f32.mrf.mxu0
    %829 = vmatprep.mubr.bf16.mxu0 %v547
    %830 = vmatmul.mubr.bf16.gmra.mxu0 %v364
    %v831 = vpop.f32.mrf.mxu0
    %v832 = vadd.f32 %v108, %v831
    %v833 = vpop.f32.mrf.mxu0
    %v834 = vpop.f32.mrf.mxu0
    %v835 = vadd.f32 %v108, %v834
    %v836 = vpop.f32.mrf.mxu0
    %837 = vdwg.mxu0
    %838 = vst [vmem:[%s4] sm:$0xff] %v584
    %839 = vst [vmem:[%s4 + $0x8] sm:$0xff] %v587
    %840 = vst [vmem:[%s4 + $0x10] sm:$0xff] %v592
    %841 = vst [vmem:[%s4 + $0x18] sm:$0xff] %v595
    %842 = vst [vmem:[%s4 + $0x20] sm:$0xff] %v600
    %843 = vst [vmem:[%s4 + $0x28] sm:$0xff] %v603
    %844 = vst [vmem:[%s4 + $0x30] sm:$0xff] %v608
    %845 = vst [vmem:[%s4 + $0x38] sm:$0xff] %v611
    %846 = vst [vmem:[%s4 + $0x40] sm:$0xff] %v616
    %847 = vst [vmem:[%s4 + $0x48] sm:$0xff] %v619
    %848 = vst [vmem:[%s4 + $0x50] sm:$0xff] %v624
    %849 = vst [vmem:[%s4 + $0x58] sm:$0xff] %v627
    %850 = vst [vmem:[%s4 + $0x60] sm:$0xff] %v632
    %851 = vst [vmem:[%s4 + $0x68] sm:$0xff] %v635
    %852 = vst [vmem:[%s4 + $0x70] sm:$0xff] %v640
    %853 = vst [vmem:[%s4 + $0x78] sm:$0xff] %v643
    %854 = vst [vmem:[%s4 + $0x80] sm:$0xff] %v648
    %855 = vst [vmem:[%s4 + $0x88] sm:$0xff] %v651
    %856 = vst [vmem:[%s4 + $0x90] sm:$0xff] %v656
    %857 = vst [vmem:[%s4 + $0x98] sm:$0xff] %v659
    %858 = vst [vmem:[%s4 + $0xa0] sm:$0xff] %v664
    %859 = vst [vmem:[%s4 + $0xa8] sm:$0xff] %v667
    %860 = vst [vmem:[%s4 + $0xb0] sm:$0xff] %v672
    %861 = vst [vmem:[%s4 + $0xb8] sm:$0xff] %v675
    %862 = vst [vmem:[%s4 + $0xc0] sm:$0xff] %v680
    %863 = vst [vmem:[%s4 + $0xc8] sm:$0xff] %v683
    %864 = vst [vmem:[%s4 + $0xd0] sm:$0xff] %v688
    %865 = vst [vmem:[%s4 + $0xd8] sm:$0xff] %v691
    %866 = vst [vmem:[%s4 + $0xe0] sm:$0xff] %v696
    %867 = vst [vmem:[%s4 + $0xe8] sm:$0xff] %v699
    %868 = vst [vmem:[%s4 + $0xf0] sm:$0xff] %v704
    %869 = vst [vmem:[%s4 + $0xf8] sm:$0xff] %v707
    %870 = vst [vmem:[%s4 + $0x100] sm:$0xff] %v712
    %871 = vst [vmem:[%s4 + $0x108] sm:$0xff] %v715
    %872 = vst [vmem:[%s4 + $0x110] sm:$0xff] %v720
    %873 = vst [vmem:[%s4 + $0x118] sm:$0xff] %v723
    %874 = vst [vmem:[%s4 + $0x120] sm:$0xff] %v728
    %875 = vst [vmem:[%s4 + $0x128] sm:$0xff] %v731
    %876 = vst [vmem:[%s4 + $0x130] sm:$0xff] %v736
    %877 = vst [vmem:[%s4 + $0x138] sm:$0xff] %v739
    %878 = vst [vmem:[%s4 + $0x140] sm:$0xff] %v744
    %879 = vst [vmem:[%s4 + $0x148] sm:$0xff] %v747
    %880 = vst [vmem:[%s4 + $0x150] sm:$0xff] %v752
    %881 = vst [vmem:[%s4 + $0x158] sm:$0xff] %v755
    %882 = vst [vmem:[%s4 + $0x160] sm:$0xff] %v760
    %883 = vst [vmem:[%s4 + $0x168] sm:$0xff] %v763
    %884 = vst [vmem:[%s4 + $0x170] sm:$0xff] %v768
    %885 = vst [vmem:[%s4 + $0x178] sm:$0xff] %v771
    %886 = vst [vmem:[%s4 + $0x180] sm:$0xff] %v776
    %887 = vst [vmem:[%s4 + $0x188] sm:$0xff] %v779
    %888 = vst [vmem:[%s4 + $0x190] sm:$0xff] %v784
    %889 = vst [vmem:[%s4 + $0x198] sm:$0xff] %v787
    %890 = vst [vmem:[%s4 + $0x1a0] sm:$0xff] %v792
    %891 = vst [vmem:[%s4 + $0x1a8] sm:$0xff] %v795
    %892 = vst [vmem:[%s4 + $0x1b0] sm:$0xff] %v800
    %893 = vst [vmem:[%s4 + $0x1b8] sm:$0xff] %v803
    %894 = vst [vmem:[%s4 + $0x1c0] sm:$0xff] %v808
    %895 = vst [vmem:[%s4 + $0x1c8] sm:$0xff] %v811
    %896 = vst [vmem:[%s4 + $0x1d0] sm:$0xff] %v816
    %897 = vst [vmem:[%s4 + $0x1d8] sm:$0xff] %v819
    %898 = vst [vmem:[%s4 + $0x1e0] sm:$0xff] %v824
    %899 = vst [vmem:[%s4 + $0x1e8] sm:$0xff] %v827
    %900 = vst [vmem:[%s4 + $0x1f0] sm:$0xff] %v832
    %901 = vst [vmem:[%s4 + $0x1f8] sm:$0xff] %v835
    %s902 = smul.u32 0, 512
    %v903 = vlaneseq
    %v904 = vshrl.u32 %v903, 7
    %v905 = vadd.s32 %v904, 8
    %v906 = vadd.s32 %v904, 16
    %v907 = vadd.s32 %v904, 24
    %v908 = vadd.s32 %v904, 32
    %v909 = vadd.s32 %v904, 40
    %v910 = vadd.s32 %v904, 48
    %v911 = vadd.s32 %v904, 56
    %v912 = vadd.s32 %v904, 64
    %v913 = vadd.s32 %v904, 72
    %v914 = vadd.s32 %v904, 80
    %v915 = vadd.s32 %v904, 88
    %v916 = vadd.s32 %v904, 96
    %v917 = vadd.s32 %v904, 104
    %v918 = vadd.s32 %v904, 112
    %v919 = vadd.s32 %v904, 120
    %v920 = vadd.s32 %v904, 128
    %v921 = vadd.s32 %v904, 136
    %v922 = vadd.s32 %v904, 144
    %v923 = vadd.s32 %v904, 152
    %v924 = vadd.s32 %v904, 160
    %v925 = vadd.s32 %v904, 168
    %v926 = vadd.s32 %v904, 176
    %v927 = vadd.s32 %v904, 184
    %v928 = vadd.s32 %v904, 192
    %v929 = vadd.s32 %v904, 200
    %v930 = vadd.s32 %v904, 208
    %v931 = vadd.s32 %v904, 216
    %v932 = vadd.s32 %v904, 224
    %v933 = vadd.s32 %v904, 232
    %v934 = vadd.s32 %v904, 240
    %v935 = vadd.s32 %v904, 248
    %v936 = vadd.s32 %v904, 256
    %v937 = vadd.s32 %v904, 264
    %v938 = vadd.s32 %v904, 272
    %v939 = vadd.s32 %v904, 280
    %v940 = vadd.s32 %v904, 288
    %v941 = vadd.s32 %v904, 296
    %v942 = vadd.s32 %v904, 304
    %v943 = vadd.s32 %v904, 312
    %v944 = vadd.s32 %v904, 320
    %v945 = vadd.s32 %v904, 328
    %v946 = vadd.s32 %v904, 336
    %v947 = vadd.s32 %v904, 344
    %v948 = vadd.s32 %v904, 352
    %v949 = vadd.s32 %v904, 360
    %v950 = vadd.s32 %v904, 368
    %v951 = vadd.s32 %v904, 376
    %v952 = vadd.s32 %v904, 384
    %v953 = vadd.s32 %v904, 392
    %v954 = vadd.s32 %v904, 400
    %v955 = vadd.s32 %v904, 408
    %v956 = vadd.s32 %v904, 416
    %v957 = vadd.s32 %v904, 424
    %v958 = vadd.s32 %v904, 432
    %v959 = vadd.s32 %v904, 440
    %v960 = vadd.s32 %v904, 448
    %v961 = vadd.s32 %v904, 456
    %v962 = vadd.s32 %v904, 464
    %v963 = vadd.s32 %v904, 472
    %v964 = vadd.s32 %v904, 480
    %v965 = vadd.s32 %v904, 488
    %v966 = vadd.s32 %v904, 496
    %v967 = vadd.s32 %v904, 504
    %v968 = vstv %s902
    %v969 = vadd.s32 %v968, %v904
    %v970 = vadd.s32 %v968, %v905
    %v971 = vadd.s32 %v968, %v906
    %v972 = vadd.s32 %v968, %v907
    %v973 = vadd.s32 %v968, %v908
    %v974 = vadd.s32 %v968, %v909
    %v975 = vadd.s32 %v968, %v910
    %v976 = vadd.s32 %v968, %v911
    %v977 = vadd.s32 %v968, %v912
    %v978 = vadd.s32 %v968, %v913
    %v979 = vadd.s32 %v968, %v914
    %v980 = vadd.s32 %v968, %v915
    %v981 = vadd.s32 %v968, %v916
    %v982 = vadd.s32 %v968, %v917
    %v983 = vadd.s32 %v968, %v918
    %v984 = vadd.s32 %v968, %v919
    %v985 = vadd.s32 %v968, %v920
    %v986 = vadd.s32 %v968, %v921
    %v987 = vadd.s32 %v968, %v922
    %v988 = vadd.s32 %v968, %v923
    %v989 = vadd.s32 %v968, %v924
    %v990 = vadd.s32 %v968, %v925
    %v991 = vadd.s32 %v968, %v926
    %v992 = vadd.s32 %v968, %v927
    %v993 = vadd.s32 %v968, %v928
    %v994 = vadd.s32 %v968, %v929
    %v995 = vadd.s32 %v968, %v930
    %v996 = vadd.s32 %v968, %v931
    %v997 = vadd.s32 %v968, %v932
    %v998 = vadd.s32 %v968, %v933
    %v999 = vadd.s32 %v968, %v934
    %v1000 = vadd.s32 %v968, %v935
    %v1001 = vadd.s32 %v968, %v936
    %v1002 = vadd.s32 %v968, %v937
    %v1003 = vadd.s32 %v968, %v938
    %v1004 = vadd.s32 %v968, %v939
    %v1005 = vadd.s32 %v968, %v940
    %v1006 = vadd.s32 %v968, %v941
    %v1007 = vadd.s32 %v968, %v942
    %v1008 = vadd.s32 %v968, %v943
    %v1009 = vadd.s32 %v968, %v944
    %v1010 = vadd.s32 %v968, %v945
    %v1011 = vadd.s32 %v968, %v946
    %v1012 = vadd.s32 %v968, %v947
    %v1013 = vadd.s32 %v968, %v948
    %v1014 = vadd.s32 %v968, %v949
    %v1015 = vadd.s32 %v968, %v950
    %v1016 = vadd.s32 %v968, %v951
    %v1017 = vadd.s32 %v968, %v952
    %v1018 = vadd.s32 %v968, %v953
    %v1019 = vadd.s32 %v968, %v954
    %v1020 = vadd.s32 %v968, %v955
    %v1021 = vadd.s32 %v968, %v956
    %v1022 = vadd.s32 %v968, %v957
    %v1023 = vadd.s32 %v968, %v958
    %v1024 = vadd.s32 %v968, %v959
    %v1025 = vadd.s32 %v968, %v960
    %v1026 = vadd.s32 %v968, %v961
    %v1027 = vadd.s32 %v968, %v962
    %v1028 = vadd.s32 %v968, %v963
    %v1029 = vadd.s32 %v968, %v964
    %v1030 = vadd.s32 %v968, %v965
    %v1031 = vadd.s32 %v968, %v966
    %v1032 = vadd.s32 %v968, %v967
    %vm1033 = vcmp.lt.s32.totalorder %v969, 512
    %vm1034 = vcmp.lt.s32.totalorder %v970, 512
    %vm1035 = vcmp.lt.s32.totalorder %v971, 512
    %vm1036 = vcmp.lt.s32.totalorder %v972, 512
    %vm1037 = vcmp.lt.s32.totalorder %v973, 512
    %vm1038 = vcmp.lt.s32.totalorder %v974, 512
    %vm1039 = vcmp.lt.s32.totalorder %v975, 512
    %vm1040 = vcmp.lt.s32.totalorder %v976, 512
    %vm1041 = vcmp.lt.s32.totalorder %v977, 512
    %vm1042 = vcmp.lt.s32.totalorder %v978, 512
    %vm1043 = vcmp.lt.s32.totalorder %v979, 512
    %vm1044 = vcmp.lt.s32.totalorder %v980, 512
    %vm1045 = vcmp.lt.s32.totalorder %v981, 512
    %vm1046 = vcmp.lt.s32.totalorder %v982, 512
    %vm1047 = vcmp.lt.s32.totalorder %v983, 512
    %vm1048 = vcmp.lt.s32.totalorder %v984, 512
    %vm1049 = vcmp.lt.s32.totalorder %v985, 512
    %vm1050 = vcmp.lt.s32.totalorder %v986, 512
    %vm1051 = vcmp.lt.s32.totalorder %v987, 512
    %vm1052 = vcmp.lt.s32.totalorder %v988, 512
    %vm1053 = vcmp.lt.s32.totalorder %v989, 512
    %vm1054 = vcmp.lt.s32.totalorder %v990, 512
    %vm1055 = vcmp.lt.s32.totalorder %v991, 512
    %vm1056 = vcmp.lt.s32.totalorder %v992, 512
    %vm1057 = vcmp.lt.s32.totalorder %v993, 512
    %vm1058 = vcmp.lt.s32.totalorder %v994, 512
    %vm1059 = vcmp.lt.s32.totalorder %v995, 512
    %vm1060 = vcmp.lt.s32.totalorder %v996, 512
    %vm1061 = vcmp.lt.s32.totalorder %v997, 512
    %vm1062 = vcmp.lt.s32.totalorder %v998, 512
    %vm1063 = vcmp.lt.s32.totalorder %v999, 512
    %vm1064 = vcmp.lt.s32.totalorder %v1000, 512
    %vm1065 = vcmp.lt.s32.totalorder %v1001, 512
    %vm1066 = vcmp.lt.s32.totalorder %v1002, 512
    %vm1067 = vcmp.lt.s32.totalorder %v1003, 512
    %vm1068 = vcmp.lt.s32.totalorder %v1004, 512
    %vm1069 = vcmp.lt.s32.totalorder %v1005, 512
    %vm1070 = vcmp.lt.s32.totalorder %v1006, 512
    %vm1071 = vcmp.lt.s32.totalorder %v1007, 512
    %vm1072 = vcmp.lt.s32.totalorder %v1008, 512
    %vm1073 = vcmp.lt.s32.totalorder %v1009, 512
    %vm1074 = vcmp.lt.s32.totalorder %v1010, 512
    %vm1075 = vcmp.lt.s32.totalorder %v1011, 512
    %vm1076 = vcmp.lt.s32.totalorder %v1012, 512
    %vm1077 = vcmp.lt.s32.totalorder %v1013, 512
    %vm1078 = vcmp.lt.s32.totalorder %v1014, 512
    %vm1079 = vcmp.lt.s32.totalorder %v1015, 512
    %vm1080 = vcmp.lt.s32.totalorder %v1016, 512
    %vm1081 = vcmp.lt.s32.totalorder %v1017, 512
    %vm1082 = vcmp.lt.s32.totalorder %v1018, 512
    %vm1083 = vcmp.lt.s32.totalorder %v1019, 512
    %vm1084 = vcmp.lt.s32.totalorder %v1020, 512
    %vm1085 = vcmp.lt.s32.totalorder %v1021, 512
    %vm1086 = vcmp.lt.s32.totalorder %v1022, 512
    %vm1087 = vcmp.lt.s32.totalorder %v1023, 512
    %vm1088 = vcmp.lt.s32.totalorder %v1024, 512
    %vm1089 = vcmp.lt.s32.totalorder %v1025, 512
    %vm1090 = vcmp.lt.s32.totalorder %v1026, 512
    %vm1091 = vcmp.lt.s32.totalorder %v1027, 512
    %vm1092 = vcmp.lt.s32.totalorder %v1028, 512
    %vm1093 = vcmp.lt.s32.totalorder %v1029, 512
    %vm1094 = vcmp.lt.s32.totalorder %v1030, 512
    %vm1095 = vcmp.lt.s32.totalorder %v1031, 512
    %vm1096 = vcmp.lt.s32.totalorder %v1032, 512
    %v1097 = vsel %vm1033, 1, 0
    %v1098 = vsel %vm1034, 1, 0
    %v1099 = vsel %vm1035, 1, 0
    %v1100 = vsel %vm1036, 1, 0
    %v1101 = vsel %vm1037, 1, 0
    %v1102 = vsel %vm1038, 1, 0
    %v1103 = vsel %vm1039, 1, 0
    %v1104 = vsel %vm1040, 1, 0
    %v1105 = vsel %vm1041, 1, 0
    %v1106 = vsel %vm1042, 1, 0
    %v1107 = vsel %vm1043, 1, 0
    %v1108 = vsel %vm1044, 1, 0
    %v1109 = vsel %vm1045, 1, 0
    %v1110 = vsel %vm1046, 1, 0
    %v1111 = vsel %vm1047, 1, 0
    %v1112 = vsel %vm1048, 1, 0
    %v1113 = vsel %vm1049, 1, 0
    %v1114 = vsel %vm1050, 1, 0
    %v1115 = vsel %vm1051, 1, 0
    %v1116 = vsel %vm1052, 1, 0
    %v1117 = vsel %vm1053, 1, 0
    %v1118 = vsel %vm1054, 1, 0
    %v1119 = vsel %vm1055, 1, 0
    %v1120 = vsel %vm1056, 1, 0
    %v1121 = vsel %vm1057, 1, 0
    %v1122 = vsel %vm1058, 1, 0
    %v1123 = vsel %vm1059, 1, 0
    %v1124 = vsel %vm1060, 1, 0
    %v1125 = vsel %vm1061, 1, 0
    %v1126 = vsel %vm1062, 1, 0
    %v1127 = vsel %vm1063, 1, 0
    %v1128 = vsel %vm1064, 1, 0
    %v1129 = vsel %vm1065, 1, 0
    %v1130 = vsel %vm1066, 1, 0
    %v1131 = vsel %vm1067, 1, 0
    %v1132 = vsel %vm1068, 1, 0
    %v1133 = vsel %vm1069, 1, 0
    %v1134 = vsel %vm1070, 1, 0
    %v1135 = vsel %vm1071, 1, 0
    %v1136 = vsel %vm1072, 1, 0
    %v1137 = vsel %vm1073, 1, 0
    %v1138 = vsel %vm1074, 1, 0
    %v1139 = vsel %vm1075, 1, 0
    %v1140 = vsel %vm1076, 1, 0
    %v1141 = vsel %vm1077, 1, 0
    %v1142 = vsel %vm1078, 1, 0
    %v1143 = vsel %vm1079, 1, 0
    %v1144 = vsel %vm1080, 1, 0
    %v1145 = vsel %vm1081, 1, 0
    %v1146 = vsel %vm1082, 1, 0
    %v1147 = vsel %vm1083, 1, 0
    %v1148 = vsel %vm1084, 1, 0
    %v1149 = vsel %vm1085, 1, 0
    %v1150 = vsel %vm1086, 1, 0
    %v1151 = vsel %vm1087, 1, 0
    %v1152 = vsel %vm1088, 1, 0
    %v1153 = vsel %vm1089, 1, 0
    %v1154 = vsel %vm1090, 1, 0
    %v1155 = vsel %vm1091, 1, 0
    %v1156 = vsel %vm1092, 1, 0
    %v1157 = vsel %vm1093, 1, 0
    %v1158 = vsel %vm1094, 1, 0
    %v1159 = vsel %vm1095, 1, 0
    %v1160 = vsel %vm1096, 1, 0
    %v1161 = vcvt.s32.f32 %v1097
    %v1162 = vcvt.s32.f32 %v1098
    %v1163 = vcvt.s32.f32 %v1099
    %v1164 = vcvt.s32.f32 %v1100
    %v1165 = vcvt.s32.f32 %v1101
    %v1166 = vcvt.s32.f32 %v1102
    %v1167 = vcvt.s32.f32 %v1103
    %v1168 = vcvt.s32.f32 %v1104
    %v1169 = vcvt.s32.f32 %v1105
    %v1170 = vcvt.s32.f32 %v1106
    %v1171 = vcvt.s32.f32 %v1107
    %v1172 = vcvt.s32.f32 %v1108
    %v1173 = vcvt.s32.f32 %v1109
    %v1174 = vcvt.s32.f32 %v1110
    %v1175 = vcvt.s32.f32 %v1111
    %v1176 = vcvt.s32.f32 %v1112
    %v1177 = vcvt.s32.f32 %v1113
    %v1178 = vcvt.s32.f32 %v1114
    %v1179 = vcvt.s32.f32 %v1115
    %v1180 = vcvt.s32.f32 %v1116
    %v1181 = vcvt.s32.f32 %v1117
    %v1182 = vcvt.s32.f32 %v1118
    %v1183 = vcvt.s32.f32 %v1119
    %v1184 = vcvt.s32.f32 %v1120
    %v1185 = vcvt.s32.f32 %v1121
    %v1186 = vcvt.s32.f32 %v1122
    %v1187 = vcvt.s32.f32 %v1123
    %v1188 = vcvt.s32.f32 %v1124
    %v1189 = vcvt.s32.f32 %v1125
    %v1190 = vcvt.s32.f32 %v1126
    %v1191 = vcvt.s32.f32 %v1127
    %v1192 = vcvt.s32.f32 %v1128
    %v1193 = vcvt.s32.f32 %v1129
    %v1194 = vcvt.s32.f32 %v1130
    %v1195 = vcvt.s32.f32 %v1131
    %v1196 = vcvt.s32.f32 %v1132
    %v1197 = vcvt.s32.f32 %v1133
    %v1198 = vcvt.s32.f32 %v1134
    %v1199 = vcvt.s32.f32 %v1135
    %v1200 = vcvt.s32.f32 %v1136
    %v1201 = vcvt.s32.f32 %v1137
    %v1202 = vcvt.s32.f32 %v1138
    %v1203 = vcvt.s32.f32 %v1139
    %v1204 = vcvt.s32.f32 %v1140
    %v1205 = vcvt.s32.f32 %v1141
    %v1206 = vcvt.s32.f32 %v1142
    %v1207 = vcvt.s32.f32 %v1143
    %v1208 = vcvt.s32.f32 %v1144
    %v1209 = vcvt.s32.f32 %v1145
    %v1210 = vcvt.s32.f32 %v1146
    %v1211 = vcvt.s32.f32 %v1147
    %v1212 = vcvt.s32.f32 %v1148
    %v1213 = vcvt.s32.f32 %v1149
    %v1214 = vcvt.s32.f32 %v1150
    %v1215 = vcvt.s32.f32 %v1151
    %v1216 = vcvt.s32.f32 %v1152
    %v1217 = vcvt.s32.f32 %v1153
    %v1218 = vcvt.s32.f32 %v1154
    %v1219 = vcvt.s32.f32 %v1155
    %v1220 = vcvt.s32.f32 %v1156
    %v1221 = vcvt.s32.f32 %v1157
    %v1222 = vcvt.s32.f32 %v1158
    %v1223 = vcvt.s32.f32 %v1159
    %v1224 = vcvt.s32.f32 %v1160
    %v1225 = vld [vmem:[%s3] sm:$0xff]
    %v1226 = vld [vmem:[%s3 + $0x8] sm:$0xff]
    %v1227 = vld [vmem:[%s3 + $0x10] sm:$0xff]
    %v1228 = vld [vmem:[%s3 + $0x18] sm:$0xff]
    %v1229 = vld [vmem:[%s3 + $0x20] sm:$0xff]
    %v1230 = vld [vmem:[%s3 + $0x28] sm:$0xff]
    %v1231 = vld [vmem:[%s3 + $0x30] sm:$0xff]
    %v1232 = vld [vmem:[%s3 + $0x38] sm:$0xff]
    %v1233 = vld [vmem:[%s3 + $0x40] sm:$0xff]
    %v1234 = vld [vmem:[%s3 + $0x48] sm:$0xff]
    %v1235 = vld [vmem:[%s3 + $0x50] sm:$0xff]
    %v1236 = vld [vmem:[%s3 + $0x58] sm:$0xff]
    %v1237 = vld [vmem:[%s3 + $0x60] sm:$0xff]
    %v1238 = vld [vmem:[%s3 + $0x68] sm:$0xff]
    %v1239 = vld [vmem:[%s3 + $0x70] sm:$0xff]
    %v1240 = vld [vmem:[%s3 + $0x78] sm:$0xff]
    %v1241 = vld [vmem:[%s3 + $0x80] sm:$0xff]
    %v1242 = vld [vmem:[%s3 + $0x88] sm:$0xff]
    %v1243 = vld [vmem:[%s3 + $0x90] sm:$0xff]
    %v1244 = vld [vmem:[%s3 + $0x98] sm:$0xff]
    %v1245 = vld [vmem:[%s3 + $0xa0] sm:$0xff]
    %v1246 = vld [vmem:[%s3 + $0xa8] sm:$0xff]
    %v1247 = vld [vmem:[%s3 + $0xb0] sm:$0xff]
    %v1248 = vld [vmem:[%s3 + $0xb8] sm:$0xff]
    %v1249 = vld [vmem:[%s3 + $0xc0] sm:$0xff]
    %v1250 = vld [vmem:[%s3 + $0xc8] sm:$0xff]
    %v1251 = vld [vmem:[%s3 + $0xd0] sm:$0xff]
    %v1252 = vld [vmem:[%s3 + $0xd8] sm:$0xff]
    %v1253 = vld [vmem:[%s3 + $0xe0] sm:$0xff]
    %v1254 = vld [vmem:[%s3 + $0xe8] sm:$0xff]
    %v1255 = vld [vmem:[%s3 + $0xf0] sm:$0xff]
    %v1256 = vld [vmem:[%s3 + $0xf8] sm:$0xff]
    %v1257 = vld [vmem:[%s3 + $0x100] sm:$0xff]
    %v1258 = vld [vmem:[%s3 + $0x108] sm:$0xff]
    %v1259 = vld [vmem:[%s3 + $0x110] sm:$0xff]
    %v1260 = vld [vmem:[%s3 + $0x118] sm:$0xff]
    %v1261 = vld [vmem:[%s3 + $0x120] sm:$0xff]
    %v1262 = vld [vmem:[%s3 + $0x128] sm:$0xff]
    %v1263 = vld [vmem:[%s3 + $0x130] sm:$0xff]
    %v1264 = vld [vmem:[%s3 + $0x138] sm:$0xff]
    %v1265 = vld [vmem:[%s3 + $0x140] sm:$0xff]
    %v1266 = vld [vmem:[%s3 + $0x148] sm:$0xff]
    %v1267 = vld [vmem:[%s3 + $0x150] sm:$0xff]
    %v1268 = vld [vmem:[%s3 + $0x158] sm:$0xff]
    %v1269 = vld [vmem:[%s3 + $0x160] sm:$0xff]
    %v1270 = vld [vmem:[%s3 + $0x168] sm:$0xff]
    %v1271 = vld [vmem:[%s3 + $0x170] sm:$0xff]
    %v1272 = vld [vmem:[%s3 + $0x178] sm:$0xff]
    %v1273 = vld [vmem:[%s3 + $0x180] sm:$0xff]
    %v1274 = vld [vmem:[%s3 + $0x188] sm:$0xff]
    %v1275 = vld [vmem:[%s3 + $0x190] sm:$0xff]
    %v1276 = vld [vmem:[%s3 + $0x198] sm:$0xff]
    %v1277 = vld [vmem:[%s3 + $0x1a0] sm:$0xff]
    %v1278 = vld [vmem:[%s3 + $0x1a8] sm:$0xff]
    %v1279 = vld [vmem:[%s3 + $0x1b0] sm:$0xff]
    %v1280 = vld [vmem:[%s3 + $0x1b8] sm:$0xff]
    %v1281 = vld [vmem:[%s3 + $0x1c0] sm:$0xff]
    %v1282 = vld [vmem:[%s3 + $0x1c8] sm:$0xff]
    %v1283 = vld [vmem:[%s3 + $0x1d0] sm:$0xff]
    %v1284 = vld [vmem:[%s3 + $0x1d8] sm:$0xff]
    %v1285 = vld [vmem:[%s3 + $0x1e0] sm:$0xff]
    %v1286 = vld [vmem:[%s3 + $0x1e8] sm:$0xff]
    %v1287 = vld [vmem:[%s3 + $0x1f0] sm:$0xff]
    %v1288 = vld [vmem:[%s3 + $0x1f8] sm:$0xff]
    %v1289 = vsub.f32 %v584, %v1225
    %v1290 = vsub.f32 %v587, %v1226
    %v1291 = vsub.f32 %v592, %v1227
    %v1292 = vsub.f32 %v595, %v1228
    %v1293 = vsub.f32 %v600, %v1229
    %v1294 = vsub.f32 %v603, %v1230
    %v1295 = vsub.f32 %v608, %v1231
    %v1296 = vsub.f32 %v611, %v1232
    %v1297 = vsub.f32 %v616, %v1233
    %v1298 = vsub.f32 %v619, %v1234
    %v1299 = vsub.f32 %v624, %v1235
    %v1300 = vsub.f32 %v627, %v1236
    %v1301 = vsub.f32 %v632, %v1237
    %v1302 = vsub.f32 %v635, %v1238
    %v1303 = vsub.f32 %v640, %v1239
    %v1304 = vsub.f32 %v643, %v1240
    %v1305 = vsub.f32 %v648, %v1241
    %v1306 = vsub.f32 %v651, %v1242
    %v1307 = vsub.f32 %v656, %v1243
    %v1308 = vsub.f32 %v659, %v1244
    %v1309 = vsub.f32 %v664, %v1245
    %v1310 = vsub.f32 %v667, %v1246
    %v1311 = vsub.f32 %v672, %v1247
    %v1312 = vsub.f32 %v675, %v1248
    %v1313 = vsub.f32 %v680, %v1249
    %v1314 = vsub.f32 %v683, %v1250
    %v1315 = vsub.f32 %v688, %v1251
    %v1316 = vsub.f32 %v691, %v1252
    %v1317 = vsub.f32 %v696, %v1253
    %v1318 = vsub.f32 %v699, %v1254
    %v1319 = vsub.f32 %v704, %v1255
    %v1320 = vsub.f32 %v707, %v1256
    %v1321 = vsub.f32 %v712, %v1257
    %v1322 = vsub.f32 %v715, %v1258
    %v1323 = vsub.f32 %v720, %v1259
    %v1324 = vsub.f32 %v723, %v1260
    %v1325 = vsub.f32 %v728, %v1261
    %v1326 = vsub.f32 %v731, %v1262
    %v1327 = vsub.f32 %v736, %v1263
    %v1328 = vsub.f32 %v739, %v1264
    %v1329 = vsub.f32 %v744, %v1265
    %v1330 = vsub.f32 %v747, %v1266
    %v1331 = vsub.f32 %v752, %v1267
    %v1332 = vsub.f32 %v755, %v1268
    %v1333 = vsub.f32 %v760, %v1269
    %v1334 = vsub.f32 %v763, %v1270
    %v1335 = vsub.f32 %v768, %v1271
    %v1336 = vsub.f32 %v771, %v1272
    %v1337 = vsub.f32 %v776, %v1273
    %v1338 = vsub.f32 %v779, %v1274
    %v1339 = vsub.f32 %v784, %v1275
    %v1340 = vsub.f32 %v787, %v1276
    %v1341 = vsub.f32 %v792, %v1277
    %v1342 = vsub.f32 %v795, %v1278
    %v1343 = vsub.f32 %v800, %v1279
    %v1344 = vsub.f32 %v803, %v1280
    %v1345 = vsub.f32 %v808, %v1281
    %v1346 = vsub.f32 %v811, %v1282
    %v1347 = vsub.f32 %v816, %v1283
    %v1348 = vsub.f32 %v819, %v1284
    %v1349 = vsub.f32 %v824, %v1285
    %v1350 = vsub.f32 %v827, %v1286
    %v1351 = vsub.f32 %v832, %v1287
    %v1352 = vsub.f32 %v835, %v1288
    %v1353 = vmul.f32 %v1289, %v1289
    %v1354 = vmul.f32 %v1290, %v1290
    %v1355 = vmul.f32 %v1291, %v1291
    %v1356 = vmul.f32 %v1292, %v1292
    %v1357 = vmul.f32 %v1293, %v1293
    %v1358 = vmul.f32 %v1294, %v1294
    %v1359 = vmul.f32 %v1295, %v1295
    %v1360 = vmul.f32 %v1296, %v1296
    %v1361 = vmul.f32 %v1297, %v1297
    %v1362 = vmul.f32 %v1298, %v1298
    %v1363 = vmul.f32 %v1299, %v1299
    %v1364 = vmul.f32 %v1300, %v1300
    %v1365 = vmul.f32 %v1301, %v1301
    %v1366 = vmul.f32 %v1302, %v1302
    %v1367 = vmul.f32 %v1303, %v1303
    %v1368 = vmul.f32 %v1304, %v1304
    %v1369 = vmul.f32 %v1305, %v1305
    %v1370 = vmul.f32 %v1306, %v1306
    %v1371 = vmul.f32 %v1307, %v1307
    %v1372 = vmul.f32 %v1308, %v1308
    %v1373 = vmul.f32 %v1309, %v1309
    %v1374 = vmul.f32 %v1310, %v1310
    %v1375 = vmul.f32 %v1311, %v1311
    %v1376 = vmul.f32 %v1312, %v1312
    %v1377 = vmul.f32 %v1313, %v1313
    %v1378 = vmul.f32 %v1314, %v1314
    %v1379 = vmul.f32 %v1315, %v1315
    %v1380 = vmul.f32 %v1316, %v1316
    %v1381 = vmul.f32 %v1317, %v1317
    %v1382 = vmul.f32 %v1318, %v1318
    %v1383 = vmul.f32 %v1319, %v1319
    %v1384 = vmul.f32 %v1320, %v1320
    %v1385 = vmul.f32 %v1321, %v1321
    %v1386 = vmul.f32 %v1322, %v1322
    %v1387 = vmul.f32 %v1323, %v1323
    %v1388 = vmul.f32 %v1324, %v1324
    %v1389 = vmul.f32 %v1325, %v1325
    %v1390 = vmul.f32 %v1326, %v1326
    %v1391 = vmul.f32 %v1327, %v1327
    %v1392 = vmul.f32 %v1328, %v1328
    %v1393 = vmul.f32 %v1329, %v1329
    %v1394 = vmul.f32 %v1330, %v1330
    %v1395 = vmul.f32 %v1331, %v1331
    %v1396 = vmul.f32 %v1332, %v1332
    %v1397 = vmul.f32 %v1333, %v1333
    %v1398 = vmul.f32 %v1334, %v1334
    %v1399 = vmul.f32 %v1335, %v1335
    %v1400 = vmul.f32 %v1336, %v1336
    %v1401 = vmul.f32 %v1337, %v1337
    %v1402 = vmul.f32 %v1338, %v1338
    %v1403 = vmul.f32 %v1339, %v1339
    %v1404 = vmul.f32 %v1340, %v1340
    %v1405 = vmul.f32 %v1341, %v1341
    %v1406 = vmul.f32 %v1342, %v1342
    %v1407 = vmul.f32 %v1343, %v1343
    %v1408 = vmul.f32 %v1344, %v1344
    %v1409 = vmul.f32 %v1345, %v1345
    %v1410 = vmul.f32 %v1346, %v1346
    %v1411 = vmul.f32 %v1347, %v1347
    %v1412 = vmul.f32 %v1348, %v1348
    %v1413 = vmul.f32 %v1349, %v1349
    %v1414 = vmul.f32 %v1350, %v1350
    %v1415 = vmul.f32 %v1351, %v1351
    %v1416 = vmul.f32 %v1352, %v1352
    %v1417 = vmul.f32 %v1161, %v1353
    %v1418 = vmul.f32 %v1162, %v1354
    %v1419 = vmul.f32 %v1163, %v1355
    %v1420 = vmul.f32 %v1164, %v1356
    %v1421 = vmul.f32 %v1165, %v1357
    %v1422 = vmul.f32 %v1166, %v1358
    %v1423 = vmul.f32 %v1167, %v1359
    %v1424 = vmul.f32 %v1168, %v1360
    %v1425 = vmul.f32 %v1169, %v1361
    %v1426 = vmul.f32 %v1170, %v1362
    %v1427 = vmul.f32 %v1171, %v1363
    %v1428 = vmul.f32 %v1172, %v1364
    %v1429 = vmul.f32 %v1173, %v1365
    %v1430 = vmul.f32 %v1174, %v1366
    %v1431 = vmul.f32 %v1175, %v1367
    %v1432 = vmul.f32 %v1176, %v1368
    %v1433 = vmul.f32 %v1177, %v1369
    %v1434 = vmul.f32 %v1178, %v1370
    %v1435 = vmul.f32 %v1179, %v1371
    %v1436 = vmul.f32 %v1180, %v1372
    %v1437 = vmul.f32 %v1181, %v1373
    %v1438 = vmul.f32 %v1182, %v1374
    %v1439 = vmul.f32 %v1183, %v1375
    %v1440 = vmul.f32 %v1184, %v1376
    %v1441 = vmul.f32 %v1185, %v1377
    %v1442 = vmul.f32 %v1186, %v1378
    %v1443 = vmul.f32 %v1187, %v1379
    %v1444 = vmul.f32 %v1188, %v1380
    %v1445 = vmul.f32 %v1189, %v1381
    %v1446 = vmul.f32 %v1190, %v1382
    %v1447 = vmul.f32 %v1191, %v1383
    %v1448 = vmul.f32 %v1192, %v1384
    %v1449 = vmul.f32 %v1193, %v1385
    %v1450 = vmul.f32 %v1194, %v1386
    %v1451 = vmul.f32 %v1195, %v1387
    %v1452 = vmul.f32 %v1196, %v1388
    %v1453 = vmul.f32 %v1197, %v1389
    %v1454 = vmul.f32 %v1198, %v1390
    %v1455 = vmul.f32 %v1199, %v1391
    %v1456 = vmul.f32 %v1200, %v1392
    %v1457 = vmul.f32 %v1201, %v1393
    %v1458 = vmul.f32 %v1202, %v1394
    %v1459 = vmul.f32 %v1203, %v1395
    %v1460 = vmul.f32 %v1204, %v1396
    %v1461 = vmul.f32 %v1205, %v1397
    %v1462 = vmul.f32 %v1206, %v1398
    %v1463 = vmul.f32 %v1207, %v1399
    %v1464 = vmul.f32 %v1208, %v1400
    %v1465 = vmul.f32 %v1209, %v1401
    %v1466 = vmul.f32 %v1210, %v1402
    %v1467 = vmul.f32 %v1211, %v1403
    %v1468 = vmul.f32 %v1212, %v1404
    %v1469 = vmul.f32 %v1213, %v1405
    %v1470 = vmul.f32 %v1214, %v1406
    %v1471 = vmul.f32 %v1215, %v1407
    %v1472 = vmul.f32 %v1216, %v1408
    %v1473 = vmul.f32 %v1217, %v1409
    %v1474 = vmul.f32 %v1218, %v1410
    %v1475 = vmul.f32 %v1219, %v1411
    %v1476 = vmul.f32 %v1220, %v1412
    %v1477 = vmul.f32 %v1221, %v1413
    %v1478 = vmul.f32 %v1222, %v1414
    %v1479 = vmul.f32 %v1223, %v1415
    %v1480 = vmul.f32 %v1224, %v1416
    %v1481 = vadd.f32 %v1417, %v1418
    %v1482 = vadd.f32 %v1481, %v1419
    %v1483 = vadd.f32 %v1482, %v1420
    %v1484 = vadd.f32 %v1483, %v1421
    %v1485 = vadd.f32 %v1484, %v1422
    %v1486 = vadd.f32 %v1485, %v1423
    %v1487 = vadd.f32 %v1486, %v1424
    %v1488 = vadd.f32 %v1487, %v1425
    %v1489 = vadd.f32 %v1488, %v1426
    %v1490 = vadd.f32 %v1489, %v1427
    %v1491 = vadd.f32 %v1490, %v1428
    %v1492 = vadd.f32 %v1491, %v1429
    %v1493 = vadd.f32 %v1492, %v1430
    %v1494 = vadd.f32 %v1493, %v1431
    %v1495 = vadd.f32 %v1494, %v1432
    %v1496 = vadd.f32 %v1495, %v1433
    %v1497 = vadd.f32 %v1496, %v1434
    %v1498 = vadd.f32 %v1497, %v1435
    %v1499 = vadd.f32 %v1498, %v1436
    %v1500 = vadd.f32 %v1499, %v1437
    %v1501 = vadd.f32 %v1500, %v1438
    %v1502 = vadd.f32 %v1501, %v1439
    %v1503 = vadd.f32 %v1502, %v1440
    %v1504 = vadd.f32 %v1503, %v1441
    %v1505 = vadd.f32 %v1504, %v1442
    %v1506 = vadd.f32 %v1505, %v1443
    %v1507 = vadd.f32 %v1506, %v1444
    %v1508 = vadd.f32 %v1507, %v1445
    %v1509 = vadd.f32 %v1508, %v1446
    %v1510 = vadd.f32 %v1509, %v1447
    %v1511 = vadd.f32 %v1510, %v1448
    %v1512 = vadd.f32 %v1511, %v1449
    %v1513 = vadd.f32 %v1512, %v1450
    %v1514 = vadd.f32 %v1513, %v1451
    %v1515 = vadd.f32 %v1514, %v1452
    %v1516 = vadd.f32 %v1515, %v1453
    %v1517 = vadd.f32 %v1516, %v1454
    %v1518 = vadd.f32 %v1517, %v1455
    %v1519 = vadd.f32 %v1518, %v1456
    %v1520 = vadd.f32 %v1519, %v1457
    %v1521 = vadd.f32 %v1520, %v1458
    %v1522 = vadd.f32 %v1521, %v1459
    %v1523 = vadd.f32 %v1522, %v1460
    %v1524 = vadd.f32 %v1523, %v1461
    %v1525 = vadd.f32 %v1524, %v1462
    %v1526 = vadd.f32 %v1525, %v1463
    %v1527 = vadd.f32 %v1526, %v1464
    %v1528 = vadd.f32 %v1527, %v1465
    %v1529 = vadd.f32 %v1528, %v1466
    %v1530 = vadd.f32 %v1529, %v1467
    %v1531 = vadd.f32 %v1530, %v1468
    %v1532 = vadd.f32 %v1531, %v1469
    %v1533 = vadd.f32 %v1532, %v1470
    %v1534 = vadd.f32 %v1533, %v1471
    %v1535 = vadd.f32 %v1534, %v1472
    %v1536 = vadd.f32 %v1535, %v1473
    %v1537 = vadd.f32 %v1536, %v1474
    %v1538 = vadd.f32 %v1537, %v1475
    %v1539 = vadd.f32 %v1538, %v1476
    %v1540 = vadd.f32 %v1539, %v1477
    %v1541 = vadd.f32 %v1540, %v1478
    %v1542 = vadd.f32 %v1541, %v1479
    %v1543 = vadd.f32 %v1542, %v1480
    %1544 = vadd.xlane.f32.xlu0 %v1543
    %v1545 = vpop.xlane.xlu0 %1544
    %v1546 = vrot.slane %v1545, 4
    %v1547 = vadd.f32 %v1545, %v1546
    %v1548 = vrot.slane %v1547, 2
    %v1549 = vadd.f32 %v1547, %v1548
    %v1550 = vrot.slane %v1549, 1
    %v1551 = vadd.f32 %v1549, %v1550
    %s1552 = vtos %v1551
    %s1553 = scalar_lea.smem [#allocation2], 0
    %1554 = sst [smem:[%s1553]] %s1552
    // Predicated region
    $region18: #{vqcae_forward.17} parent=1 // pred_check
      _
    $region19: #{vqcae_forward.17} parent=1 // pred_check_branch
      %1556 = sbr.rel (0) target = $region21
    $region20: #{vqcae_forward.17} parent=1 // pred_region
      _
    $region21: #{vqcae_forward.17} parent=1 // pred_fallthru
      _
    // Predicated region
    $region22: #{vqcae_forward.17} parent=1 // pred_check
      _
    $region23: #{vqcae_forward.17} parent=1 // pred_check_branch
      %1558 = sbr.rel (0) target = $region25
    $region24: #{vqcae_forward.17} parent=1 // pred_region
      %s1560 = ssub.s32 16, 16
      %1561 = vsyncadd [#allocation3], %s1560
      %1564 = dma.smem_to_hbm [#allocation2], 16, %s5, [#allocation3]
    $region25: #{vqcae_forward.17} parent=1 // pred_fallthru
      _
    // Predicated region
    $region26: #{vqcae_forward.17} parent=1 // pred_check
      _
    $region27: #{vqcae_forward.17} parent=1 // pred_check_branch
      %1566 = sbr.rel (0) target = $region29
    $region28: #{vqcae_forward.17} parent=1 // pred_region
      _
    $region29: #{vqcae_forward.17} parent=1 // pred_fallthru
      _
    // Predicated region
    $region30: #{vqcae_forward.17} parent=1 // pred_check
      _
    $region31: #{vqcae_forward.17} parent=1 // pred_check_branch
      %1568 = sbr.rel (0) target = $region33
    $region32: #{vqcae_forward.17} parent=1 // pred_region
      %1569 = dma.done [#allocation3], 16
    $region33: #{vqcae_forward.17} parent=1 // pred_fallthru
      _
    %1570 = sfence
    %1571 = vsyncpa [#allocation3], 1

</llo_original>
